<compile_context>
chip_gen: v7x
topology: tpu7x:2x2x1
jax: 0.10.0
libtpu: 0.0.40
codegen_flags: <defaults>
</compile_context>

<pallas_src>
import functools
import math

import jax
import jax.numpy as jnp
from jax import lax
from jax.experimental import pallas as pl
from jax.experimental.pallas import tpu as pltpu


def _round_up(x, m):
    return ((x + m - 1) // m) * m


_MAX_TILE_B = 2048  # double-buffered tiles stay well under every scoped-VMEM default


def _default_tile_b(B):
    """Largest batch tile: one tile on single-TensorCore chips (v5e/v6e);
    >=2 balanced, even-count tiles on 2-TC v7x so both cores get work."""
    try:
        kind = jax.devices()[0].device_kind.lower()
    except Exception:  # pragma: no cover - defensive only
        kind = ""
    two_core = ("v7" in kind) or ("7x" in kind)
    if two_core and B > 16:
        n_tiles = max(2, 2 * pl.cdiv(pl.cdiv(B, _MAX_TILE_B), 2))
        return min(_round_up(pl.cdiv(B, n_tiles), 8), _MAX_TILE_B)
    if B <= _MAX_TILE_B:
        return B          # block dim == full array dim -> always legal
    return _MAX_TILE_B    # multiple of 8 -> ragged last block is legal


def denoise_kernel(ts_ref, x_ref, fp_ref,
                   w_x_ref, w_te_ref, b_in_ref,
                   w_out_ref, b_out_ref,
                   o_ref, *, norm):
    # --- sinusoidal timestep embedding: temb = cos(t * freqs + phase) ---
    # freqs/phase precomputed per column; sin(a) == cos(a - pi/2).
    fp = fp_ref[...]                        # (2, E) resident constant
    freqs = fp[0:1, :]
    phase = fp[1:2, :]
    t = ts_ref[...]                         # (tile_b, 1) f32
    temb = jnp.cos(t * freqs + phase)       # (tile_b, E) -- EUP work

    x = x_ref[...]
    if norm:
        # F.normalize(x): x / max(||x||_2, 1e-12), row-wise over the lane axis.
        ss = jnp.sum(x * x, axis=-1, keepdims=True)
        x = x * lax.rsqrt(jnp.maximum(ss, 1e-24))

    # --- in_layers[0] with emb_layer folded in ---
    # h = tanh( x @ W_x + temb @ (W_emb @ W_e) + (b_emb @ W_e + b_in) )
    h = jnp.dot(x, w_x_ref[...], preferred_element_type=jnp.float32)
    h = h + jnp.dot(temb, w_te_ref[...], preferred_element_type=jnp.float32)
    h = jnp.tanh(h + b_in_ref[...])

    # --- out_layers[0] (last layer -> no activation) ---
    out = jnp.dot(h, w_out_ref[...], preferred_element_type=jnp.float32)
    o_ref[...] = (out + b_out_ref[...]).astype(o_ref.dtype)


def fold_denoise_params(params, *, time_emb_dim):
    """One-time preprocessing (NOT on the per-call path): fold emb_layer into
    in_layers[0] and precompute the sinusoidal freqs/phase table."""
    w_emb, b_emb, w_in, b_in, w_out, b_out = params
    E = time_emb_dim
    half = E // 2
    assert half >= 1, "time_emb_dim must be >= 2"
    D = w_in.shape[0] - E
    hp = jax.lax.Precision.HIGHEST

    w_in_x = w_in[:D]                                          # (D, H)
    w_in_e = w_in[D:]                                          # (E, H)
    w_emb_eff = w_emb
    if E % 2:
        # The odd-E zero-padding column of time_emb contributes nothing; zero
        # its row here so the kernel never has to mask it.
        w_emb_eff = w_emb.at[E - 1, :].set(0.0)
    w_te = jnp.dot(w_emb_eff, w_in_e, precision=hp)            # (E, H)
    b_fold = jnp.dot(b_emb, w_in_e, precision=hp) + b_in       # (1, H)

    freqs_half = jnp.exp(-math.log(10000.0)
                         * jnp.arange(half, dtype=jnp.float32) / half)
    freqs = jnp.zeros((E,), jnp.float32)
    freqs = freqs.at[:half].set(freqs_half).at[half:2 * half].set(freqs_half)
    phase = jnp.zeros((E,), jnp.float32).at[half:2 * half].set(-0.5 * math.pi)
    freqs_phase = jnp.stack([freqs, phase], axis=0)            # (2, E)

    return dict(w_x=w_in_x, w_te=w_te, b_in=b_fold,
                w_out=w_out, b_out=b_out, freqs_phase=freqs_phase)


def denoise_forward(x, timesteps, folded, *, norm=False, mess_dropout=False,
                    tile_b=None):
    """Forward pass of Denoise with in_dims=[D, H], out_dims=[H, O]."""
    B, D = x.shape
    w_x, w_te = folded["w_x"], folded["w_te"]
    b_in, w_out, b_out = folded["b_in"], folded["w_out"], folded["b_out"]
    fp = folded["freqs_phase"]
    E = w_te.shape[0]
    H = w_x.shape[1]
    O = w_out.shape[1]
    assert w_x.shape[0] == D

    # TODO(synk): mess_dropout (nn.Dropout) is eval-mode identity here;
    # training-mode dropout would need pltpu.prng_seed / prng_random_bits.
    del mess_dropout

    ts = timesteps.astype(jnp.float32).reshape(B, 1)

    if tile_b is None:
        tile_b = _default_tile_b(B)
    grid = (pl.cdiv(B, tile_b),)
    const = lambda i: (0, 0)

    kernel = functools.partial(denoise_kernel, norm=norm)

    return pl.pallas_call(
        kernel,
        out_shape=jax.ShapeDtypeStruct((B, O), jnp.float32),
        grid_spec=pltpu.PrefetchScalarGridSpec(
            num_scalar_prefetch=0,
            grid=grid,
            in_specs=[
                pl.BlockSpec((tile_b, 1), lambda i: (i, 0)),   # timesteps
                pl.BlockSpec((tile_b, D), lambda i: (i, 0)),   # x
                pl.BlockSpec((2, E), const),                   # freqs / phase
                pl.BlockSpec((D, H), const),                   # W_x
                pl.BlockSpec((E, H), const),                   # W_te (folded)
                pl.BlockSpec((1, H), const),                   # b    (folded)
                pl.BlockSpec((H, O), const),                   # W_out
                pl.BlockSpec((1, O), const),                   # b_out
            ],
            out_specs=pl.BlockSpec((tile_b, O), lambda i: (i, 0)),
        ),
        compiler_params=pltpu.CompilerParams(
            dimension_semantics=("parallel",)),
    )(ts, x, fp, w_x, w_te, b_in, w_out, b_out)


def init_denoise_params(key, in_dims, out_dims, emb_size):
    """Deterministic init mirroring Denoise.init_weights (normal(0, std))."""
    D, H = in_dims
    H2, O = out_dims
    assert H == H2
    E = emb_size
    k_emb_w, k_emb_b, k_in_w, k_in_b, k_out_w, k_out_b = jax.random.split(key, 6)

    def lin(kw, kb, d_in, d_out):
        std = math.sqrt(2.0 / (d_in + d_out))
        # torch Linear weight is (out, in); store transposed (in, out).
        w = std * jax.random.normal(kw, (d_in, d_out), dtype=jnp.float32)
        b = 0.001 * jax.random.normal(kb, (1, d_out), dtype=jnp.float32)
        return w, b

    w_emb, b_emb = lin(k_emb_w, k_emb_b, E, E)          # emb_layer: Linear(E, E)
    w_in, b_in = lin(k_in_w, k_in_b, D + E, H)          # in_layers[0]: Linear(D+E, H)
    w_out, b_out = lin(k_out_w, k_out_b, H, O)          # out_layers[0]: Linear(H, O)
    return (w_emb, b_emb, w_in, b_in, w_out, b_out)


def denoise_reference(x, timesteps, params, *, time_emb_dim, norm=False):
    """Pure-JAX reference mirroring the torch module (incl. odd-E zero pad)."""
    E = time_emb_dim
    half = E // 2
    freqs = jnp.exp(-math.log(10000.0)
                    * jnp.arange(half, dtype=jnp.float32) / half)
    temp = timesteps.astype(jnp.float32)[:, None] * freqs[None, :]
    time_emb = jnp.concatenate([jnp.cos(temp), jnp.sin(temp)], axis=-1)
    if E % 2:
        time_emb = jnp.concatenate(
            [time_emb, jnp.zeros_like(time_emb[:, :1])], axis=-1)
    w_emb, b_emb, w_in, b_in, w_out, b_out = params
    emb = time_emb @ w_emb + b_emb
    if norm:
        x = x / jnp.maximum(jnp.linalg.norm(x, axis=-1, keepdims=True), 1e-12)
    h = jnp.concatenate([x, emb], axis=-1)
    h = jnp.tanh(h @ w_in + b_in)
    return h @ w_out + b_out


if __name__ == "__main__":
    # Shapes consistent with the module:
    #   in_dims = [D, H] = [32, 16], out_dims = [H, O] = [16, 32], emb_size = 8
    D, H, O, E = 32, 16, 32, 8

    key = jax.random.PRNGKey(0)
    k_par, k_x1, k_t1, k_x2, k_t2 = jax.random.split(key, 5)
    params = init_denoise_params(k_par, [D, H], [H, O], E)
    folded = fold_denoise_params(params, time_emb_dim=E)   # one-time fold

    def check(kx, kt, B, norm):
        x = jax.random.normal(kx, (B, D), dtype=jnp.float32)
        ts = jax.random.randint(kt, (B,), 0, 1000, dtype=jnp.int32)
        out = denoise_forward(x, ts, folded, norm=norm, mess_dropout=False)
        out = jax.block_until_ready(out)
        ref = denoise_reference(x, ts, params, time_emb_dim=E, norm=norm)
        assert out.shape == (B, O)
        # Tolerance covers the folded emb-linear (different summation order)
        # and cos-based sin / Mosaic-vs-XLA transcendental differences at
        # large angles (t up to ~1000).
        assert jnp.allclose(out, ref, atol=1e-3, rtol=1e-3), (
            "mismatch vs reference, max|d|="
            f"{float(jnp.max(jnp.abs(out - ref)))}")
        return out

    check(k_x1, k_t1, 256, norm=False)   # single tile (2 balanced tiles on v7x)
    check(k_x2, k_t2, 100, norm=True)    # non-multiple-of-8 batch, in-kernel L2 norm
    print("KERNEL_OK")
</pallas_src>

<mosaic_0001>
module attributes {stable_mosaic.version = 11 : i64} {
  func.func @denoise_kernel(%arg0: i32, %arg1: memref<256x1xf32, #tpu.memory_space<vmem>>, %arg2: memref<256x32xf32, #tpu.memory_space<vmem>>, %arg3: memref<2x8xf32, #tpu.memory_space<vmem>>, %arg4: memref<32x16xf32, #tpu.memory_space<vmem>>, %arg5: memref<8x16xf32, #tpu.memory_space<vmem>>, %arg6: memref<1x16xf32, #tpu.memory_space<vmem>>, %arg7: memref<16x32xf32, #tpu.memory_space<vmem>>, %arg8: memref<1x32xf32, #tpu.memory_space<vmem>>, %arg9: memref<256x32xf32, #tpu.memory_space<vmem>>) attributes {dimension_semantics = [#tpu.dimension_semantics<parallel>], iteration_bounds = array<i64: 1>, scalar_prefetch = 0 : i64, scratch_operands = 0 : i64, tpu.core_type = #tpu.core_type<tc>, window_params = [{transform_indices = @transform_0, window_bounds = array<i64: 256, 1>}, {transform_indices = @transform_1, window_bounds = array<i64: 256, 32>}, {pipeline_mode = #tpu.pipeline_mode<synchronous>, transform_indices = @transform_2, window_bounds = array<i64: 2, 8>}, {pipeline_mode = #tpu.pipeline_mode<synchronous>, transform_indices = @transform_3, window_bounds = array<i64: 32, 16>}, {pipeline_mode = #tpu.pipeline_mode<synchronous>, transform_indices = @transform_4, window_bounds = array<i64: 8, 16>}, {pipeline_mode = #tpu.pipeline_mode<synchronous>, transform_indices = @transform_5, window_bounds = array<i64: 1, 16>}, {pipeline_mode = #tpu.pipeline_mode<synchronous>, transform_indices = @transform_6, window_bounds = array<i64: 16, 32>}, {pipeline_mode = #tpu.pipeline_mode<synchronous>, transform_indices = @transform_7, window_bounds = array<i64: 1, 32>}, {transform_indices = @transform_8, window_bounds = array<i64: 256, 32>}]} {
    %c0 = arith.constant 0 : index
    %c0_0 = arith.constant 0 : index
    %0 = vector.load %arg3[%c0, %c0_0] : memref<2x8xf32, #tpu.memory_space<vmem>>, vector<2x8xf32>
    %1 = vector.extract_strided_slice %0 {offsets = [0, 0], sizes = [1, 8], strides = [1, 1]} : vector<2x8xf32> to vector<1x8xf32>
    %2 = vector.extract_strided_slice %0 {offsets = [1, 0], sizes = [1, 8], strides = [1, 1]} : vector<2x8xf32> to vector<1x8xf32>
    %c0_1 = arith.constant 0 : index
    %c0_2 = arith.constant 0 : index
    %3 = vector.load %arg1[%c0_1, %c0_2] : memref<256x1xf32, #tpu.memory_space<vmem>>, vector<256x1xf32>
    %4 = vector.broadcast %3 : vector<256x1xf32> to vector<256x8xf32>
    %5 = vector.broadcast %1 : vector<1x8xf32> to vector<256x8xf32>
    %6 = arith.mulf %4, %5 : vector<256x8xf32>
    %7 = vector.broadcast %2 : vector<1x8xf32> to vector<256x8xf32>
    %8 = arith.addf %6, %7 : vector<256x8xf32>
    %9 = math.cos %8 : vector<256x8xf32>
    %c0_3 = arith.constant 0 : index
    %c0_4 = arith.constant 0 : index
    %10 = vector.load %arg2[%c0_3, %c0_4] : memref<256x32xf32, #tpu.memory_space<vmem>>, vector<256x32xf32>
    %c0_5 = arith.constant 0 : index
    %c0_6 = arith.constant 0 : index
    %11 = vector.load %arg4[%c0_5, %c0_6] : memref<32x16xf32, #tpu.memory_space<vmem>>, vector<32x16xf32>
    %cst = arith.constant dense<0.000000e+00> : vector<256x16xf32>
    %12 = tpu.matmul %10, %11, %cst {dimension_numbers = #tpu.dot_dimension_numbers<[1], [0], [0], [1], [0, 0, 1, 1], [], []>} : vector<256x32xf32>, vector<32x16xf32>, vector<256x16xf32> -> vector<256x16xf32>
    %c0_7 = arith.constant 0 : index
    %c0_8 = arith.constant 0 : index
    %13 = vector.load %arg5[%c0_7, %c0_8] : memref<8x16xf32, #tpu.memory_space<vmem>>, vector<8x16xf32>
    %cst_9 = arith.constant dense<0.000000e+00> : vector<256x16xf32>
    %14 = tpu.matmul %9, %13, %cst_9 {dimension_numbers = #tpu.dot_dimension_numbers<[1], [0], [0], [1], [0, 0, 1, 1], [], []>} : vector<256x8xf32>, vector<8x16xf32>, vector<256x16xf32> -> vector<256x16xf32>
    %15 = arith.addf %12, %14 : vector<256x16xf32>
    %c0_10 = arith.constant 0 : index
    %c0_11 = arith.constant 0 : index
    %16 = vector.load %arg6[%c0_10, %c0_11] : memref<1x16xf32, #tpu.memory_space<vmem>>, vector<1x16xf32>
    %17 = vector.broadcast %16 : vector<1x16xf32> to vector<256x16xf32>
    %18 = arith.addf %15, %17 : vector<256x16xf32>
    %19 = math.tanh %18 : vector<256x16xf32>
    %c0_12 = arith.constant 0 : index
    %c0_13 = arith.constant 0 : index
    %20 = vector.load %arg7[%c0_12, %c0_13] : memref<16x32xf32, #tpu.memory_space<vmem>>, vector<16x32xf32>
    %cst_14 = arith.constant dense<0.000000e+00> : vector<256x32xf32>
    %21 = tpu.matmul %19, %20, %cst_14 {dimension_numbers = #tpu.dot_dimension_numbers<[1], [0], [0], [1], [0, 0, 1, 1], [], []>} : vector<256x16xf32>, vector<16x32xf32>, vector<256x32xf32> -> vector<256x32xf32>
    %c0_15 = arith.constant 0 : index
    %c0_16 = arith.constant 0 : index
    %22 = vector.load %arg8[%c0_15, %c0_16] : memref<1x32xf32, #tpu.memory_space<vmem>>, vector<1x32xf32>
    %23 = vector.broadcast %22 : vector<1x32xf32> to vector<256x32xf32>
    %24 = arith.addf %21, %23 : vector<256x32xf32>
    %c0_17 = arith.constant 0 : index
    %c0_18 = arith.constant 0 : index
    %25 = vector.load %arg9[%c0_17, %c0_18] : memref<256x32xf32, #tpu.memory_space<vmem>>, vector<256x32xf32>
    tpu.vector_store %arg9[%c0_17, %c0_18], %24 {strides = array<i32>} : memref<256x32xf32, #tpu.memory_space<vmem>>, vector<256x32xf32>,
    return
  }
  func.func @transform_0(%arg0: i32) -> (i32, i32) {
    %c0_i32 = arith.constant 0 : i32
    %c0_i32_0 = arith.constant 0 : i32
    return %arg0, %c0_i32 : i32, i32
  }
  func.func @transform_1(%arg0: i32) -> (i32, i32) {
    %c0_i32 = arith.constant 0 : i32
    %c0_i32_0 = arith.constant 0 : i32
    return %arg0, %c0_i32 : i32, i32
  }
  func.func @transform_2(%arg0: i32) -> (i32, i32) {
    %c0_i32 = arith.constant 0 : i32
    %c0_i32_0 = arith.constant 0 : i32
    %c0_i32_1 = arith.constant 0 : i32
    return %c0_i32, %c0_i32_0 : i32, i32
  }
  func.func @transform_3(%arg0: i32) -> (i32, i32) {
    %c0_i32 = arith.constant 0 : i32
    %c0_i32_0 = arith.constant 0 : i32
    %c0_i32_1 = arith.constant 0 : i32
    return %c0_i32, %c0_i32_0 : i32, i32
  }
  func.func @transform_4(%arg0: i32) -> (i32, i32) {
    %c0_i32 = arith.constant 0 : i32
    %c0_i32_0 = arith.constant 0 : i32
    %c0_i32_1 = arith.constant 0 : i32
    return %c0_i32, %c0_i32_0 : i32, i32
  }
  func.func @transform_5(%arg0: i32) -> (i32, i32) {
    %c0_i32 = arith.constant 0 : i32
    %c0_i32_0 = arith.constant 0 : i32
    %c0_i32_1 = arith.constant 0 : i32
    return %c0_i32, %c0_i32_0 : i32, i32
  }
  func.func @transform_6(%arg0: i32) -> (i32, i32) {
    %c0_i32 = arith.constant 0 : i32
    %c0_i32_0 = arith.constant 0 : i32
    %c0_i32_1 = arith.constant 0 : i32
    return %c0_i32, %c0_i32_0 : i32, i32
  }
  func.func @transform_7(%arg0: i32) -> (i32, i32) {
    %c0_i32 = arith.constant 0 : i32
    %c0_i32_0 = arith.constant 0 : i32
    %c0_i32_1 = arith.constant 0 : i32
    return %c0_i32, %c0_i32_0 : i32, i32
  }
  func.func @transform_8(%arg0: i32) -> (i32, i32) {
    %c0_i32 = arith.constant 0 : i32
    %c0_i32_0 = arith.constant 0 : i32
    return %arg0, %c0_i32 : i32, i32
  }
}

</mosaic_0001>

<llo_original>
// kernel: tpu_custom_call.1
$region0: #{tpu_custom_call.1}
  #allocation0 [shape = 'u32[]', space=smem, size = 0x4, offset = 0x4, fixed_abs, tag = 'smem constant byte address 0x4 - core index']
  #allocation1 [shape = 'u32[144,128]{1,0:T(1,128)}', space=vmem, size = 0x12000, scoped, tag = 'internal scratch']
  %s0 = inlined_call_operand.vmem [shape: f32[256,1], index: 0, kind: input, shape index: {}]
  %s1 = inlined_call_operand.vmem [shape: f32[256,32], index: 1, kind: input, shape index: {}]
  %s2 = inlined_call_operand.vmem [shape: f32[2,8], index: 2, kind: input, shape index: {}]
  %s3 = inlined_call_operand.vmem [shape: f32[32,16], index: 3, kind: input, shape index: {}]
  %s4 = inlined_call_operand.vmem [shape: f32[8,16], index: 4, kind: input, shape index: {}]
  %s5 = inlined_call_operand.vmem [shape: f32[1,16], index: 5, kind: input, shape index: {}]
  %s6 = inlined_call_operand.vmem [shape: f32[16,32], index: 6, kind: input, shape index: {}]
  %s7 = inlined_call_operand.vmem [shape: f32[1,32], index: 7, kind: input, shape index: {}]
  %s8 = inlined_call_operand.vmem [shape: f32[256,32], index: 8, kind: output, shape index: {}]
  %s9 = sld [smem:[#allocation0]]
  $region42: #{tpu_custom_call.1} parent=0
    _
  %s11 = ssub.s32 1, %s9
  %s12 = scalar_select 0, %s11, %s9
  // Predicated region
  $region2: #{tpu_custom_call.1} parent=0 // pred_check
    _
  $region3: #{tpu_custom_call.1} parent=0 // pred_check_branch
    %14 = sbr.rel (0) target = $region5
  $region4: #{tpu_custom_call.1} parent=0 // pred_region
    _
  $region5: #{tpu_custom_call.1} parent=0 // pred_fallthru
    _
  // Predicated region
  $region6: #{tpu_custom_call.1} parent=0 // pred_check
    _
  $region7: #{tpu_custom_call.1} parent=0 // pred_check_branch
    %16 = sbr.rel (0) target = $region9
  $region8: #{tpu_custom_call.1} parent=0 // pred_region
    _
  $region9: #{tpu_custom_call.1} parent=0 // pred_fallthru
    _
  // Predicated region
  $region10: #{tpu_custom_call.1} parent=0 // pred_check
    _
  $region11: #{tpu_custom_call.1} parent=0 // pred_check_branch
    %18 = sbr.rel (0) target = $region13
  $region12: #{tpu_custom_call.1} parent=0 // pred_region
    _
  $region13: #{tpu_custom_call.1} parent=0 // pred_fallthru
    _
  // Predicated region
  $region14: #{tpu_custom_call.1} parent=0 // pred_check
    _
  $region15: #{tpu_custom_call.1} parent=0 // pred_check_branch
    %20 = sbr.rel (0) target = $region17
  $region16: #{tpu_custom_call.1} parent=0 // pred_region
    _
  $region17: #{tpu_custom_call.1} parent=0 // pred_fallthru
    _
  // Predicated region
  $region18: #{tpu_custom_call.1} parent=0 // pred_check
    _
  $region19: #{tpu_custom_call.1} parent=0 // pred_check_branch
    %22 = sbr.rel (0) target = $region21
  $region20: #{tpu_custom_call.1} parent=0 // pred_region
    _
  $region21: #{tpu_custom_call.1} parent=0 // pred_fallthru
    _
  // Predicated region
  $region22: #{tpu_custom_call.1} parent=0 // pred_check
    _
  $region23: #{tpu_custom_call.1} parent=0 // pred_check_branch
    %24 = sbr.rel (0) target = $region25
  $region24: #{tpu_custom_call.1} parent=0 // pred_region
    _
  $region25: #{tpu_custom_call.1} parent=0 // pred_fallthru
    _
  // Predicated region
  $region26: #{tpu_custom_call.1} parent=0 // pred_check
    _
  $region27: #{tpu_custom_call.1} parent=0 // pred_check_branch
    %26 = sbr.rel (0) target = $region29
  $region28: #{tpu_custom_call.1} parent=0 // pred_region
    _
  $region29: #{tpu_custom_call.1} parent=0 // pred_fallthru
    _
  // Predicated region
  $region30: #{tpu_custom_call.1} parent=0 // pred_check
    _
  $region31: #{tpu_custom_call.1} parent=0 // pred_check_branch
    %28 = sbr.rel (0) target = $region33
  $region32: #{tpu_custom_call.1} parent=0 // pred_region
    _
  $region33: #{tpu_custom_call.1} parent=0 // pred_fallthru
    _
  %v29 = vld [vmem:[%s2] sm:$0x3]
  %v30 = vld [vmem:[%s0] sm:$0xff]
  %v31 = vld [vmem:[%s0 + $0x8] sm:$0xff]
  %v32 = vld [vmem:[%s0 + $0x10] sm:$0xff]
  %v33 = vld [vmem:[%s0 + $0x18] sm:$0xff]
  %v34 = vld [vmem:[%s0 + $0x20] sm:$0xff]
  %v35 = vld [vmem:[%s0 + $0x28] sm:$0xff]
  %v36 = vld [vmem:[%s0 + $0x30] sm:$0xff]
  %v37 = vld [vmem:[%s0 + $0x38] sm:$0xff]
  %v38 = vld [vmem:[%s0 + $0x40] sm:$0xff]
  %v39 = vld [vmem:[%s0 + $0x48] sm:$0xff]
  %v40 = vld [vmem:[%s0 + $0x50] sm:$0xff]
  %v41 = vld [vmem:[%s0 + $0x58] sm:$0xff]
  %v42 = vld [vmem:[%s0 + $0x60] sm:$0xff]
  %v43 = vld [vmem:[%s0 + $0x68] sm:$0xff]
  %v44 = vld [vmem:[%s0 + $0x70] sm:$0xff]
  %v45 = vld [vmem:[%s0 + $0x78] sm:$0xff]
  %v46 = vld [vmem:[%s0 + $0x80] sm:$0xff]
  %v47 = vld [vmem:[%s0 + $0x88] sm:$0xff]
  %v48 = vld [vmem:[%s0 + $0x90] sm:$0xff]
  %v49 = vld [vmem:[%s0 + $0x98] sm:$0xff]
  %v50 = vld [vmem:[%s0 + $0xa0] sm:$0xff]
  %v51 = vld [vmem:[%s0 + $0xa8] sm:$0xff]
  %v52 = vld [vmem:[%s0 + $0xb0] sm:$0xff]
  %v53 = vld [vmem:[%s0 + $0xb8] sm:$0xff]
  %v54 = vld [vmem:[%s0 + $0xc0] sm:$0xff]
  %v55 = vld [vmem:[%s0 + $0xc8] sm:$0xff]
  %v56 = vld [vmem:[%s0 + $0xd0] sm:$0xff]
  %v57 = vld [vmem:[%s0 + $0xd8] sm:$0xff]
  %v58 = vld [vmem:[%s0 + $0xe0] sm:$0xff]
  %v59 = vld [vmem:[%s0 + $0xe8] sm:$0xff]
  %v60 = vld [vmem:[%s0 + $0xf0] sm:$0xff]
  %v61 = vld [vmem:[%s0 + $0xf8] sm:$0xff]
  %63 = vset.pattern.permute.xlu0 0
  %64 = vperm.xlu0 %63, %v30
  %v65 = vpop.permute.xlu0 %64
  %68 = vset.pattern.permute.xlu0 0
  %69 = vperm.xlu0 %68, %v31
  %v70 = vpop.permute.xlu0 %69
  %73 = vset.pattern.permute.xlu0 0
  %74 = vperm.xlu0 %73, %v32
  %v75 = vpop.permute.xlu0 %74
  %78 = vset.pattern.permute.xlu0 0
  %79 = vperm.xlu0 %78, %v33
  %v80 = vpop.permute.xlu0 %79
  %83 = vset.pattern.permute.xlu0 0
  %84 = vperm.xlu0 %83, %v34
  %v85 = vpop.permute.xlu0 %84
  %88 = vset.pattern.permute.xlu0 0
  %89 = vperm.xlu0 %88, %v35
  %v90 = vpop.permute.xlu0 %89
  %93 = vset.pattern.permute.xlu0 0
  %94 = vperm.xlu0 %93, %v36
  %v95 = vpop.permute.xlu0 %94
  %98 = vset.pattern.permute.xlu0 0
  %99 = vperm.xlu0 %98, %v37
  %v100 = vpop.permute.xlu0 %99
  %103 = vset.pattern.permute.xlu0 0
  %104 = vperm.xlu0 %103, %v38
  %v105 = vpop.permute.xlu0 %104
  %108 = vset.pattern.permute.xlu0 0
  %109 = vperm.xlu0 %108, %v39
  %v110 = vpop.permute.xlu0 %109
  %113 = vset.pattern.permute.xlu0 0
  %114 = vperm.xlu0 %113, %v40
  %v115 = vpop.permute.xlu0 %114
  %118 = vset.pattern.permute.xlu0 0
  %119 = vperm.xlu0 %118, %v41
  %v120 = vpop.permute.xlu0 %119
  %123 = vset.pattern.permute.xlu0 0
  %124 = vperm.xlu0 %123, %v42
  %v125 = vpop.permute.xlu0 %124
  %128 = vset.pattern.permute.xlu0 0
  %129 = vperm.xlu0 %128, %v43
  %v130 = vpop.permute.xlu0 %129
  %133 = vset.pattern.permute.xlu0 0
  %134 = vperm.xlu0 %133, %v44
  %v135 = vpop.permute.xlu0 %134
  %138 = vset.pattern.permute.xlu0 0
  %139 = vperm.xlu0 %138, %v45
  %v140 = vpop.permute.xlu0 %139
  %143 = vset.pattern.permute.xlu0 0
  %144 = vperm.xlu0 %143, %v46
  %v145 = vpop.permute.xlu0 %144
  %148 = vset.pattern.permute.xlu0 0
  %149 = vperm.xlu0 %148, %v47
  %v150 = vpop.permute.xlu0 %149
  %153 = vset.pattern.permute.xlu0 0
  %154 = vperm.xlu0 %153, %v48
  %v155 = vpop.permute.xlu0 %154
  %158 = vset.pattern.permute.xlu0 0
  %159 = vperm.xlu0 %158, %v49
  %v160 = vpop.permute.xlu0 %159
  %163 = vset.pattern.permute.xlu0 0
  %164 = vperm.xlu0 %163, %v50
  %v165 = vpop.permute.xlu0 %164
  %168 = vset.pattern.permute.xlu0 0
  %169 = vperm.xlu0 %168, %v51
  %v170 = vpop.permute.xlu0 %169
  %173 = vset.pattern.permute.xlu0 0
  %174 = vperm.xlu0 %173, %v52
  %v175 = vpop.permute.xlu0 %174
  %178 = vset.pattern.permute.xlu0 0
  %179 = vperm.xlu0 %178, %v53
  %v180 = vpop.permute.xlu0 %179
  %183 = vset.pattern.permute.xlu0 0
  %184 = vperm.xlu0 %183, %v54
  %v185 = vpop.permute.xlu0 %184
  %188 = vset.pattern.permute.xlu0 0
  %189 = vperm.xlu0 %188, %v55
  %v190 = vpop.permute.xlu0 %189
  %193 = vset.pattern.permute.xlu0 0
  %194 = vperm.xlu0 %193, %v56
  %v195 = vpop.permute.xlu0 %194
  %198 = vset.pattern.permute.xlu0 0
  %199 = vperm.xlu0 %198, %v57
  %v200 = vpop.permute.xlu0 %199
  %203 = vset.pattern.permute.xlu0 0
  %204 = vperm.xlu0 %203, %v58
  %v205 = vpop.permute.xlu0 %204
  %208 = vset.pattern.permute.xlu0 0
  %209 = vperm.xlu0 %208, %v59
  %v210 = vpop.permute.xlu0 %209
  %213 = vset.pattern.permute.xlu0 0
  %214 = vperm.xlu0 %213, %v60
  %v215 = vpop.permute.xlu0 %214
  %218 = vset.pattern.permute.xlu0 0
  %219 = vperm.xlu0 %218, %v61
  %v220 = vpop.permute.xlu0 %219
  %v222 = vlaneseq
  %v223 = vshrl.u32 %v222, 7
  %v224 = vsub.s32 0, %v223
  %v225 = vrot.slane %v29, %v224
  %v226 = vmul.f32 %v65, %v225
  %v227 = vmul.f32 %v70, %v225
  %v228 = vmul.f32 %v75, %v225
  %v229 = vmul.f32 %v80, %v225
  %v230 = vmul.f32 %v85, %v225
  %v231 = vmul.f32 %v90, %v225
  %v232 = vmul.f32 %v95, %v225
  %v233 = vmul.f32 %v100, %v225
  %v234 = vmul.f32 %v105, %v225
  %v235 = vmul.f32 %v110, %v225
  %v236 = vmul.f32 %v115, %v225
  %v237 = vmul.f32 %v120, %v225
  %v238 = vmul.f32 %v125, %v225
  %v239 = vmul.f32 %v130, %v225
  %v240 = vmul.f32 %v135, %v225
  %v241 = vmul.f32 %v140, %v225
  %v242 = vmul.f32 %v145, %v225
  %v243 = vmul.f32 %v150, %v225
  %v244 = vmul.f32 %v155, %v225
  %v245 = vmul.f32 %v160, %v225
  %v246 = vmul.f32 %v165, %v225
  %v247 = vmul.f32 %v170, %v225
  %v248 = vmul.f32 %v175, %v225
  %v249 = vmul.f32 %v180, %v225
  %v250 = vmul.f32 %v185, %v225
  %v251 = vmul.f32 %v190, %v225
  %v252 = vmul.f32 %v195, %v225
  %v253 = vmul.f32 %v200, %v225
  %v254 = vmul.f32 %v205, %v225
  %v255 = vmul.f32 %v210, %v225
  %v256 = vmul.f32 %v215, %v225
  %v257 = vmul.f32 %v220, %v225
  %v258 = vlaneseq
  %v259 = vshrl.u32 %v258, 7
  %v260 = vsub.s32 1, %v259
  %v261 = vrot.slane %v29, %v260
  %v262 = vadd.f32 %v226, %v261
  %v263 = vadd.f32 %v227, %v261
  %v264 = vadd.f32 %v228, %v261
  %v265 = vadd.f32 %v229, %v261
  %v266 = vadd.f32 %v230, %v261
  %v267 = vadd.f32 %v231, %v261
  %v268 = vadd.f32 %v232, %v261
  %v269 = vadd.f32 %v233, %v261
  %v270 = vadd.f32 %v234, %v261
  %v271 = vadd.f32 %v235, %v261
  %v272 = vadd.f32 %v236, %v261
  %v273 = vadd.f32 %v237, %v261
  %v274 = vadd.f32 %v238, %v261
  %v275 = vadd.f32 %v239, %v261
  %v276 = vadd.f32 %v240, %v261
  %v277 = vadd.f32 %v241, %v261
  %v278 = vadd.f32 %v242, %v261
  %v279 = vadd.f32 %v243, %v261
  %v280 = vadd.f32 %v244, %v261
  %v281 = vadd.f32 %v245, %v261
  %v282 = vadd.f32 %v246, %v261
  %v283 = vadd.f32 %v247, %v261
  %v284 = vadd.f32 %v248, %v261
  %v285 = vadd.f32 %v249, %v261
  %v286 = vadd.f32 %v250, %v261
  %v287 = vadd.f32 %v251, %v261
  %v288 = vadd.f32 %v252, %v261
  %v289 = vadd.f32 %v253, %v261
  %v290 = vadd.f32 %v254, %v261
  %v291 = vadd.f32 %v255, %v261
  %v292 = vadd.f32 %v256, %v261
  %v293 = vadd.f32 %v257, %v261
  %v294 = vand.u32 2147483647, %v262
  %vm295 = vcmp.le.f32.partialorder %v294, 0.7853982
  %vm296 = vcmp.lt.s32.totalorder %v262, 0
  %v297 = vand.u32 %v262, 2139095040
  %v298 = vshrl.u32 %v297, 23
  %v299 = vsub.s32 %v298, 127
  %v300 = vand.u32 2147483647, %v262
  %v301 = vand.u32 %v300, 8388607
  %v302 = vor.u32 %v301, 8388608
  %v303 = vsub.s32 0, %v302
  %v304 = vadd.s32 %v299, 1
  %vm305 = vcmp.gt.s32.totalorder %v304, 0
  %v306 = vsel %vm305, %v304, 0
  %v307 = vshrl.u32 %v306, 5
  %v308 = vand.u32 %v306, 31
  %v309 = vsub.s32 32, %v308
  %v310 = vshrl.u32 683565275, %v309
  %v311 = vshll.u32 683565275, %v308
  %v312 = vshrl.u32 2475754826, %v309
  %v313 = vor.u32 %v311, %v312
  %v314 = vshll.u32 2475754826, %v308
  %v315 = vshrl.u32 2131351028, %v309
  %v316 = vor.u32 %v314, %v315
  %v317 = vshll.u32 2131351028, %v308
  %v318 = vshrl.u32 2102212464, %v309
  %v319 = vor.u32 %v317, %v318
  %v320 = vshll.u32 2102212464, %v308
  %v321 = vshrl.u32 920167782, %v309
  %v322 = vor.u32 %v320, %v321
  %v323 = vshll.u32 920167782, %v308
  %v324 = vshrl.u32 1326507024, %v309
  %v325 = vor.u32 %v323, %v324
  %vm326 = vcmp.lt.s32.totalorder %v307, 1
  %vm327 = vcmp.lt.s32.totalorder %v307, 2
  %vm328 = vcmp.lt.s32.totalorder %v307, 3
  %vm329 = vcmp.lt.s32.totalorder %v307, 4
  %v330 = vsel %vm326, %v310, %v313
  %v331 = vsel %vm329, %v319, 2102212464
  %v332 = vsel %vm328, %v316, %v331
  %v333 = vsel %vm327, %v330, %v332
  %v334 = vsel %vm326, %v313, %v316
  %v335 = vsel %vm329, %v322, 920167782
  %v336 = vsel %vm328, %v319, %v335
  %v337 = vsel %vm327, %v334, %v336
  %v338 = vsel %vm326, %v316, %v319
  %v339 = vsel %vm329, %v325, 1326507024
  %v340 = vsel %vm328, %v322, %v339
  %v341 = vsel %vm327, %v338, %v340
  %v342 = vshll.u32 %v302, 8
  %v343 = vmul.u32.u64.compose %v342, %v341
  %v344 = vextract.low.u32 %v343
  %v345 = vextract.high.u32 %v343
  %v346 = vmul.u32.u64.compose %v342, %v337
  %v347 = vextract.low.u32 %v346
  %v348 = vextract.high.u32 %v346
  %v349 = vmul.u32 %v342, %v333
  %v350 = vadd.s32 %v345, %v347
  %vm351 = vc.u32 %v345, %v347
  %v352 = vadd.s32 %v348, 1
  %v353 = vsel %vm351, %v352, %v348
  %v354 = vadd.s32 %v349, %v353
  %v355 = vadd.s32 %v354, 536870912
  %v356 = vshrl.u32 %v355, 30
  %v357 = vshll.u32 %v356, 30
  %v358 = vsub.s32 %v354, %v357
  %vm359 = vcmp.lt.s32.totalorder %v358, 0
  %v360 = vsub.s32 0, %v358
  %v361 = vsel %vm359, %v360, %v358
  %v362 = vclz %v361
  %v363 = vsub.s32 %v362, 2
  %vm364 = vcmp.gt.s32.totalorder 0, %v363
  %v365 = vsel %vm364, 0, %v363
  %v366 = vsub.s32 32, %v365
  %v367 = vshll.u32 %v358, %v365
  %v368 = vshrl.u32 %v350, %v366
  %v369 = vor.u32 %v367, %v368
  %v370 = vsub.s32 4294967266, %v365
  %v371 = vadd.s32 %v370, 127
  %v372 = vshll.u32 %v371, 23
  %v373 = vor.u32 4788187, %v372
  %v374 = vand.u32 2147483647, %v373
  %v376 = vcvt.s32.f32 %v369
  %v377 = vmul.f32 %v376, %v374
  %v378 = vxor.u32 %v377, 2147483648
  %v379 = vsel %vm296, %v378, %v377
  %v380 = vsub.s32 4, %v356
  %v381 = vsel %vm296, %v380, %v356
  %v382 = vsel %vm295, %v262, %v379
  %v383 = vsel %vm295, 0, %v381
  %v384 = vcosq.f32.pop %v382
  %v385 = vsinq.f32.pop %v382
  %vm386 = vweird.f32 %v262
  %v387 = vand.u32 %v383, 3
  %vm388 = vcmp.lt.s32.totalorder %v387, 2
  %vm389 = vcmp.eq.s32.totalorder %v387, 0
  %v390 = vxor.u32 %v385, 2147483648
  %v391 = vsel %vm389, %v384, %v390
  %vm392 = vcmp.eq.s32.totalorder %v387, 2
  %v393 = vxor.u32 %v384, 2147483648
  %v394 = vsel %vm392, %v393, %v385
  %v395 = vsel %vm388, %v391, %v394
  %v396 = vsel %vm386, nan, %v395
  %v397 = vand.u32 2147483647, %v263
  %vm398 = vcmp.le.f32.partialorder %v397, 0.7853982
  %vm399 = vcmp.lt.s32.totalorder %v263, 0
  %v400 = vand.u32 %v263, 2139095040
  %v401 = vshrl.u32 %v400, 23
  %v402 = vsub.s32 %v401, 127
  %v403 = vand.u32 2147483647, %v263
  %v404 = vand.u32 %v403, 8388607
  %v405 = vor.u32 %v404, 8388608
  %v406 = vsub.s32 0, %v405
  %v407 = vadd.s32 %v402, 1
  %vm408 = vcmp.gt.s32.totalorder %v407, 0
  %v409 = vsel %vm408, %v407, 0
  %v410 = vshrl.u32 %v409, 5
  %v411 = vand.u32 %v409, 31
  %v412 = vsub.s32 32, %v411
  %v413 = vshrl.u32 683565275, %v412
  %v414 = vshll.u32 683565275, %v411
  %v415 = vshrl.u32 2475754826, %v412
  %v416 = vor.u32 %v414, %v415
  %v417 = vshll.u32 2475754826, %v411
  %v418 = vshrl.u32 2131351028, %v412
  %v419 = vor.u32 %v417, %v418
  %v420 = vshll.u32 2131351028, %v411
  %v421 = vshrl.u32 2102212464, %v412
  %v422 = vor.u32 %v420, %v421
  %v423 = vshll.u32 2102212464, %v411
  %v424 = vshrl.u32 920167782, %v412
  %v425 = vor.u32 %v423, %v424
  %v426 = vshll.u32 920167782, %v411
  %v427 = vshrl.u32 1326507024, %v412
  %v428 = vor.u32 %v426, %v427
  %vm429 = vcmp.lt.s32.totalorder %v410, 1
  %vm430 = vcmp.lt.s32.totalorder %v410, 2
  %vm431 = vcmp.lt.s32.totalorder %v410, 3
  %vm432 = vcmp.lt.s32.totalorder %v410, 4
  %v433 = vsel %vm429, %v413, %v416
  %v434 = vsel %vm432, %v422, 2102212464
  %v435 = vsel %vm431, %v419, %v434
  %v436 = vsel %vm430, %v433, %v435
  %v437 = vsel %vm429, %v416, %v419
  %v438 = vsel %vm432, %v425, 920167782
  %v439 = vsel %vm431, %v422, %v438
  %v440 = vsel %vm430, %v437, %v439
  %v441 = vsel %vm429, %v419, %v422
  %v442 = vsel %vm432, %v428, 1326507024
  %v443 = vsel %vm431, %v425, %v442
  %v444 = vsel %vm430, %v441, %v443
  %v445 = vshll.u32 %v405, 8
  %v446 = vmul.u32.u64.compose %v445, %v444
  %v447 = vextract.low.u32 %v446
  %v448 = vextract.high.u32 %v446
  %v449 = vmul.u32.u64.compose %v445, %v440
  %v450 = vextract.low.u32 %v449
  %v451 = vextract.high.u32 %v449
  %v452 = vmul.u32 %v445, %v436
  %v453 = vadd.s32 %v448, %v450
  %vm454 = vc.u32 %v448, %v450
  %v455 = vadd.s32 %v451, 1
  %v456 = vsel %vm454, %v455, %v451
  %v457 = vadd.s32 %v452, %v456
  %v458 = vadd.s32 %v457, 536870912
  %v459 = vshrl.u32 %v458, 30
  %v460 = vshll.u32 %v459, 30
  %v461 = vsub.s32 %v457, %v460
  %vm462 = vcmp.lt.s32.totalorder %v461, 0
  %v463 = vsub.s32 0, %v461
  %v464 = vsel %vm462, %v463, %v461
  %v465 = vclz %v464
  %v466 = vsub.s32 %v465, 2
  %vm467 = vcmp.gt.s32.totalorder 0, %v466
  %v468 = vsel %vm467, 0, %v466
  %v469 = vsub.s32 32, %v468
  %v470 = vshll.u32 %v461, %v468
  %v471 = vshrl.u32 %v453, %v469
  %v472 = vor.u32 %v470, %v471
  %v473 = vsub.s32 4294967266, %v468
  %v474 = vadd.s32 %v473, 127
  %v475 = vshll.u32 %v474, 23
  %v476 = vor.u32 4788187, %v475
  %v477 = vand.u32 2147483647, %v476
  %v479 = vcvt.s32.f32 %v472
  %v480 = vmul.f32 %v479, %v477
  %v481 = vxor.u32 %v480, 2147483648
  %v482 = vsel %vm399, %v481, %v480
  %v483 = vsub.s32 4, %v459
  %v484 = vsel %vm399, %v483, %v459
  %v485 = vsel %vm398, %v263, %v482
  %v486 = vsel %vm398, 0, %v484
  %v487 = vcosq.f32.pop %v485
  %v488 = vsinq.f32.pop %v485
  %vm489 = vweird.f32 %v263
  %v490 = vand.u32 %v486, 3
  %vm491 = vcmp.lt.s32.totalorder %v490, 2
  %vm492 = vcmp.eq.s32.totalorder %v490, 0
  %v493 = vxor.u32 %v488, 2147483648
  %v494 = vsel %vm492, %v487, %v493
  %vm495 = vcmp.eq.s32.totalorder %v490, 2
  %v496 = vxor.u32 %v487, 2147483648
  %v497 = vsel %vm495, %v496, %v488
  %v498 = vsel %vm491, %v494, %v497
  %v499 = vsel %vm489, nan, %v498
  %v500 = vand.u32 2147483647, %v264
  %vm501 = vcmp.le.f32.partialorder %v500, 0.7853982
  %vm502 = vcmp.lt.s32.totalorder %v264, 0
  %v503 = vand.u32 %v264, 2139095040
  %v504 = vshrl.u32 %v503, 23
  %v505 = vsub.s32 %v504, 127
  %v506 = vand.u32 2147483647, %v264
  %v507 = vand.u32 %v506, 8388607
  %v508 = vor.u32 %v507, 8388608
  %v509 = vsub.s32 0, %v508
  %v510 = vadd.s32 %v505, 1
  %vm511 = vcmp.gt.s32.totalorder %v510, 0
  %v512 = vsel %vm511, %v510, 0
  %v513 = vshrl.u32 %v512, 5
  %v514 = vand.u32 %v512, 31
  %v515 = vsub.s32 32, %v514
  %v516 = vshrl.u32 683565275, %v515
  %v517 = vshll.u32 683565275, %v514
  %v518 = vshrl.u32 2475754826, %v515
  %v519 = vor.u32 %v517, %v518
  %v520 = vshll.u32 2475754826, %v514
  %v521 = vshrl.u32 2131351028, %v515
  %v522 = vor.u32 %v520, %v521
  %v523 = vshll.u32 2131351028, %v514
  %v524 = vshrl.u32 2102212464, %v515
  %v525 = vor.u32 %v523, %v524
  %v526 = vshll.u32 2102212464, %v514
  %v527 = vshrl.u32 920167782, %v515
  %v528 = vor.u32 %v526, %v527
  %v529 = vshll.u32 920167782, %v514
  %v530 = vshrl.u32 1326507024, %v515
  %v531 = vor.u32 %v529, %v530
  %vm532 = vcmp.lt.s32.totalorder %v513, 1
  %vm533 = vcmp.lt.s32.totalorder %v513, 2
  %vm534 = vcmp.lt.s32.totalorder %v513, 3
  %vm535 = vcmp.lt.s32.totalorder %v513, 4
  %v536 = vsel %vm532, %v516, %v519
  %v537 = vsel %vm535, %v525, 2102212464
  %v538 = vsel %vm534, %v522, %v537
  %v539 = vsel %vm533, %v536, %v538
  %v540 = vsel %vm532, %v519, %v522
  %v541 = vsel %vm535, %v528, 920167782
  %v542 = vsel %vm534, %v525, %v541
  %v543 = vsel %vm533, %v540, %v542
  %v544 = vsel %vm532, %v522, %v525
  %v545 = vsel %vm535, %v531, 1326507024
  %v546 = vsel %vm534, %v528, %v545
  %v547 = vsel %vm533, %v544, %v546
  %v548 = vshll.u32 %v508, 8
  %v549 = vmul.u32.u64.compose %v548, %v547
  %v550 = vextract.low.u32 %v549
  %v551 = vextract.high.u32 %v549
  %v552 = vmul.u32.u64.compose %v548, %v543
  %v553 = vextract.low.u32 %v552
  %v554 = vextract.high.u32 %v552
  %v555 = vmul.u32 %v548, %v539
  %v556 = vadd.s32 %v551, %v553
  %vm557 = vc.u32 %v551, %v553
  %v558 = vadd.s32 %v554, 1
  %v559 = vsel %vm557, %v558, %v554
  %v560 = vadd.s32 %v555, %v559
  %v561 = vadd.s32 %v560, 536870912
  %v562 = vshrl.u32 %v561, 30
  %v563 = vshll.u32 %v562, 30
  %v564 = vsub.s32 %v560, %v563
  %vm565 = vcmp.lt.s32.totalorder %v564, 0
  %v566 = vsub.s32 0, %v564
  %v567 = vsel %vm565, %v566, %v564
  %v568 = vclz %v567
  %v569 = vsub.s32 %v568, 2
  %vm570 = vcmp.gt.s32.totalorder 0, %v569
  %v571 = vsel %vm570, 0, %v569
  %v572 = vsub.s32 32, %v571
  %v573 = vshll.u32 %v564, %v571
  %v574 = vshrl.u32 %v556, %v572
  %v575 = vor.u32 %v573, %v574
  %v576 = vsub.s32 4294967266, %v571
  %v577 = vadd.s32 %v576, 127
  %v578 = vshll.u32 %v577, 23
  %v579 = vor.u32 4788187, %v578
  %v580 = vand.u32 2147483647, %v579
  %v582 = vcvt.s32.f32 %v575
  %v583 = vmul.f32 %v582, %v580
  %v584 = vxor.u32 %v583, 2147483648
  %v585 = vsel %vm502, %v584, %v583
  %v586 = vsub.s32 4, %v562
  %v587 = vsel %vm502, %v586, %v562
  %v588 = vsel %vm501, %v264, %v585
  %v589 = vsel %vm501, 0, %v587
  %v590 = vcosq.f32.pop %v588
  %v591 = vsinq.f32.pop %v588
  %vm592 = vweird.f32 %v264
  %v593 = vand.u32 %v589, 3
  %vm594 = vcmp.lt.s32.totalorder %v593, 2
  %vm595 = vcmp.eq.s32.totalorder %v593, 0
  %v596 = vxor.u32 %v591, 2147483648
  %v597 = vsel %vm595, %v590, %v596
  %vm598 = vcmp.eq.s32.totalorder %v593, 2
  %v599 = vxor.u32 %v590, 2147483648
  %v600 = vsel %vm598, %v599, %v591
  %v601 = vsel %vm594, %v597, %v600
  %v602 = vsel %vm592, nan, %v601
  %v603 = vand.u32 2147483647, %v265
  %vm604 = vcmp.le.f32.partialorder %v603, 0.7853982
  %vm605 = vcmp.lt.s32.totalorder %v265, 0
  %v606 = vand.u32 %v265, 2139095040
  %v607 = vshrl.u32 %v606, 23
  %v608 = vsub.s32 %v607, 127
  %v609 = vand.u32 2147483647, %v265
  %v610 = vand.u32 %v609, 8388607
  %v611 = vor.u32 %v610, 8388608
  %v612 = vsub.s32 0, %v611
  %v613 = vadd.s32 %v608, 1
  %vm614 = vcmp.gt.s32.totalorder %v613, 0
  %v615 = vsel %vm614, %v613, 0
  %v616 = vshrl.u32 %v615, 5
  %v617 = vand.u32 %v615, 31
  %v618 = vsub.s32 32, %v617
  %v619 = vshrl.u32 683565275, %v618
  %v620 = vshll.u32 683565275, %v617
  %v621 = vshrl.u32 2475754826, %v618
  %v622 = vor.u32 %v620, %v621
  %v623 = vshll.u32 2475754826, %v617
  %v624 = vshrl.u32 2131351028, %v618
  %v625 = vor.u32 %v623, %v624
  %v626 = vshll.u32 2131351028, %v617
  %v627 = vshrl.u32 2102212464, %v618
  %v628 = vor.u32 %v626, %v627
  %v629 = vshll.u32 2102212464, %v617
  %v630 = vshrl.u32 920167782, %v618
  %v631 = vor.u32 %v629, %v630
  %v632 = vshll.u32 920167782, %v617
  %v633 = vshrl.u32 1326507024, %v618
  %v634 = vor.u32 %v632, %v633
  %vm635 = vcmp.lt.s32.totalorder %v616, 1
  %vm636 = vcmp.lt.s32.totalorder %v616, 2
  %vm637 = vcmp.lt.s32.totalorder %v616, 3
  %vm638 = vcmp.lt.s32.totalorder %v616, 4
  %v639 = vsel %vm635, %v619, %v622
  %v640 = vsel %vm638, %v628, 2102212464
  %v641 = vsel %vm637, %v625, %v640
  %v642 = vsel %vm636, %v639, %v641
  %v643 = vsel %vm635, %v622, %v625
  %v644 = vsel %vm638, %v631, 920167782
  %v645 = vsel %vm637, %v628, %v644
  %v646 = vsel %vm636, %v643, %v645
  %v647 = vsel %vm635, %v625, %v628
  %v648 = vsel %vm638, %v634, 1326507024
  %v649 = vsel %vm637, %v631, %v648
  %v650 = vsel %vm636, %v647, %v649
  %v651 = vshll.u32 %v611, 8
  %v652 = vmul.u32.u64.compose %v651, %v650
  %v653 = vextract.low.u32 %v652
  %v654 = vextract.high.u32 %v652
  %v655 = vmul.u32.u64.compose %v651, %v646
  %v656 = vextract.low.u32 %v655
  %v657 = vextract.high.u32 %v655
  %v658 = vmul.u32 %v651, %v642
  %v659 = vadd.s32 %v654, %v656
  %vm660 = vc.u32 %v654, %v656
  %v661 = vadd.s32 %v657, 1
  %v662 = vsel %vm660, %v661, %v657
  %v663 = vadd.s32 %v658, %v662
  %v664 = vadd.s32 %v663, 536870912
  %v665 = vshrl.u32 %v664, 30
  %v666 = vshll.u32 %v665, 30
  %v667 = vsub.s32 %v663, %v666
  %vm668 = vcmp.lt.s32.totalorder %v667, 0
  %v669 = vsub.s32 0, %v667
  %v670 = vsel %vm668, %v669, %v667
  %v671 = vclz %v670
  %v672 = vsub.s32 %v671, 2
  %vm673 = vcmp.gt.s32.totalorder 0, %v672
  %v674 = vsel %vm673, 0, %v672
  %v675 = vsub.s32 32, %v674
  %v676 = vshll.u32 %v667, %v674
  %v677 = vshrl.u32 %v659, %v675
  %v678 = vor.u32 %v676, %v677
  %v679 = vsub.s32 4294967266, %v674
  %v680 = vadd.s32 %v679, 127
  %v681 = vshll.u32 %v680, 23
  %v682 = vor.u32 4788187, %v681
  %v683 = vand.u32 2147483647, %v682
  %v685 = vcvt.s32.f32 %v678
  %v686 = vmul.f32 %v685, %v683
  %v687 = vxor.u32 %v686, 2147483648
  %v688 = vsel %vm605, %v687, %v686
  %v689 = vsub.s32 4, %v665
  %v690 = vsel %vm605, %v689, %v665
  %v691 = vsel %vm604, %v265, %v688
  %v692 = vsel %vm604, 0, %v690
  %v693 = vcosq.f32.pop %v691
  %v694 = vsinq.f32.pop %v691
  %vm695 = vweird.f32 %v265
  %v696 = vand.u32 %v692, 3
  %vm697 = vcmp.lt.s32.totalorder %v696, 2
  %vm698 = vcmp.eq.s32.totalorder %v696, 0
  %v699 = vxor.u32 %v694, 2147483648
  %v700 = vsel %vm698, %v693, %v699
  %vm701 = vcmp.eq.s32.totalorder %v696, 2
  %v702 = vxor.u32 %v693, 2147483648
  %v703 = vsel %vm701, %v702, %v694
  %v704 = vsel %vm697, %v700, %v703
  %v705 = vsel %vm695, nan, %v704
  %v706 = vand.u32 2147483647, %v266
  %vm707 = vcmp.le.f32.partialorder %v706, 0.7853982
  %vm708 = vcmp.lt.s32.totalorder %v266, 0
  %v709 = vand.u32 %v266, 2139095040
  %v710 = vshrl.u32 %v709, 23
  %v711 = vsub.s32 %v710, 127
  %v712 = vand.u32 2147483647, %v266
  %v713 = vand.u32 %v712, 8388607
  %v714 = vor.u32 %v713, 8388608
  %v715 = vsub.s32 0, %v714
  %v716 = vadd.s32 %v711, 1
  %vm717 = vcmp.gt.s32.totalorder %v716, 0
  %v718 = vsel %vm717, %v716, 0
  %v719 = vshrl.u32 %v718, 5
  %v720 = vand.u32 %v718, 31
  %v721 = vsub.s32 32, %v720
  %v722 = vshrl.u32 683565275, %v721
  %v723 = vshll.u32 683565275, %v720
  %v724 = vshrl.u32 2475754826, %v721
  %v725 = vor.u32 %v723, %v724
  %v726 = vshll.u32 2475754826, %v720
  %v727 = vshrl.u32 2131351028, %v721
  %v728 = vor.u32 %v726, %v727
  %v729 = vshll.u32 2131351028, %v720
  %v730 = vshrl.u32 2102212464, %v721
  %v731 = vor.u32 %v729, %v730
  %v732 = vshll.u32 2102212464, %v720
  %v733 = vshrl.u32 920167782, %v721
  %v734 = vor.u32 %v732, %v733
  %v735 = vshll.u32 920167782, %v720
  %v736 = vshrl.u32 1326507024, %v721
  %v737 = vor.u32 %v735, %v736
  %vm738 = vcmp.lt.s32.totalorder %v719, 1
  %vm739 = vcmp.lt.s32.totalorder %v719, 2
  %vm740 = vcmp.lt.s32.totalorder %v719, 3
  %vm741 = vcmp.lt.s32.totalorder %v719, 4
  %v742 = vsel %vm738, %v722, %v725
  %v743 = vsel %vm741, %v731, 2102212464
  %v744 = vsel %vm740, %v728, %v743
  %v745 = vsel %vm739, %v742, %v744
  %v746 = vsel %vm738, %v725, %v728
  %v747 = vsel %vm741, %v734, 920167782
  %v748 = vsel %vm740, %v731, %v747
  %v749 = vsel %vm739, %v746, %v748
  %v750 = vsel %vm738, %v728, %v731
  %v751 = vsel %vm741, %v737, 1326507024
  %v752 = vsel %vm740, %v734, %v751
  %v753 = vsel %vm739, %v750, %v752
  %v754 = vshll.u32 %v714, 8
  %v755 = vmul.u32.u64.compose %v754, %v753
  %v756 = vextract.low.u32 %v755
  %v757 = vextract.high.u32 %v755
  %v758 = vmul.u32.u64.compose %v754, %v749
  %v759 = vextract.low.u32 %v758
  %v760 = vextract.high.u32 %v758
  %v761 = vmul.u32 %v754, %v745
  %v762 = vadd.s32 %v757, %v759
  %vm763 = vc.u32 %v757, %v759
  %v764 = vadd.s32 %v760, 1
  %v765 = vsel %vm763, %v764, %v760
  %v766 = vadd.s32 %v761, %v765
  %v767 = vadd.s32 %v766, 536870912
  %v768 = vshrl.u32 %v767, 30
  %v769 = vshll.u32 %v768, 30
  %v770 = vsub.s32 %v766, %v769
  %vm771 = vcmp.lt.s32.totalorder %v770, 0
  %v772 = vsub.s32 0, %v770
  %v773 = vsel %vm771, %v772, %v770
  %v774 = vclz %v773
  %v775 = vsub.s32 %v774, 2
  %vm776 = vcmp.gt.s32.totalorder 0, %v775
  %v777 = vsel %vm776, 0, %v775
  %v778 = vsub.s32 32, %v777
  %v779 = vshll.u32 %v770, %v777
  %v780 = vshrl.u32 %v762, %v778
  %v781 = vor.u32 %v779, %v780
  %v782 = vsub.s32 4294967266, %v777
  %v783 = vadd.s32 %v782, 127
  %v784 = vshll.u32 %v783, 23
  %v785 = vor.u32 4788187, %v784
  %v786 = vand.u32 2147483647, %v785
  %v788 = vcvt.s32.f32 %v781
  %v789 = vmul.f32 %v788, %v786
  %v790 = vxor.u32 %v789, 2147483648
  %v791 = vsel %vm708, %v790, %v789
  %v792 = vsub.s32 4, %v768
  %v793 = vsel %vm708, %v792, %v768
  %v794 = vsel %vm707, %v266, %v791
  %v795 = vsel %vm707, 0, %v793
  %v796 = vcosq.f32.pop %v794
  %v797 = vsinq.f32.pop %v794
  %vm798 = vweird.f32 %v266
  %v799 = vand.u32 %v795, 3
  %vm800 = vcmp.lt.s32.totalorder %v799, 2
  %vm801 = vcmp.eq.s32.totalorder %v799, 0
  %v802 = vxor.u32 %v797, 2147483648
  %v803 = vsel %vm801, %v796, %v802
  %vm804 = vcmp.eq.s32.totalorder %v799, 2
  %v805 = vxor.u32 %v796, 2147483648
  %v806 = vsel %vm804, %v805, %v797
  %v807 = vsel %vm800, %v803, %v806
  %v808 = vsel %vm798, nan, %v807
  %v809 = vand.u32 2147483647, %v267
  %vm810 = vcmp.le.f32.partialorder %v809, 0.7853982
  %vm811 = vcmp.lt.s32.totalorder %v267, 0
  %v812 = vand.u32 %v267, 2139095040
  %v813 = vshrl.u32 %v812, 23
  %v814 = vsub.s32 %v813, 127
  %v815 = vand.u32 2147483647, %v267
  %v816 = vand.u32 %v815, 8388607
  %v817 = vor.u32 %v816, 8388608
  %v818 = vsub.s32 0, %v817
  %v819 = vadd.s32 %v814, 1
  %vm820 = vcmp.gt.s32.totalorder %v819, 0
  %v821 = vsel %vm820, %v819, 0
  %v822 = vshrl.u32 %v821, 5
  %v823 = vand.u32 %v821, 31
  %v824 = vsub.s32 32, %v823
  %v825 = vshrl.u32 683565275, %v824
  %v826 = vshll.u32 683565275, %v823
  %v827 = vshrl.u32 2475754826, %v824
  %v828 = vor.u32 %v826, %v827
  %v829 = vshll.u32 2475754826, %v823
  %v830 = vshrl.u32 2131351028, %v824
  %v831 = vor.u32 %v829, %v830
  %v832 = vshll.u32 2131351028, %v823
  %v833 = vshrl.u32 2102212464, %v824
  %v834 = vor.u32 %v832, %v833
  %v835 = vshll.u32 2102212464, %v823
  %v836 = vshrl.u32 920167782, %v824
  %v837 = vor.u32 %v835, %v836
  %v838 = vshll.u32 920167782, %v823
  %v839 = vshrl.u32 1326507024, %v824
  %v840 = vor.u32 %v838, %v839
  %vm841 = vcmp.lt.s32.totalorder %v822, 1
  %vm842 = vcmp.lt.s32.totalorder %v822, 2
  %vm843 = vcmp.lt.s32.totalorder %v822, 3
  %vm844 = vcmp.lt.s32.totalorder %v822, 4
  %v845 = vsel %vm841, %v825, %v828
  %v846 = vsel %vm844, %v834, 2102212464
  %v847 = vsel %vm843, %v831, %v846
  %v848 = vsel %vm842, %v845, %v847
  %v849 = vsel %vm841, %v828, %v831
  %v850 = vsel %vm844, %v837, 920167782
  %v851 = vsel %vm843, %v834, %v850
  %v852 = vsel %vm842, %v849, %v851
  %v853 = vsel %vm841, %v831, %v834
  %v854 = vsel %vm844, %v840, 1326507024
  %v855 = vsel %vm843, %v837, %v854
  %v856 = vsel %vm842, %v853, %v855
  %v857 = vshll.u32 %v817, 8
  %v858 = vmul.u32.u64.compose %v857, %v856
  %v859 = vextract.low.u32 %v858
  %v860 = vextract.high.u32 %v858
  %v861 = vmul.u32.u64.compose %v857, %v852
  %v862 = vextract.low.u32 %v861
  %v863 = vextract.high.u32 %v861
  %v864 = vmul.u32 %v857, %v848
  %v865 = vadd.s32 %v860, %v862
  %vm866 = vc.u32 %v860, %v862
  %v867 = vadd.s32 %v863, 1
  %v868 = vsel %vm866, %v867, %v863
  %v869 = vadd.s32 %v864, %v868
  %v870 = vadd.s32 %v869, 536870912
  %v871 = vshrl.u32 %v870, 30
  %v872 = vshll.u32 %v871, 30
  %v873 = vsub.s32 %v869, %v872
  %vm874 = vcmp.lt.s32.totalorder %v873, 0
  %v875 = vsub.s32 0, %v873
  %v876 = vsel %vm874, %v875, %v873
  %v877 = vclz %v876
  %v878 = vsub.s32 %v877, 2
  %vm879 = vcmp.gt.s32.totalorder 0, %v878
  %v880 = vsel %vm879, 0, %v878
  %v881 = vsub.s32 32, %v880
  %v882 = vshll.u32 %v873, %v880
  %v883 = vshrl.u32 %v865, %v881
  %v884 = vor.u32 %v882, %v883
  %v885 = vsub.s32 4294967266, %v880
  %v886 = vadd.s32 %v885, 127
  %v887 = vshll.u32 %v886, 23
  %v888 = vor.u32 4788187, %v887
  %v889 = vand.u32 2147483647, %v888
  %v891 = vcvt.s32.f32 %v884
  %v892 = vmul.f32 %v891, %v889
  %v893 = vxor.u32 %v892, 2147483648
  %v894 = vsel %vm811, %v893, %v892
  %v895 = vsub.s32 4, %v871
  %v896 = vsel %vm811, %v895, %v871
  %v897 = vsel %vm810, %v267, %v894
  %v898 = vsel %vm810, 0, %v896
  %v899 = vcosq.f32.pop %v897
  %v900 = vsinq.f32.pop %v897
  %vm901 = vweird.f32 %v267
  %v902 = vand.u32 %v898, 3
  %vm903 = vcmp.lt.s32.totalorder %v902, 2
  %vm904 = vcmp.eq.s32.totalorder %v902, 0
  %v905 = vxor.u32 %v900, 2147483648
  %v906 = vsel %vm904, %v899, %v905
  %vm907 = vcmp.eq.s32.totalorder %v902, 2
  %v908 = vxor.u32 %v899, 2147483648
  %v909 = vsel %vm907, %v908, %v900
  %v910 = vsel %vm903, %v906, %v909
  %v911 = vsel %vm901, nan, %v910
  %v912 = vand.u32 2147483647, %v268
  %vm913 = vcmp.le.f32.partialorder %v912, 0.7853982
  %vm914 = vcmp.lt.s32.totalorder %v268, 0
  %v915 = vand.u32 %v268, 2139095040
  %v916 = vshrl.u32 %v915, 23
  %v917 = vsub.s32 %v916, 127
  %v918 = vand.u32 2147483647, %v268
  %v919 = vand.u32 %v918, 8388607
  %v920 = vor.u32 %v919, 8388608
  %v921 = vsub.s32 0, %v920
  %v922 = vadd.s32 %v917, 1
  %vm923 = vcmp.gt.s32.totalorder %v922, 0
  %v924 = vsel %vm923, %v922, 0
  %v925 = vshrl.u32 %v924, 5
  %v926 = vand.u32 %v924, 31
  %v927 = vsub.s32 32, %v926
  %v928 = vshrl.u32 683565275, %v927
  %v929 = vshll.u32 683565275, %v926
  %v930 = vshrl.u32 2475754826, %v927
  %v931 = vor.u32 %v929, %v930
  %v932 = vshll.u32 2475754826, %v926
  %v933 = vshrl.u32 2131351028, %v927
  %v934 = vor.u32 %v932, %v933
  %v935 = vshll.u32 2131351028, %v926
  %v936 = vshrl.u32 2102212464, %v927
  %v937 = vor.u32 %v935, %v936
  %v938 = vshll.u32 2102212464, %v926
  %v939 = vshrl.u32 920167782, %v927
  %v940 = vor.u32 %v938, %v939
  %v941 = vshll.u32 920167782, %v926
  %v942 = vshrl.u32 1326507024, %v927
  %v943 = vor.u32 %v941, %v942
  %vm944 = vcmp.lt.s32.totalorder %v925, 1
  %vm945 = vcmp.lt.s32.totalorder %v925, 2
  %vm946 = vcmp.lt.s32.totalorder %v925, 3
  %vm947 = vcmp.lt.s32.totalorder %v925, 4
  %v948 = vsel %vm944, %v928, %v931
  %v949 = vsel %vm947, %v937, 2102212464
  %v950 = vsel %vm946, %v934, %v949
  %v951 = vsel %vm945, %v948, %v950
  %v952 = vsel %vm944, %v931, %v934
  %v953 = vsel %vm947, %v940, 920167782
  %v954 = vsel %vm946, %v937, %v953
  %v955 = vsel %vm945, %v952, %v954
  %v956 = vsel %vm944, %v934, %v937
  %v957 = vsel %vm947, %v943, 1326507024
  %v958 = vsel %vm946, %v940, %v957
  %v959 = vsel %vm945, %v956, %v958
  %v960 = vshll.u32 %v920, 8
  %v961 = vmul.u32.u64.compose %v960, %v959
  %v962 = vextract.low.u32 %v961
  %v963 = vextract.high.u32 %v961
  %v964 = vmul.u32.u64.compose %v960, %v955
  %v965 = vextract.low.u32 %v964
  %v966 = vextract.high.u32 %v964
  %v967 = vmul.u32 %v960, %v951
  %v968 = vadd.s32 %v963, %v965
  %vm969 = vc.u32 %v963, %v965
  %v970 = vadd.s32 %v966, 1
  %v971 = vsel %vm969, %v970, %v966
  %v972 = vadd.s32 %v967, %v971
  %v973 = vadd.s32 %v972, 536870912
  %v974 = vshrl.u32 %v973, 30
  %v975 = vshll.u32 %v974, 30
  %v976 = vsub.s32 %v972, %v975
  %vm977 = vcmp.lt.s32.totalorder %v976, 0
  %v978 = vsub.s32 0, %v976
  %v979 = vsel %vm977, %v978, %v976
  %v980 = vclz %v979
  %v981 = vsub.s32 %v980, 2
  %vm982 = vcmp.gt.s32.totalorder 0, %v981
  %v983 = vsel %vm982, 0, %v981
  %v984 = vsub.s32 32, %v983
  %v985 = vshll.u32 %v976, %v983
  %v986 = vshrl.u32 %v968, %v984
  %v987 = vor.u32 %v985, %v986
  %v988 = vsub.s32 4294967266, %v983
  %v989 = vadd.s32 %v988, 127
  %v990 = vshll.u32 %v989, 23
  %v991 = vor.u32 4788187, %v990
  %v992 = vand.u32 2147483647, %v991
  %v994 = vcvt.s32.f32 %v987
  %v995 = vmul.f32 %v994, %v992
  %v996 = vxor.u32 %v995, 2147483648
  %v997 = vsel %vm914, %v996, %v995
  %v998 = vsub.s32 4, %v974
  %v999 = vsel %vm914, %v998, %v974
  %v1000 = vsel %vm913, %v268, %v997
  %v1001 = vsel %vm913, 0, %v999
  %v1002 = vcosq.f32.pop %v1000
  %v1003 = vsinq.f32.pop %v1000
  %vm1004 = vweird.f32 %v268
  %v1005 = vand.u32 %v1001, 3
  %vm1006 = vcmp.lt.s32.totalorder %v1005, 2
  %vm1007 = vcmp.eq.s32.totalorder %v1005, 0
  %v1008 = vxor.u32 %v1003, 2147483648
  %v1009 = vsel %vm1007, %v1002, %v1008
  %vm1010 = vcmp.eq.s32.totalorder %v1005, 2
  %v1011 = vxor.u32 %v1002, 2147483648
  %v1012 = vsel %vm1010, %v1011, %v1003
  %v1013 = vsel %vm1006, %v1009, %v1012
  %v1014 = vsel %vm1004, nan, %v1013
  %v1015 = vand.u32 2147483647, %v269
  %vm1016 = vcmp.le.f32.partialorder %v1015, 0.7853982
  %vm1017 = vcmp.lt.s32.totalorder %v269, 0
  %v1018 = vand.u32 %v269, 2139095040
  %v1019 = vshrl.u32 %v1018, 23
  %v1020 = vsub.s32 %v1019, 127
  %v1021 = vand.u32 2147483647, %v269
  %v1022 = vand.u32 %v1021, 8388607
  %v1023 = vor.u32 %v1022, 8388608
  %v1024 = vsub.s32 0, %v1023
  %v1025 = vadd.s32 %v1020, 1
  %vm1026 = vcmp.gt.s32.totalorder %v1025, 0
  %v1027 = vsel %vm1026, %v1025, 0
  %v1028 = vshrl.u32 %v1027, 5
  %v1029 = vand.u32 %v1027, 31
  %v1030 = vsub.s32 32, %v1029
  %v1031 = vshrl.u32 683565275, %v1030
  %v1032 = vshll.u32 683565275, %v1029
  %v1033 = vshrl.u32 2475754826, %v1030
  %v1034 = vor.u32 %v1032, %v1033
  %v1035 = vshll.u32 2475754826, %v1029
  %v1036 = vshrl.u32 2131351028, %v1030
  %v1037 = vor.u32 %v1035, %v1036
  %v1038 = vshll.u32 2131351028, %v1029
  %v1039 = vshrl.u32 2102212464, %v1030
  %v1040 = vor.u32 %v1038, %v1039
  %v1041 = vshll.u32 2102212464, %v1029
  %v1042 = vshrl.u32 920167782, %v1030
  %v1043 = vor.u32 %v1041, %v1042
  %v1044 = vshll.u32 920167782, %v1029
  %v1045 = vshrl.u32 1326507024, %v1030
  %v1046 = vor.u32 %v1044, %v1045
  %vm1047 = vcmp.lt.s32.totalorder %v1028, 1
  %vm1048 = vcmp.lt.s32.totalorder %v1028, 2
  %vm1049 = vcmp.lt.s32.totalorder %v1028, 3
  %vm1050 = vcmp.lt.s32.totalorder %v1028, 4
  %v1051 = vsel %vm1047, %v1031, %v1034
  %v1052 = vsel %vm1050, %v1040, 2102212464
  %v1053 = vsel %vm1049, %v1037, %v1052
  %v1054 = vsel %vm1048, %v1051, %v1053
  %v1055 = vsel %vm1047, %v1034, %v1037
  %v1056 = vsel %vm1050, %v1043, 920167782
  %v1057 = vsel %vm1049, %v1040, %v1056
  %v1058 = vsel %vm1048, %v1055, %v1057
  %v1059 = vsel %vm1047, %v1037, %v1040
  %v1060 = vsel %vm1050, %v1046, 1326507024
  %v1061 = vsel %vm1049, %v1043, %v1060
  %v1062 = vsel %vm1048, %v1059, %v1061
  %v1063 = vshll.u32 %v1023, 8
  %v1064 = vmul.u32.u64.compose %v1063, %v1062
  %v1065 = vextract.low.u32 %v1064
  %v1066 = vextract.high.u32 %v1064
  %v1067 = vmul.u32.u64.compose %v1063, %v1058
  %v1068 = vextract.low.u32 %v1067
  %v1069 = vextract.high.u32 %v1067
  %v1070 = vmul.u32 %v1063, %v1054
  %v1071 = vadd.s32 %v1066, %v1068
  %vm1072 = vc.u32 %v1066, %v1068
  %v1073 = vadd.s32 %v1069, 1
  %v1074 = vsel %vm1072, %v1073, %v1069
  %v1075 = vadd.s32 %v1070, %v1074
  %v1076 = vadd.s32 %v1075, 536870912
  %v1077 = vshrl.u32 %v1076, 30
  %v1078 = vshll.u32 %v1077, 30
  %v1079 = vsub.s32 %v1075, %v1078
  %vm1080 = vcmp.lt.s32.totalorder %v1079, 0
  %v1081 = vsub.s32 0, %v1079
  %v1082 = vsel %vm1080, %v1081, %v1079
  %v1083 = vclz %v1082
  %v1084 = vsub.s32 %v1083, 2
  %vm1085 = vcmp.gt.s32.totalorder 0, %v1084
  %v1086 = vsel %vm1085, 0, %v1084
  %v1087 = vsub.s32 32, %v1086
  %v1088 = vshll.u32 %v1079, %v1086
  %v1089 = vshrl.u32 %v1071, %v1087
  %v1090 = vor.u32 %v1088, %v1089
  %v1091 = vsub.s32 4294967266, %v1086
  %v1092 = vadd.s32 %v1091, 127
  %v1093 = vshll.u32 %v1092, 23
  %v1094 = vor.u32 4788187, %v1093
  %v1095 = vand.u32 2147483647, %v1094
  %v1097 = vcvt.s32.f32 %v1090
  %v1098 = vmul.f32 %v1097, %v1095
  %v1099 = vxor.u32 %v1098, 2147483648
  %v1100 = vsel %vm1017, %v1099, %v1098
  %v1101 = vsub.s32 4, %v1077
  %v1102 = vsel %vm1017, %v1101, %v1077
  %v1103 = vsel %vm1016, %v269, %v1100
  %v1104 = vsel %vm1016, 0, %v1102
  %v1105 = vcosq.f32.pop %v1103
  %v1106 = vsinq.f32.pop %v1103
  %vm1107 = vweird.f32 %v269
  %v1108 = vand.u32 %v1104, 3
  %vm1109 = vcmp.lt.s32.totalorder %v1108, 2
  %vm1110 = vcmp.eq.s32.totalorder %v1108, 0
  %v1111 = vxor.u32 %v1106, 2147483648
  %v1112 = vsel %vm1110, %v1105, %v1111
  %vm1113 = vcmp.eq.s32.totalorder %v1108, 2
  %v1114 = vxor.u32 %v1105, 2147483648
  %v1115 = vsel %vm1113, %v1114, %v1106
  %v1116 = vsel %vm1109, %v1112, %v1115
  %v1117 = vsel %vm1107, nan, %v1116
  %v1118 = vand.u32 2147483647, %v270
  %vm1119 = vcmp.le.f32.partialorder %v1118, 0.7853982
  %vm1120 = vcmp.lt.s32.totalorder %v270, 0
  %v1121 = vand.u32 %v270, 2139095040
  %v1122 = vshrl.u32 %v1121, 23
  %v1123 = vsub.s32 %v1122, 127
  %v1124 = vand.u32 2147483647, %v270
  %v1125 = vand.u32 %v1124, 8388607
  %v1126 = vor.u32 %v1125, 8388608
  %v1127 = vsub.s32 0, %v1126
  %v1128 = vadd.s32 %v1123, 1
  %vm1129 = vcmp.gt.s32.totalorder %v1128, 0
  %v1130 = vsel %vm1129, %v1128, 0
  %v1131 = vshrl.u32 %v1130, 5
  %v1132 = vand.u32 %v1130, 31
  %v1133 = vsub.s32 32, %v1132
  %v1134 = vshrl.u32 683565275, %v1133
  %v1135 = vshll.u32 683565275, %v1132
  %v1136 = vshrl.u32 2475754826, %v1133
  %v1137 = vor.u32 %v1135, %v1136
  %v1138 = vshll.u32 2475754826, %v1132
  %v1139 = vshrl.u32 2131351028, %v1133
  %v1140 = vor.u32 %v1138, %v1139
  %v1141 = vshll.u32 2131351028, %v1132
  %v1142 = vshrl.u32 2102212464, %v1133
  %v1143 = vor.u32 %v1141, %v1142
  %v1144 = vshll.u32 2102212464, %v1132
  %v1145 = vshrl.u32 920167782, %v1133
  %v1146 = vor.u32 %v1144, %v1145
  %v1147 = vshll.u32 920167782, %v1132
  %v1148 = vshrl.u32 1326507024, %v1133
  %v1149 = vor.u32 %v1147, %v1148
  %vm1150 = vcmp.lt.s32.totalorder %v1131, 1
  %vm1151 = vcmp.lt.s32.totalorder %v1131, 2
  %vm1152 = vcmp.lt.s32.totalorder %v1131, 3
  %vm1153 = vcmp.lt.s32.totalorder %v1131, 4
  %v1154 = vsel %vm1150, %v1134, %v1137
  %v1155 = vsel %vm1153, %v1143, 2102212464
  %v1156 = vsel %vm1152, %v1140, %v1155
  %v1157 = vsel %vm1151, %v1154, %v1156
  %v1158 = vsel %vm1150, %v1137, %v1140
  %v1159 = vsel %vm1153, %v1146, 920167782
  %v1160 = vsel %vm1152, %v1143, %v1159
  %v1161 = vsel %vm1151, %v1158, %v1160
  %v1162 = vsel %vm1150, %v1140, %v1143
  %v1163 = vsel %vm1153, %v1149, 1326507024
  %v1164 = vsel %vm1152, %v1146, %v1163
  %v1165 = vsel %vm1151, %v1162, %v1164
  %v1166 = vshll.u32 %v1126, 8
  %v1167 = vmul.u32.u64.compose %v1166, %v1165
  %v1168 = vextract.low.u32 %v1167
  %v1169 = vextract.high.u32 %v1167
  %v1170 = vmul.u32.u64.compose %v1166, %v1161
  %v1171 = vextract.low.u32 %v1170
  %v1172 = vextract.high.u32 %v1170
  %v1173 = vmul.u32 %v1166, %v1157
  %v1174 = vadd.s32 %v1169, %v1171
  %vm1175 = vc.u32 %v1169, %v1171
  %v1176 = vadd.s32 %v1172, 1
  %v1177 = vsel %vm1175, %v1176, %v1172
  %v1178 = vadd.s32 %v1173, %v1177
  %v1179 = vadd.s32 %v1178, 536870912
  %v1180 = vshrl.u32 %v1179, 30
  %v1181 = vshll.u32 %v1180, 30
  %v1182 = vsub.s32 %v1178, %v1181
  %vm1183 = vcmp.lt.s32.totalorder %v1182, 0
  %v1184 = vsub.s32 0, %v1182
  %v1185 = vsel %vm1183, %v1184, %v1182
  %v1186 = vclz %v1185
  %v1187 = vsub.s32 %v1186, 2
  %vm1188 = vcmp.gt.s32.totalorder 0, %v1187
  %v1189 = vsel %vm1188, 0, %v1187
  %v1190 = vsub.s32 32, %v1189
  %v1191 = vshll.u32 %v1182, %v1189
  %v1192 = vshrl.u32 %v1174, %v1190
  %v1193 = vor.u32 %v1191, %v1192
  %v1194 = vsub.s32 4294967266, %v1189
  %v1195 = vadd.s32 %v1194, 127
  %v1196 = vshll.u32 %v1195, 23
  %v1197 = vor.u32 4788187, %v1196
  %v1198 = vand.u32 2147483647, %v1197
  %v1200 = vcvt.s32.f32 %v1193
  %v1201 = vmul.f32 %v1200, %v1198
  %v1202 = vxor.u32 %v1201, 2147483648
  %v1203 = vsel %vm1120, %v1202, %v1201
  %v1204 = vsub.s32 4, %v1180
  %v1205 = vsel %vm1120, %v1204, %v1180
  %v1206 = vsel %vm1119, %v270, %v1203
  %v1207 = vsel %vm1119, 0, %v1205
  %v1208 = vcosq.f32.pop %v1206
  %v1209 = vsinq.f32.pop %v1206
  %vm1210 = vweird.f32 %v270
  %v1211 = vand.u32 %v1207, 3
  %vm1212 = vcmp.lt.s32.totalorder %v1211, 2
  %vm1213 = vcmp.eq.s32.totalorder %v1211, 0
  %v1214 = vxor.u32 %v1209, 2147483648
  %v1215 = vsel %vm1213, %v1208, %v1214
  %vm1216 = vcmp.eq.s32.totalorder %v1211, 2
  %v1217 = vxor.u32 %v1208, 2147483648
  %v1218 = vsel %vm1216, %v1217, %v1209
  %v1219 = vsel %vm1212, %v1215, %v1218
  %v1220 = vsel %vm1210, nan, %v1219
  %v1221 = vand.u32 2147483647, %v271
  %vm1222 = vcmp.le.f32.partialorder %v1221, 0.7853982
  %vm1223 = vcmp.lt.s32.totalorder %v271, 0
  %v1224 = vand.u32 %v271, 2139095040
  %v1225 = vshrl.u32 %v1224, 23
  %v1226 = vsub.s32 %v1225, 127
  %v1227 = vand.u32 2147483647, %v271
  %v1228 = vand.u32 %v1227, 8388607
  %v1229 = vor.u32 %v1228, 8388608
  %v1230 = vsub.s32 0, %v1229
  %v1231 = vadd.s32 %v1226, 1
  %vm1232 = vcmp.gt.s32.totalorder %v1231, 0
  %v1233 = vsel %vm1232, %v1231, 0
  %v1234 = vshrl.u32 %v1233, 5
  %v1235 = vand.u32 %v1233, 31
  %v1236 = vsub.s32 32, %v1235
  %v1237 = vshrl.u32 683565275, %v1236
  %v1238 = vshll.u32 683565275, %v1235
  %v1239 = vshrl.u32 2475754826, %v1236
  %v1240 = vor.u32 %v1238, %v1239
  %v1241 = vshll.u32 2475754826, %v1235
  %v1242 = vshrl.u32 2131351028, %v1236
  %v1243 = vor.u32 %v1241, %v1242
  %v1244 = vshll.u32 2131351028, %v1235
  %v1245 = vshrl.u32 2102212464, %v1236
  %v1246 = vor.u32 %v1244, %v1245
  %v1247 = vshll.u32 2102212464, %v1235
  %v1248 = vshrl.u32 920167782, %v1236
  %v1249 = vor.u32 %v1247, %v1248
  %v1250 = vshll.u32 920167782, %v1235
  %v1251 = vshrl.u32 1326507024, %v1236
  %v1252 = vor.u32 %v1250, %v1251
  %vm1253 = vcmp.lt.s32.totalorder %v1234, 1
  %vm1254 = vcmp.lt.s32.totalorder %v1234, 2
  %vm1255 = vcmp.lt.s32.totalorder %v1234, 3
  %vm1256 = vcmp.lt.s32.totalorder %v1234, 4
  %v1257 = vsel %vm1253, %v1237, %v1240
  %v1258 = vsel %vm1256, %v1246, 2102212464
  %v1259 = vsel %vm1255, %v1243, %v1258
  %v1260 = vsel %vm1254, %v1257, %v1259
  %v1261 = vsel %vm1253, %v1240, %v1243
  %v1262 = vsel %vm1256, %v1249, 920167782
  %v1263 = vsel %vm1255, %v1246, %v1262
  %v1264 = vsel %vm1254, %v1261, %v1263
  %v1265 = vsel %vm1253, %v1243, %v1246
  %v1266 = vsel %vm1256, %v1252, 1326507024
  %v1267 = vsel %vm1255, %v1249, %v1266
  %v1268 = vsel %vm1254, %v1265, %v1267
  %v1269 = vshll.u32 %v1229, 8
  %v1270 = vmul.u32.u64.compose %v1269, %v1268
  %v1271 = vextract.low.u32 %v1270
  %v1272 = vextract.high.u32 %v1270
  %v1273 = vmul.u32.u64.compose %v1269, %v1264
  %v1274 = vextract.low.u32 %v1273
  %v1275 = vextract.high.u32 %v1273
  %v1276 = vmul.u32 %v1269, %v1260
  %v1277 = vadd.s32 %v1272, %v1274
  %vm1278 = vc.u32 %v1272, %v1274
  %v1279 = vadd.s32 %v1275, 1
  %v1280 = vsel %vm1278, %v1279, %v1275
  %v1281 = vadd.s32 %v1276, %v1280
  %v1282 = vadd.s32 %v1281, 536870912
  %v1283 = vshrl.u32 %v1282, 30
  %v1284 = vshll.u32 %v1283, 30
  %v1285 = vsub.s32 %v1281, %v1284
  %vm1286 = vcmp.lt.s32.totalorder %v1285, 0
  %v1287 = vsub.s32 0, %v1285
  %v1288 = vsel %vm1286, %v1287, %v1285
  %v1289 = vclz %v1288
  %v1290 = vsub.s32 %v1289, 2
  %vm1291 = vcmp.gt.s32.totalorder 0, %v1290
  %v1292 = vsel %vm1291, 0, %v1290
  %v1293 = vsub.s32 32, %v1292
  %v1294 = vshll.u32 %v1285, %v1292
  %v1295 = vshrl.u32 %v1277, %v1293
  %v1296 = vor.u32 %v1294, %v1295
  %v1297 = vsub.s32 4294967266, %v1292
  %v1298 = vadd.s32 %v1297, 127
  %v1299 = vshll.u32 %v1298, 23
  %v1300 = vor.u32 4788187, %v1299
  %v1301 = vand.u32 2147483647, %v1300
  %v1303 = vcvt.s32.f32 %v1296
  %v1304 = vmul.f32 %v1303, %v1301
  %v1305 = vxor.u32 %v1304, 2147483648
  %v1306 = vsel %vm1223, %v1305, %v1304
  %v1307 = vsub.s32 4, %v1283
  %v1308 = vsel %vm1223, %v1307, %v1283
  %v1309 = vsel %vm1222, %v271, %v1306
  %v1310 = vsel %vm1222, 0, %v1308
  %v1311 = vcosq.f32.pop %v1309
  %v1312 = vsinq.f32.pop %v1309
  %vm1313 = vweird.f32 %v271
  %v1314 = vand.u32 %v1310, 3
  %vm1315 = vcmp.lt.s32.totalorder %v1314, 2
  %vm1316 = vcmp.eq.s32.totalorder %v1314, 0
  %v1317 = vxor.u32 %v1312, 2147483648
  %v1318 = vsel %vm1316, %v1311, %v1317
  %vm1319 = vcmp.eq.s32.totalorder %v1314, 2
  %v1320 = vxor.u32 %v1311, 2147483648
  %v1321 = vsel %vm1319, %v1320, %v1312
  %v1322 = vsel %vm1315, %v1318, %v1321
  %v1323 = vsel %vm1313, nan, %v1322
  %v1324 = vand.u32 2147483647, %v272
  %vm1325 = vcmp.le.f32.partialorder %v1324, 0.7853982
  %vm1326 = vcmp.lt.s32.totalorder %v272, 0
  %v1327 = vand.u32 %v272, 2139095040
  %v1328 = vshrl.u32 %v1327, 23
  %v1329 = vsub.s32 %v1328, 127
  %v1330 = vand.u32 2147483647, %v272
  %v1331 = vand.u32 %v1330, 8388607
  %v1332 = vor.u32 %v1331, 8388608
  %v1333 = vsub.s32 0, %v1332
  %v1334 = vadd.s32 %v1329, 1
  %vm1335 = vcmp.gt.s32.totalorder %v1334, 0
  %v1336 = vsel %vm1335, %v1334, 0
  %v1337 = vshrl.u32 %v1336, 5
  %v1338 = vand.u32 %v1336, 31
  %v1339 = vsub.s32 32, %v1338
  %v1340 = vshrl.u32 683565275, %v1339
  %v1341 = vshll.u32 683565275, %v1338
  %v1342 = vshrl.u32 2475754826, %v1339
  %v1343 = vor.u32 %v1341, %v1342
  %v1344 = vshll.u32 2475754826, %v1338
  %v1345 = vshrl.u32 2131351028, %v1339
  %v1346 = vor.u32 %v1344, %v1345
  %v1347 = vshll.u32 2131351028, %v1338
  %v1348 = vshrl.u32 2102212464, %v1339
  %v1349 = vor.u32 %v1347, %v1348
  %v1350 = vshll.u32 2102212464, %v1338
  %v1351 = vshrl.u32 920167782, %v1339
  %v1352 = vor.u32 %v1350, %v1351
  %v1353 = vshll.u32 920167782, %v1338
  %v1354 = vshrl.u32 1326507024, %v1339
  %v1355 = vor.u32 %v1353, %v1354
  %vm1356 = vcmp.lt.s32.totalorder %v1337, 1
  %vm1357 = vcmp.lt.s32.totalorder %v1337, 2
  %vm1358 = vcmp.lt.s32.totalorder %v1337, 3
  %vm1359 = vcmp.lt.s32.totalorder %v1337, 4
  %v1360 = vsel %vm1356, %v1340, %v1343
  %v1361 = vsel %vm1359, %v1349, 2102212464
  %v1362 = vsel %vm1358, %v1346, %v1361
  %v1363 = vsel %vm1357, %v1360, %v1362
  %v1364 = vsel %vm1356, %v1343, %v1346
  %v1365 = vsel %vm1359, %v1352, 920167782
  %v1366 = vsel %vm1358, %v1349, %v1365
  %v1367 = vsel %vm1357, %v1364, %v1366
  %v1368 = vsel %vm1356, %v1346, %v1349
  %v1369 = vsel %vm1359, %v1355, 1326507024
  %v1370 = vsel %vm1358, %v1352, %v1369
  %v1371 = vsel %vm1357, %v1368, %v1370
  %v1372 = vshll.u32 %v1332, 8
  %v1373 = vmul.u32.u64.compose %v1372, %v1371
  %v1374 = vextract.low.u32 %v1373
  %v1375 = vextract.high.u32 %v1373
  %v1376 = vmul.u32.u64.compose %v1372, %v1367
  %v1377 = vextract.low.u32 %v1376
  %v1378 = vextract.high.u32 %v1376
  %v1379 = vmul.u32 %v1372, %v1363
  %v1380 = vadd.s32 %v1375, %v1377
  %vm1381 = vc.u32 %v1375, %v1377
  %v1382 = vadd.s32 %v1378, 1
  %v1383 = vsel %vm1381, %v1382, %v1378
  %v1384 = vadd.s32 %v1379, %v1383
  %v1385 = vadd.s32 %v1384, 536870912
  %v1386 = vshrl.u32 %v1385, 30
  %v1387 = vshll.u32 %v1386, 30
  %v1388 = vsub.s32 %v1384, %v1387
  %vm1389 = vcmp.lt.s32.totalorder %v1388, 0
  %v1390 = vsub.s32 0, %v1388
  %v1391 = vsel %vm1389, %v1390, %v1388
  %v1392 = vclz %v1391
  %v1393 = vsub.s32 %v1392, 2
  %vm1394 = vcmp.gt.s32.totalorder 0, %v1393
  %v1395 = vsel %vm1394, 0, %v1393
  %v1396 = vsub.s32 32, %v1395
  %v1397 = vshll.u32 %v1388, %v1395
  %v1398 = vshrl.u32 %v1380, %v1396
  %v1399 = vor.u32 %v1397, %v1398
  %v1400 = vsub.s32 4294967266, %v1395
  %v1401 = vadd.s32 %v1400, 127
  %v1402 = vshll.u32 %v1401, 23
  %v1403 = vor.u32 4788187, %v1402
  %v1404 = vand.u32 2147483647, %v1403
  %v1406 = vcvt.s32.f32 %v1399
  %v1407 = vmul.f32 %v1406, %v1404
  %v1408 = vxor.u32 %v1407, 2147483648
  %v1409 = vsel %vm1326, %v1408, %v1407
  %v1410 = vsub.s32 4, %v1386
  %v1411 = vsel %vm1326, %v1410, %v1386
  %v1412 = vsel %vm1325, %v272, %v1409
  %v1413 = vsel %vm1325, 0, %v1411
  %v1414 = vcosq.f32.pop %v1412
  %v1415 = vsinq.f32.pop %v1412
  %vm1416 = vweird.f32 %v272
  %v1417 = vand.u32 %v1413, 3
  %vm1418 = vcmp.lt.s32.totalorder %v1417, 2
  %vm1419 = vcmp.eq.s32.totalorder %v1417, 0
  %v1420 = vxor.u32 %v1415, 2147483648
  %v1421 = vsel %vm1419, %v1414, %v1420
  %vm1422 = vcmp.eq.s32.totalorder %v1417, 2
  %v1423 = vxor.u32 %v1414, 2147483648
  %v1424 = vsel %vm1422, %v1423, %v1415
  %v1425 = vsel %vm1418, %v1421, %v1424
  %v1426 = vsel %vm1416, nan, %v1425
  %v1427 = vand.u32 2147483647, %v273
  %vm1428 = vcmp.le.f32.partialorder %v1427, 0.7853982
  %vm1429 = vcmp.lt.s32.totalorder %v273, 0
  %v1430 = vand.u32 %v273, 2139095040
  %v1431 = vshrl.u32 %v1430, 23
  %v1432 = vsub.s32 %v1431, 127
  %v1433 = vand.u32 2147483647, %v273
  %v1434 = vand.u32 %v1433, 8388607
  %v1435 = vor.u32 %v1434, 8388608
  %v1436 = vsub.s32 0, %v1435
  %v1437 = vadd.s32 %v1432, 1
  %vm1438 = vcmp.gt.s32.totalorder %v1437, 0
  %v1439 = vsel %vm1438, %v1437, 0
  %v1440 = vshrl.u32 %v1439, 5
  %v1441 = vand.u32 %v1439, 31
  %v1442 = vsub.s32 32, %v1441
  %v1443 = vshrl.u32 683565275, %v1442
  %v1444 = vshll.u32 683565275, %v1441
  %v1445 = vshrl.u32 2475754826, %v1442
  %v1446 = vor.u32 %v1444, %v1445
  %v1447 = vshll.u32 2475754826, %v1441
  %v1448 = vshrl.u32 2131351028, %v1442
  %v1449 = vor.u32 %v1447, %v1448
  %v1450 = vshll.u32 2131351028, %v1441
  %v1451 = vshrl.u32 2102212464, %v1442
  %v1452 = vor.u32 %v1450, %v1451
  %v1453 = vshll.u32 2102212464, %v1441
  %v1454 = vshrl.u32 920167782, %v1442
  %v1455 = vor.u32 %v1453, %v1454
  %v1456 = vshll.u32 920167782, %v1441
  %v1457 = vshrl.u32 1326507024, %v1442
  %v1458 = vor.u32 %v1456, %v1457
  %vm1459 = vcmp.lt.s32.totalorder %v1440, 1
  %vm1460 = vcmp.lt.s32.totalorder %v1440, 2
  %vm1461 = vcmp.lt.s32.totalorder %v1440, 3
  %vm1462 = vcmp.lt.s32.totalorder %v1440, 4
  %v1463 = vsel %vm1459, %v1443, %v1446
  %v1464 = vsel %vm1462, %v1452, 2102212464
  %v1465 = vsel %vm1461, %v1449, %v1464
  %v1466 = vsel %vm1460, %v1463, %v1465
  %v1467 = vsel %vm1459, %v1446, %v1449
  %v1468 = vsel %vm1462, %v1455, 920167782
  %v1469 = vsel %vm1461, %v1452, %v1468
  %v1470 = vsel %vm1460, %v1467, %v1469
  %v1471 = vsel %vm1459, %v1449, %v1452
  %v1472 = vsel %vm1462, %v1458, 1326507024
  %v1473 = vsel %vm1461, %v1455, %v1472
  %v1474 = vsel %vm1460, %v1471, %v1473
  %v1475 = vshll.u32 %v1435, 8
  %v1476 = vmul.u32.u64.compose %v1475, %v1474
  %v1477 = vextract.low.u32 %v1476
  %v1478 = vextract.high.u32 %v1476
  %v1479 = vmul.u32.u64.compose %v1475, %v1470
  %v1480 = vextract.low.u32 %v1479
  %v1481 = vextract.high.u32 %v1479
  %v1482 = vmul.u32 %v1475, %v1466
  %v1483 = vadd.s32 %v1478, %v1480
  %vm1484 = vc.u32 %v1478, %v1480
  %v1485 = vadd.s32 %v1481, 1
  %v1486 = vsel %vm1484, %v1485, %v1481
  %v1487 = vadd.s32 %v1482, %v1486
  %v1488 = vadd.s32 %v1487, 536870912
  %v1489 = vshrl.u32 %v1488, 30
  %v1490 = vshll.u32 %v1489, 30
  %v1491 = vsub.s32 %v1487, %v1490
  %vm1492 = vcmp.lt.s32.totalorder %v1491, 0
  %v1493 = vsub.s32 0, %v1491
  %v1494 = vsel %vm1492, %v1493, %v1491
  %v1495 = vclz %v1494
  %v1496 = vsub.s32 %v1495, 2
  %vm1497 = vcmp.gt.s32.totalorder 0, %v1496
  %v1498 = vsel %vm1497, 0, %v1496
  %v1499 = vsub.s32 32, %v1498
  %v1500 = vshll.u32 %v1491, %v1498
  %v1501 = vshrl.u32 %v1483, %v1499
  %v1502 = vor.u32 %v1500, %v1501
  %v1503 = vsub.s32 4294967266, %v1498
  %v1504 = vadd.s32 %v1503, 127
  %v1505 = vshll.u32 %v1504, 23
  %v1506 = vor.u32 4788187, %v1505
  %v1507 = vand.u32 2147483647, %v1506
  %v1509 = vcvt.s32.f32 %v1502
  %v1510 = vmul.f32 %v1509, %v1507
  %v1511 = vxor.u32 %v1510, 2147483648
  %v1512 = vsel %vm1429, %v1511, %v1510
  %v1513 = vsub.s32 4, %v1489
  %v1514 = vsel %vm1429, %v1513, %v1489
  %v1515 = vsel %vm1428, %v273, %v1512
  %v1516 = vsel %vm1428, 0, %v1514
  %v1517 = vcosq.f32.pop %v1515
  %v1518 = vsinq.f32.pop %v1515
  %vm1519 = vweird.f32 %v273
  %v1520 = vand.u32 %v1516, 3
  %vm1521 = vcmp.lt.s32.totalorder %v1520, 2
  %vm1522 = vcmp.eq.s32.totalorder %v1520, 0
  %v1523 = vxor.u32 %v1518, 2147483648
  %v1524 = vsel %vm1522, %v1517, %v1523
  %vm1525 = vcmp.eq.s32.totalorder %v1520, 2
  %v1526 = vxor.u32 %v1517, 2147483648
  %v1527 = vsel %vm1525, %v1526, %v1518
  %v1528 = vsel %vm1521, %v1524, %v1527
  %v1529 = vsel %vm1519, nan, %v1528
  %v1530 = vand.u32 2147483647, %v274
  %vm1531 = vcmp.le.f32.partialorder %v1530, 0.7853982
  %vm1532 = vcmp.lt.s32.totalorder %v274, 0
  %v1533 = vand.u32 %v274, 2139095040
  %v1534 = vshrl.u32 %v1533, 23
  %v1535 = vsub.s32 %v1534, 127
  %v1536 = vand.u32 2147483647, %v274
  %v1537 = vand.u32 %v1536, 8388607
  %v1538 = vor.u32 %v1537, 8388608
  %v1539 = vsub.s32 0, %v1538
  %v1540 = vadd.s32 %v1535, 1
  %vm1541 = vcmp.gt.s32.totalorder %v1540, 0
  %v1542 = vsel %vm1541, %v1540, 0
  %v1543 = vshrl.u32 %v1542, 5
  %v1544 = vand.u32 %v1542, 31
  %v1545 = vsub.s32 32, %v1544
  %v1546 = vshrl.u32 683565275, %v1545
  %v1547 = vshll.u32 683565275, %v1544
  %v1548 = vshrl.u32 2475754826, %v1545
  %v1549 = vor.u32 %v1547, %v1548
  %v1550 = vshll.u32 2475754826, %v1544
  %v1551 = vshrl.u32 2131351028, %v1545
  %v1552 = vor.u32 %v1550, %v1551
  %v1553 = vshll.u32 2131351028, %v1544
  %v1554 = vshrl.u32 2102212464, %v1545
  %v1555 = vor.u32 %v1553, %v1554
  %v1556 = vshll.u32 2102212464, %v1544
  %v1557 = vshrl.u32 920167782, %v1545
  %v1558 = vor.u32 %v1556, %v1557
  %v1559 = vshll.u32 920167782, %v1544
  %v1560 = vshrl.u32 1326507024, %v1545
  %v1561 = vor.u32 %v1559, %v1560
  %vm1562 = vcmp.lt.s32.totalorder %v1543, 1
  %vm1563 = vcmp.lt.s32.totalorder %v1543, 2
  %vm1564 = vcmp.lt.s32.totalorder %v1543, 3
  %vm1565 = vcmp.lt.s32.totalorder %v1543, 4
  %v1566 = vsel %vm1562, %v1546, %v1549
  %v1567 = vsel %vm1565, %v1555, 2102212464
  %v1568 = vsel %vm1564, %v1552, %v1567
  %v1569 = vsel %vm1563, %v1566, %v1568
  %v1570 = vsel %vm1562, %v1549, %v1552
  %v1571 = vsel %vm1565, %v1558, 920167782
  %v1572 = vsel %vm1564, %v1555, %v1571
  %v1573 = vsel %vm1563, %v1570, %v1572
  %v1574 = vsel %vm1562, %v1552, %v1555
  %v1575 = vsel %vm1565, %v1561, 1326507024
  %v1576 = vsel %vm1564, %v1558, %v1575
  %v1577 = vsel %vm1563, %v1574, %v1576
  %v1578 = vshll.u32 %v1538, 8
  %v1579 = vmul.u32.u64.compose %v1578, %v1577
  %v1580 = vextract.low.u32 %v1579
  %v1581 = vextract.high.u32 %v1579
  %v1582 = vmul.u32.u64.compose %v1578, %v1573
  %v1583 = vextract.low.u32 %v1582
  %v1584 = vextract.high.u32 %v1582
  %v1585 = vmul.u32 %v1578, %v1569
  %v1586 = vadd.s32 %v1581, %v1583
  %vm1587 = vc.u32 %v1581, %v1583
  %v1588 = vadd.s32 %v1584, 1
  %v1589 = vsel %vm1587, %v1588, %v1584
  %v1590 = vadd.s32 %v1585, %v1589
  %v1591 = vadd.s32 %v1590, 536870912
  %v1592 = vshrl.u32 %v1591, 30
  %v1593 = vshll.u32 %v1592, 30
  %v1594 = vsub.s32 %v1590, %v1593
  %vm1595 = vcmp.lt.s32.totalorder %v1594, 0
  %v1596 = vsub.s32 0, %v1594
  %v1597 = vsel %vm1595, %v1596, %v1594
  %v1598 = vclz %v1597
  %v1599 = vsub.s32 %v1598, 2
  %vm1600 = vcmp.gt.s32.totalorder 0, %v1599
  %v1601 = vsel %vm1600, 0, %v1599
  %v1602 = vsub.s32 32, %v1601
  %v1603 = vshll.u32 %v1594, %v1601
  %v1604 = vshrl.u32 %v1586, %v1602
  %v1605 = vor.u32 %v1603, %v1604
  %v1606 = vsub.s32 4294967266, %v1601
  %v1607 = vadd.s32 %v1606, 127
  %v1608 = vshll.u32 %v1607, 23
  %v1609 = vor.u32 4788187, %v1608
  %v1610 = vand.u32 2147483647, %v1609
  %v1612 = vcvt.s32.f32 %v1605
  %v1613 = vmul.f32 %v1612, %v1610
  %v1614 = vxor.u32 %v1613, 2147483648
  %v1615 = vsel %vm1532, %v1614, %v1613
  %v1616 = vsub.s32 4, %v1592
  %v1617 = vsel %vm1532, %v1616, %v1592
  %v1618 = vsel %vm1531, %v274, %v1615
  %v1619 = vsel %vm1531, 0, %v1617
  %v1620 = vcosq.f32.pop %v1618
  %v1621 = vsinq.f32.pop %v1618
  %vm1622 = vweird.f32 %v274
  %v1623 = vand.u32 %v1619, 3
  %vm1624 = vcmp.lt.s32.totalorder %v1623, 2
  %vm1625 = vcmp.eq.s32.totalorder %v1623, 0
  %v1626 = vxor.u32 %v1621, 2147483648
  %v1627 = vsel %vm1625, %v1620, %v1626
  %vm1628 = vcmp.eq.s32.totalorder %v1623, 2
  %v1629 = vxor.u32 %v1620, 2147483648
  %v1630 = vsel %vm1628, %v1629, %v1621
  %v1631 = vsel %vm1624, %v1627, %v1630
  %v1632 = vsel %vm1622, nan, %v1631
  %v1633 = vand.u32 2147483647, %v275
  %vm1634 = vcmp.le.f32.partialorder %v1633, 0.7853982
  %vm1635 = vcmp.lt.s32.totalorder %v275, 0
  %v1636 = vand.u32 %v275, 2139095040
  %v1637 = vshrl.u32 %v1636, 23
  %v1638 = vsub.s32 %v1637, 127
  %v1639 = vand.u32 2147483647, %v275
  %v1640 = vand.u32 %v1639, 8388607
  %v1641 = vor.u32 %v1640, 8388608
  %v1642 = vsub.s32 0, %v1641
  %v1643 = vadd.s32 %v1638, 1
  %vm1644 = vcmp.gt.s32.totalorder %v1643, 0
  %v1645 = vsel %vm1644, %v1643, 0
  %v1646 = vshrl.u32 %v1645, 5
  %v1647 = vand.u32 %v1645, 31
  %v1648 = vsub.s32 32, %v1647
  %v1649 = vshrl.u32 683565275, %v1648
  %v1650 = vshll.u32 683565275, %v1647
  %v1651 = vshrl.u32 2475754826, %v1648
  %v1652 = vor.u32 %v1650, %v1651
  %v1653 = vshll.u32 2475754826, %v1647
  %v1654 = vshrl.u32 2131351028, %v1648
  %v1655 = vor.u32 %v1653, %v1654
  %v1656 = vshll.u32 2131351028, %v1647
  %v1657 = vshrl.u32 2102212464, %v1648
  %v1658 = vor.u32 %v1656, %v1657
  %v1659 = vshll.u32 2102212464, %v1647
  %v1660 = vshrl.u32 920167782, %v1648
  %v1661 = vor.u32 %v1659, %v1660
  %v1662 = vshll.u32 920167782, %v1647
  %v1663 = vshrl.u32 1326507024, %v1648
  %v1664 = vor.u32 %v1662, %v1663
  %vm1665 = vcmp.lt.s32.totalorder %v1646, 1
  %vm1666 = vcmp.lt.s32.totalorder %v1646, 2
  %vm1667 = vcmp.lt.s32.totalorder %v1646, 3
  %vm1668 = vcmp.lt.s32.totalorder %v1646, 4
  %v1669 = vsel %vm1665, %v1649, %v1652
  %v1670 = vsel %vm1668, %v1658, 2102212464
  %v1671 = vsel %vm1667, %v1655, %v1670
  %v1672 = vsel %vm1666, %v1669, %v1671
  %v1673 = vsel %vm1665, %v1652, %v1655
  %v1674 = vsel %vm1668, %v1661, 920167782
  %v1675 = vsel %vm1667, %v1658, %v1674
  %v1676 = vsel %vm1666, %v1673, %v1675
  %v1677 = vsel %vm1665, %v1655, %v1658
  %v1678 = vsel %vm1668, %v1664, 1326507024
  %v1679 = vsel %vm1667, %v1661, %v1678
  %v1680 = vsel %vm1666, %v1677, %v1679
  %v1681 = vshll.u32 %v1641, 8
  %v1682 = vmul.u32.u64.compose %v1681, %v1680
  %v1683 = vextract.low.u32 %v1682
  %v1684 = vextract.high.u32 %v1682
  %v1685 = vmul.u32.u64.compose %v1681, %v1676
  %v1686 = vextract.low.u32 %v1685
  %v1687 = vextract.high.u32 %v1685
  %v1688 = vmul.u32 %v1681, %v1672
  %v1689 = vadd.s32 %v1684, %v1686
  %vm1690 = vc.u32 %v1684, %v1686
  %v1691 = vadd.s32 %v1687, 1
  %v1692 = vsel %vm1690, %v1691, %v1687
  %v1693 = vadd.s32 %v1688, %v1692
  %v1694 = vadd.s32 %v1693, 536870912
  %v1695 = vshrl.u32 %v1694, 30
  %v1696 = vshll.u32 %v1695, 30
  %v1697 = vsub.s32 %v1693, %v1696
  %vm1698 = vcmp.lt.s32.totalorder %v1697, 0
  %v1699 = vsub.s32 0, %v1697
  %v1700 = vsel %vm1698, %v1699, %v1697
  %v1701 = vclz %v1700
  %v1702 = vsub.s32 %v1701, 2
  %vm1703 = vcmp.gt.s32.totalorder 0, %v1702
  %v1704 = vsel %vm1703, 0, %v1702
  %v1705 = vsub.s32 32, %v1704
  %v1706 = vshll.u32 %v1697, %v1704
  %v1707 = vshrl.u32 %v1689, %v1705
  %v1708 = vor.u32 %v1706, %v1707
  %v1709 = vsub.s32 4294967266, %v1704
  %v1710 = vadd.s32 %v1709, 127
  %v1711 = vshll.u32 %v1710, 23
  %v1712 = vor.u32 4788187, %v1711
  %v1713 = vand.u32 2147483647, %v1712
  %v1715 = vcvt.s32.f32 %v1708
  %v1716 = vmul.f32 %v1715, %v1713
  %v1717 = vxor.u32 %v1716, 2147483648
  %v1718 = vsel %vm1635, %v1717, %v1716
  %v1719 = vsub.s32 4, %v1695
  %v1720 = vsel %vm1635, %v1719, %v1695
  %v1721 = vsel %vm1634, %v275, %v1718
  %v1722 = vsel %vm1634, 0, %v1720
  %v1723 = vcosq.f32.pop %v1721
  %v1724 = vsinq.f32.pop %v1721
  %vm1725 = vweird.f32 %v275
  %v1726 = vand.u32 %v1722, 3
  %vm1727 = vcmp.lt.s32.totalorder %v1726, 2
  %vm1728 = vcmp.eq.s32.totalorder %v1726, 0
  %v1729 = vxor.u32 %v1724, 2147483648
  %v1730 = vsel %vm1728, %v1723, %v1729
  %vm1731 = vcmp.eq.s32.totalorder %v1726, 2
  %v1732 = vxor.u32 %v1723, 2147483648
  %v1733 = vsel %vm1731, %v1732, %v1724
  %v1734 = vsel %vm1727, %v1730, %v1733
  %v1735 = vsel %vm1725, nan, %v1734
  %v1736 = vand.u32 2147483647, %v276
  %vm1737 = vcmp.le.f32.partialorder %v1736, 0.7853982
  %vm1738 = vcmp.lt.s32.totalorder %v276, 0
  %v1739 = vand.u32 %v276, 2139095040
  %v1740 = vshrl.u32 %v1739, 23
  %v1741 = vsub.s32 %v1740, 127
  %v1742 = vand.u32 2147483647, %v276
  %v1743 = vand.u32 %v1742, 8388607
  %v1744 = vor.u32 %v1743, 8388608
  %v1745 = vsub.s32 0, %v1744
  %v1746 = vadd.s32 %v1741, 1
  %vm1747 = vcmp.gt.s32.totalorder %v1746, 0
  %v1748 = vsel %vm1747, %v1746, 0
  %v1749 = vshrl.u32 %v1748, 5
  %v1750 = vand.u32 %v1748, 31
  %v1751 = vsub.s32 32, %v1750
  %v1752 = vshrl.u32 683565275, %v1751
  %v1753 = vshll.u32 683565275, %v1750
  %v1754 = vshrl.u32 2475754826, %v1751
  %v1755 = vor.u32 %v1753, %v1754
  %v1756 = vshll.u32 2475754826, %v1750
  %v1757 = vshrl.u32 2131351028, %v1751
  %v1758 = vor.u32 %v1756, %v1757
  %v1759 = vshll.u32 2131351028, %v1750
  %v1760 = vshrl.u32 2102212464, %v1751
  %v1761 = vor.u32 %v1759, %v1760
  %v1762 = vshll.u32 2102212464, %v1750
  %v1763 = vshrl.u32 920167782, %v1751
  %v1764 = vor.u32 %v1762, %v1763
  %v1765 = vshll.u32 920167782, %v1750
  %v1766 = vshrl.u32 1326507024, %v1751
  %v1767 = vor.u32 %v1765, %v1766
  %vm1768 = vcmp.lt.s32.totalorder %v1749, 1
  %vm1769 = vcmp.lt.s32.totalorder %v1749, 2
  %vm1770 = vcmp.lt.s32.totalorder %v1749, 3
  %vm1771 = vcmp.lt.s32.totalorder %v1749, 4
  %v1772 = vsel %vm1768, %v1752, %v1755
  %v1773 = vsel %vm1771, %v1761, 2102212464
  %v1774 = vsel %vm1770, %v1758, %v1773
  %v1775 = vsel %vm1769, %v1772, %v1774
  %v1776 = vsel %vm1768, %v1755, %v1758
  %v1777 = vsel %vm1771, %v1764, 920167782
  %v1778 = vsel %vm1770, %v1761, %v1777
  %v1779 = vsel %vm1769, %v1776, %v1778
  %v1780 = vsel %vm1768, %v1758, %v1761
  %v1781 = vsel %vm1771, %v1767, 1326507024
  %v1782 = vsel %vm1770, %v1764, %v1781
  %v1783 = vsel %vm1769, %v1780, %v1782
  %v1784 = vshll.u32 %v1744, 8
  %v1785 = vmul.u32.u64.compose %v1784, %v1783
  %v1786 = vextract.low.u32 %v1785
  %v1787 = vextract.high.u32 %v1785
  %v1788 = vmul.u32.u64.compose %v1784, %v1779
  %v1789 = vextract.low.u32 %v1788
  %v1790 = vextract.high.u32 %v1788
  %v1791 = vmul.u32 %v1784, %v1775
  %v1792 = vadd.s32 %v1787, %v1789
  %vm1793 = vc.u32 %v1787, %v1789
  %v1794 = vadd.s32 %v1790, 1
  %v1795 = vsel %vm1793, %v1794, %v1790
  %v1796 = vadd.s32 %v1791, %v1795
  %v1797 = vadd.s32 %v1796, 536870912
  %v1798 = vshrl.u32 %v1797, 30
  %v1799 = vshll.u32 %v1798, 30
  %v1800 = vsub.s32 %v1796, %v1799
  %vm1801 = vcmp.lt.s32.totalorder %v1800, 0
  %v1802 = vsub.s32 0, %v1800
  %v1803 = vsel %vm1801, %v1802, %v1800
  %v1804 = vclz %v1803
  %v1805 = vsub.s32 %v1804, 2
  %vm1806 = vcmp.gt.s32.totalorder 0, %v1805
  %v1807 = vsel %vm1806, 0, %v1805
  %v1808 = vsub.s32 32, %v1807
  %v1809 = vshll.u32 %v1800, %v1807
  %v1810 = vshrl.u32 %v1792, %v1808
  %v1811 = vor.u32 %v1809, %v1810
  %v1812 = vsub.s32 4294967266, %v1807
  %v1813 = vadd.s32 %v1812, 127
  %v1814 = vshll.u32 %v1813, 23
  %v1815 = vor.u32 4788187, %v1814
  %v1816 = vand.u32 2147483647, %v1815
  %v1818 = vcvt.s32.f32 %v1811
  %v1819 = vmul.f32 %v1818, %v1816
  %v1820 = vxor.u32 %v1819, 2147483648
  %v1821 = vsel %vm1738, %v1820, %v1819
  %v1822 = vsub.s32 4, %v1798
  %v1823 = vsel %vm1738, %v1822, %v1798
  %v1824 = vsel %vm1737, %v276, %v1821
  %v1825 = vsel %vm1737, 0, %v1823
  %v1826 = vcosq.f32.pop %v1824
  %v1827 = vsinq.f32.pop %v1824
  %vm1828 = vweird.f32 %v276
  %v1829 = vand.u32 %v1825, 3
  %vm1830 = vcmp.lt.s32.totalorder %v1829, 2
  %vm1831 = vcmp.eq.s32.totalorder %v1829, 0
  %v1832 = vxor.u32 %v1827, 2147483648
  %v1833 = vsel %vm1831, %v1826, %v1832
  %vm1834 = vcmp.eq.s32.totalorder %v1829, 2
  %v1835 = vxor.u32 %v1826, 2147483648
  %v1836 = vsel %vm1834, %v1835, %v1827
  %v1837 = vsel %vm1830, %v1833, %v1836
  %v1838 = vsel %vm1828, nan, %v1837
  %v1839 = vand.u32 2147483647, %v277
  %vm1840 = vcmp.le.f32.partialorder %v1839, 0.7853982
  %vm1841 = vcmp.lt.s32.totalorder %v277, 0
  %v1842 = vand.u32 %v277, 2139095040
  %v1843 = vshrl.u32 %v1842, 23
  %v1844 = vsub.s32 %v1843, 127
  %v1845 = vand.u32 2147483647, %v277
  %v1846 = vand.u32 %v1845, 8388607
  %v1847 = vor.u32 %v1846, 8388608
  %v1848 = vsub.s32 0, %v1847
  %v1849 = vadd.s32 %v1844, 1
  %vm1850 = vcmp.gt.s32.totalorder %v1849, 0
  %v1851 = vsel %vm1850, %v1849, 0
  %v1852 = vshrl.u32 %v1851, 5
  %v1853 = vand.u32 %v1851, 31
  %v1854 = vsub.s32 32, %v1853
  %v1855 = vshrl.u32 683565275, %v1854
  %v1856 = vshll.u32 683565275, %v1853
  %v1857 = vshrl.u32 2475754826, %v1854
  %v1858 = vor.u32 %v1856, %v1857
  %v1859 = vshll.u32 2475754826, %v1853
  %v1860 = vshrl.u32 2131351028, %v1854
  %v1861 = vor.u32 %v1859, %v1860
  %v1862 = vshll.u32 2131351028, %v1853
  %v1863 = vshrl.u32 2102212464, %v1854
  %v1864 = vor.u32 %v1862, %v1863
  %v1865 = vshll.u32 2102212464, %v1853
  %v1866 = vshrl.u32 920167782, %v1854
  %v1867 = vor.u32 %v1865, %v1866
  %v1868 = vshll.u32 920167782, %v1853
  %v1869 = vshrl.u32 1326507024, %v1854
  %v1870 = vor.u32 %v1868, %v1869
  %vm1871 = vcmp.lt.s32.totalorder %v1852, 1
  %vm1872 = vcmp.lt.s32.totalorder %v1852, 2
  %vm1873 = vcmp.lt.s32.totalorder %v1852, 3
  %vm1874 = vcmp.lt.s32.totalorder %v1852, 4
  %v1875 = vsel %vm1871, %v1855, %v1858
  %v1876 = vsel %vm1874, %v1864, 2102212464
  %v1877 = vsel %vm1873, %v1861, %v1876
  %v1878 = vsel %vm1872, %v1875, %v1877
  %v1879 = vsel %vm1871, %v1858, %v1861
  %v1880 = vsel %vm1874, %v1867, 920167782
  %v1881 = vsel %vm1873, %v1864, %v1880
  %v1882 = vsel %vm1872, %v1879, %v1881
  %v1883 = vsel %vm1871, %v1861, %v1864
  %v1884 = vsel %vm1874, %v1870, 1326507024
  %v1885 = vsel %vm1873, %v1867, %v1884
  %v1886 = vsel %vm1872, %v1883, %v1885
  %v1887 = vshll.u32 %v1847, 8
  %v1888 = vmul.u32.u64.compose %v1887, %v1886
  %v1889 = vextract.low.u32 %v1888
  %v1890 = vextract.high.u32 %v1888
  %v1891 = vmul.u32.u64.compose %v1887, %v1882
  %v1892 = vextract.low.u32 %v1891
  %v1893 = vextract.high.u32 %v1891
  %v1894 = vmul.u32 %v1887, %v1878
  %v1895 = vadd.s32 %v1890, %v1892
  %vm1896 = vc.u32 %v1890, %v1892
  %v1897 = vadd.s32 %v1893, 1
  %v1898 = vsel %vm1896, %v1897, %v1893
  %v1899 = vadd.s32 %v1894, %v1898
  %v1900 = vadd.s32 %v1899, 536870912
  %v1901 = vshrl.u32 %v1900, 30
  %v1902 = vshll.u32 %v1901, 30
  %v1903 = vsub.s32 %v1899, %v1902
  %vm1904 = vcmp.lt.s32.totalorder %v1903, 0
  %v1905 = vsub.s32 0, %v1903
  %v1906 = vsel %vm1904, %v1905, %v1903
  %v1907 = vclz %v1906
  %v1908 = vsub.s32 %v1907, 2
  %vm1909 = vcmp.gt.s32.totalorder 0, %v1908
  %v1910 = vsel %vm1909, 0, %v1908
  %v1911 = vsub.s32 32, %v1910
  %v1912 = vshll.u32 %v1903, %v1910
  %v1913 = vshrl.u32 %v1895, %v1911
  %v1914 = vor.u32 %v1912, %v1913
  %v1915 = vsub.s32 4294967266, %v1910
  %v1916 = vadd.s32 %v1915, 127
  %v1917 = vshll.u32 %v1916, 23
  %v1918 = vor.u32 4788187, %v1917
  %v1919 = vand.u32 2147483647, %v1918
  %v1921 = vcvt.s32.f32 %v1914
  %v1922 = vmul.f32 %v1921, %v1919
  %v1923 = vxor.u32 %v1922, 2147483648
  %v1924 = vsel %vm1841, %v1923, %v1922
  %v1925 = vsub.s32 4, %v1901
  %v1926 = vsel %vm1841, %v1925, %v1901
  %v1927 = vsel %vm1840, %v277, %v1924
  %v1928 = vsel %vm1840, 0, %v1926
  %v1929 = vcosq.f32.pop %v1927
  %v1930 = vsinq.f32.pop %v1927
  %vm1931 = vweird.f32 %v277
  %v1932 = vand.u32 %v1928, 3
  %vm1933 = vcmp.lt.s32.totalorder %v1932, 2
  %vm1934 = vcmp.eq.s32.totalorder %v1932, 0
  %v1935 = vxor.u32 %v1930, 2147483648
  %v1936 = vsel %vm1934, %v1929, %v1935
  %vm1937 = vcmp.eq.s32.totalorder %v1932, 2
  %v1938 = vxor.u32 %v1929, 2147483648
  %v1939 = vsel %vm1937, %v1938, %v1930
  %v1940 = vsel %vm1933, %v1936, %v1939
  %v1941 = vsel %vm1931, nan, %v1940
  %v1942 = vand.u32 2147483647, %v278
  %vm1943 = vcmp.le.f32.partialorder %v1942, 0.7853982
  %vm1944 = vcmp.lt.s32.totalorder %v278, 0
  %v1945 = vand.u32 %v278, 2139095040
  %v1946 = vshrl.u32 %v1945, 23
  %v1947 = vsub.s32 %v1946, 127
  %v1948 = vand.u32 2147483647, %v278
  %v1949 = vand.u32 %v1948, 8388607
  %v1950 = vor.u32 %v1949, 8388608
  %v1951 = vsub.s32 0, %v1950
  %v1952 = vadd.s32 %v1947, 1
  %vm1953 = vcmp.gt.s32.totalorder %v1952, 0
  %v1954 = vsel %vm1953, %v1952, 0
  %v1955 = vshrl.u32 %v1954, 5
  %v1956 = vand.u32 %v1954, 31
  %v1957 = vsub.s32 32, %v1956
  %v1958 = vshrl.u32 683565275, %v1957
  %v1959 = vshll.u32 683565275, %v1956
  %v1960 = vshrl.u32 2475754826, %v1957
  %v1961 = vor.u32 %v1959, %v1960
  %v1962 = vshll.u32 2475754826, %v1956
  %v1963 = vshrl.u32 2131351028, %v1957
  %v1964 = vor.u32 %v1962, %v1963
  %v1965 = vshll.u32 2131351028, %v1956
  %v1966 = vshrl.u32 2102212464, %v1957
  %v1967 = vor.u32 %v1965, %v1966
  %v1968 = vshll.u32 2102212464, %v1956
  %v1969 = vshrl.u32 920167782, %v1957
  %v1970 = vor.u32 %v1968, %v1969
  %v1971 = vshll.u32 920167782, %v1956
  %v1972 = vshrl.u32 1326507024, %v1957
  %v1973 = vor.u32 %v1971, %v1972
  %vm1974 = vcmp.lt.s32.totalorder %v1955, 1
  %vm1975 = vcmp.lt.s32.totalorder %v1955, 2
  %vm1976 = vcmp.lt.s32.totalorder %v1955, 3
  %vm1977 = vcmp.lt.s32.totalorder %v1955, 4
  %v1978 = vsel %vm1974, %v1958, %v1961
  %v1979 = vsel %vm1977, %v1967, 2102212464
  %v1980 = vsel %vm1976, %v1964, %v1979
  %v1981 = vsel %vm1975, %v1978, %v1980
  %v1982 = vsel %vm1974, %v1961, %v1964
  %v1983 = vsel %vm1977, %v1970, 920167782
  %v1984 = vsel %vm1976, %v1967, %v1983
  %v1985 = vsel %vm1975, %v1982, %v1984
  %v1986 = vsel %vm1974, %v1964, %v1967
  %v1987 = vsel %vm1977, %v1973, 1326507024
  %v1988 = vsel %vm1976, %v1970, %v1987
  %v1989 = vsel %vm1975, %v1986, %v1988
  %v1990 = vshll.u32 %v1950, 8
  %v1991 = vmul.u32.u64.compose %v1990, %v1989
  %v1992 = vextract.low.u32 %v1991
  %v1993 = vextract.high.u32 %v1991
  %v1994 = vmul.u32.u64.compose %v1990, %v1985
  %v1995 = vextract.low.u32 %v1994
  %v1996 = vextract.high.u32 %v1994
  %v1997 = vmul.u32 %v1990, %v1981
  %v1998 = vadd.s32 %v1993, %v1995
  %vm1999 = vc.u32 %v1993, %v1995
  %v2000 = vadd.s32 %v1996, 1
  %v2001 = vsel %vm1999, %v2000, %v1996
  %v2002 = vadd.s32 %v1997, %v2001
  %v2003 = vadd.s32 %v2002, 536870912
  %v2004 = vshrl.u32 %v2003, 30
  %v2005 = vshll.u32 %v2004, 30
  %v2006 = vsub.s32 %v2002, %v2005
  %vm2007 = vcmp.lt.s32.totalorder %v2006, 0
  %v2008 = vsub.s32 0, %v2006
  %v2009 = vsel %vm2007, %v2008, %v2006
  %v2010 = vclz %v2009
  %v2011 = vsub.s32 %v2010, 2
  %vm2012 = vcmp.gt.s32.totalorder 0, %v2011
  %v2013 = vsel %vm2012, 0, %v2011
  %v2014 = vsub.s32 32, %v2013
  %v2015 = vshll.u32 %v2006, %v2013
  %v2016 = vshrl.u32 %v1998, %v2014
  %v2017 = vor.u32 %v2015, %v2016
  %v2018 = vsub.s32 4294967266, %v2013
  %v2019 = vadd.s32 %v2018, 127
  %v2020 = vshll.u32 %v2019, 23
  %v2021 = vor.u32 4788187, %v2020
  %v2022 = vand.u32 2147483647, %v2021
  %v2024 = vcvt.s32.f32 %v2017
  %v2025 = vmul.f32 %v2024, %v2022
  %v2026 = vxor.u32 %v2025, 2147483648
  %v2027 = vsel %vm1944, %v2026, %v2025
  %v2028 = vsub.s32 4, %v2004
  %v2029 = vsel %vm1944, %v2028, %v2004
  %v2030 = vsel %vm1943, %v278, %v2027
  %v2031 = vsel %vm1943, 0, %v2029
  %v2032 = vcosq.f32.pop %v2030
  %v2033 = vsinq.f32.pop %v2030
  %vm2034 = vweird.f32 %v278
  %v2035 = vand.u32 %v2031, 3
  %vm2036 = vcmp.lt.s32.totalorder %v2035, 2
  %vm2037 = vcmp.eq.s32.totalorder %v2035, 0
  %v2038 = vxor.u32 %v2033, 2147483648
  %v2039 = vsel %vm2037, %v2032, %v2038
  %vm2040 = vcmp.eq.s32.totalorder %v2035, 2
  %v2041 = vxor.u32 %v2032, 2147483648
  %v2042 = vsel %vm2040, %v2041, %v2033
  %v2043 = vsel %vm2036, %v2039, %v2042
  %v2044 = vsel %vm2034, nan, %v2043
  %v2045 = vand.u32 2147483647, %v279
  %vm2046 = vcmp.le.f32.partialorder %v2045, 0.7853982
  %vm2047 = vcmp.lt.s32.totalorder %v279, 0
  %v2048 = vand.u32 %v279, 2139095040
  %v2049 = vshrl.u32 %v2048, 23
  %v2050 = vsub.s32 %v2049, 127
  %v2051 = vand.u32 2147483647, %v279
  %v2052 = vand.u32 %v2051, 8388607
  %v2053 = vor.u32 %v2052, 8388608
  %v2054 = vsub.s32 0, %v2053
  %v2055 = vadd.s32 %v2050, 1
  %vm2056 = vcmp.gt.s32.totalorder %v2055, 0
  %v2057 = vsel %vm2056, %v2055, 0
  %v2058 = vshrl.u32 %v2057, 5
  %v2059 = vand.u32 %v2057, 31
  %v2060 = vsub.s32 32, %v2059
  %v2061 = vshrl.u32 683565275, %v2060
  %v2062 = vshll.u32 683565275, %v2059
  %v2063 = vshrl.u32 2475754826, %v2060
  %v2064 = vor.u32 %v2062, %v2063
  %v2065 = vshll.u32 2475754826, %v2059
  %v2066 = vshrl.u32 2131351028, %v2060
  %v2067 = vor.u32 %v2065, %v2066
  %v2068 = vshll.u32 2131351028, %v2059
  %v2069 = vshrl.u32 2102212464, %v2060
  %v2070 = vor.u32 %v2068, %v2069
  %v2071 = vshll.u32 2102212464, %v2059
  %v2072 = vshrl.u32 920167782, %v2060
  %v2073 = vor.u32 %v2071, %v2072
  %v2074 = vshll.u32 920167782, %v2059
  %v2075 = vshrl.u32 1326507024, %v2060
  %v2076 = vor.u32 %v2074, %v2075
  %vm2077 = vcmp.lt.s32.totalorder %v2058, 1
  %vm2078 = vcmp.lt.s32.totalorder %v2058, 2
  %vm2079 = vcmp.lt.s32.totalorder %v2058, 3
  %vm2080 = vcmp.lt.s32.totalorder %v2058, 4
  %v2081 = vsel %vm2077, %v2061, %v2064
  %v2082 = vsel %vm2080, %v2070, 2102212464
  %v2083 = vsel %vm2079, %v2067, %v2082
  %v2084 = vsel %vm2078, %v2081, %v2083
  %v2085 = vsel %vm2077, %v2064, %v2067
  %v2086 = vsel %vm2080, %v2073, 920167782
  %v2087 = vsel %vm2079, %v2070, %v2086
  %v2088 = vsel %vm2078, %v2085, %v2087
  %v2089 = vsel %vm2077, %v2067, %v2070
  %v2090 = vsel %vm2080, %v2076, 1326507024
  %v2091 = vsel %vm2079, %v2073, %v2090
  %v2092 = vsel %vm2078, %v2089, %v2091
  %v2093 = vshll.u32 %v2053, 8
  %v2094 = vmul.u32.u64.compose %v2093, %v2092
  %v2095 = vextract.low.u32 %v2094
  %v2096 = vextract.high.u32 %v2094
  %v2097 = vmul.u32.u64.compose %v2093, %v2088
  %v2098 = vextract.low.u32 %v2097
  %v2099 = vextract.high.u32 %v2097
  %v2100 = vmul.u32 %v2093, %v2084
  %v2101 = vadd.s32 %v2096, %v2098
  %vm2102 = vc.u32 %v2096, %v2098
  %v2103 = vadd.s32 %v2099, 1
  %v2104 = vsel %vm2102, %v2103, %v2099
  %v2105 = vadd.s32 %v2100, %v2104
  %v2106 = vadd.s32 %v2105, 536870912
  %v2107 = vshrl.u32 %v2106, 30
  %v2108 = vshll.u32 %v2107, 30
  %v2109 = vsub.s32 %v2105, %v2108
  %vm2110 = vcmp.lt.s32.totalorder %v2109, 0
  %v2111 = vsub.s32 0, %v2109
  %v2112 = vsel %vm2110, %v2111, %v2109
  %v2113 = vclz %v2112
  %v2114 = vsub.s32 %v2113, 2
  %vm2115 = vcmp.gt.s32.totalorder 0, %v2114
  %v2116 = vsel %vm2115, 0, %v2114
  %v2117 = vsub.s32 32, %v2116
  %v2118 = vshll.u32 %v2109, %v2116
  %v2119 = vshrl.u32 %v2101, %v2117
  %v2120 = vor.u32 %v2118, %v2119
  %v2121 = vsub.s32 4294967266, %v2116
  %v2122 = vadd.s32 %v2121, 127
  %v2123 = vshll.u32 %v2122, 23
  %v2124 = vor.u32 4788187, %v2123
  %v2125 = vand.u32 2147483647, %v2124
  %v2127 = vcvt.s32.f32 %v2120
  %v2128 = vmul.f32 %v2127, %v2125
  %v2129 = vxor.u32 %v2128, 2147483648
  %v2130 = vsel %vm2047, %v2129, %v2128
  %v2131 = vsub.s32 4, %v2107
  %v2132 = vsel %vm2047, %v2131, %v2107
  %v2133 = vsel %vm2046, %v279, %v2130
  %v2134 = vsel %vm2046, 0, %v2132
  %v2135 = vcosq.f32.pop %v2133
  %v2136 = vsinq.f32.pop %v2133
  %vm2137 = vweird.f32 %v279
  %v2138 = vand.u32 %v2134, 3
  %vm2139 = vcmp.lt.s32.totalorder %v2138, 2
  %vm2140 = vcmp.eq.s32.totalorder %v2138, 0
  %v2141 = vxor.u32 %v2136, 2147483648
  %v2142 = vsel %vm2140, %v2135, %v2141
  %vm2143 = vcmp.eq.s32.totalorder %v2138, 2
  %v2144 = vxor.u32 %v2135, 2147483648
  %v2145 = vsel %vm2143, %v2144, %v2136
  %v2146 = vsel %vm2139, %v2142, %v2145
  %v2147 = vsel %vm2137, nan, %v2146
  %v2148 = vand.u32 2147483647, %v280
  %vm2149 = vcmp.le.f32.partialorder %v2148, 0.7853982
  %vm2150 = vcmp.lt.s32.totalorder %v280, 0
  %v2151 = vand.u32 %v280, 2139095040
  %v2152 = vshrl.u32 %v2151, 23
  %v2153 = vsub.s32 %v2152, 127
  %v2154 = vand.u32 2147483647, %v280
  %v2155 = vand.u32 %v2154, 8388607
  %v2156 = vor.u32 %v2155, 8388608
  %v2157 = vsub.s32 0, %v2156
  %v2158 = vadd.s32 %v2153, 1
  %vm2159 = vcmp.gt.s32.totalorder %v2158, 0
  %v2160 = vsel %vm2159, %v2158, 0
  %v2161 = vshrl.u32 %v2160, 5
  %v2162 = vand.u32 %v2160, 31
  %v2163 = vsub.s32 32, %v2162
  %v2164 = vshrl.u32 683565275, %v2163
  %v2165 = vshll.u32 683565275, %v2162
  %v2166 = vshrl.u32 2475754826, %v2163
  %v2167 = vor.u32 %v2165, %v2166
  %v2168 = vshll.u32 2475754826, %v2162
  %v2169 = vshrl.u32 2131351028, %v2163
  %v2170 = vor.u32 %v2168, %v2169
  %v2171 = vshll.u32 2131351028, %v2162
  %v2172 = vshrl.u32 2102212464, %v2163
  %v2173 = vor.u32 %v2171, %v2172
  %v2174 = vshll.u32 2102212464, %v2162
  %v2175 = vshrl.u32 920167782, %v2163
  %v2176 = vor.u32 %v2174, %v2175
  %v2177 = vshll.u32 920167782, %v2162
  %v2178 = vshrl.u32 1326507024, %v2163
  %v2179 = vor.u32 %v2177, %v2178
  %vm2180 = vcmp.lt.s32.totalorder %v2161, 1
  %vm2181 = vcmp.lt.s32.totalorder %v2161, 2
  %vm2182 = vcmp.lt.s32.totalorder %v2161, 3
  %vm2183 = vcmp.lt.s32.totalorder %v2161, 4
  %v2184 = vsel %vm2180, %v2164, %v2167
  %v2185 = vsel %vm2183, %v2173, 2102212464
  %v2186 = vsel %vm2182, %v2170, %v2185
  %v2187 = vsel %vm2181, %v2184, %v2186
  %v2188 = vsel %vm2180, %v2167, %v2170
  %v2189 = vsel %vm2183, %v2176, 920167782
  %v2190 = vsel %vm2182, %v2173, %v2189
  %v2191 = vsel %vm2181, %v2188, %v2190
  %v2192 = vsel %vm2180, %v2170, %v2173
  %v2193 = vsel %vm2183, %v2179, 1326507024
  %v2194 = vsel %vm2182, %v2176, %v2193
  %v2195 = vsel %vm2181, %v2192, %v2194
  %v2196 = vshll.u32 %v2156, 8
  %v2197 = vmul.u32.u64.compose %v2196, %v2195
  %v2198 = vextract.low.u32 %v2197
  %v2199 = vextract.high.u32 %v2197
  %v2200 = vmul.u32.u64.compose %v2196, %v2191
  %v2201 = vextract.low.u32 %v2200
  %v2202 = vextract.high.u32 %v2200
  %v2203 = vmul.u32 %v2196, %v2187
  %v2204 = vadd.s32 %v2199, %v2201
  %vm2205 = vc.u32 %v2199, %v2201
  %v2206 = vadd.s32 %v2202, 1
  %v2207 = vsel %vm2205, %v2206, %v2202
  %v2208 = vadd.s32 %v2203, %v2207
  %v2209 = vadd.s32 %v2208, 536870912
  %v2210 = vshrl.u32 %v2209, 30
  %v2211 = vshll.u32 %v2210, 30
  %v2212 = vsub.s32 %v2208, %v2211
  %vm2213 = vcmp.lt.s32.totalorder %v2212, 0
  %v2214 = vsub.s32 0, %v2212
  %v2215 = vsel %vm2213, %v2214, %v2212
  %v2216 = vclz %v2215
  %v2217 = vsub.s32 %v2216, 2
  %vm2218 = vcmp.gt.s32.totalorder 0, %v2217
  %v2219 = vsel %vm2218, 0, %v2217
  %v2220 = vsub.s32 32, %v2219
  %v2221 = vshll.u32 %v2212, %v2219
  %v2222 = vshrl.u32 %v2204, %v2220
  %v2223 = vor.u32 %v2221, %v2222
  %v2224 = vsub.s32 4294967266, %v2219
  %v2225 = vadd.s32 %v2224, 127
  %v2226 = vshll.u32 %v2225, 23
  %v2227 = vor.u32 4788187, %v2226
  %v2228 = vand.u32 2147483647, %v2227
  %v2230 = vcvt.s32.f32 %v2223
  %v2231 = vmul.f32 %v2230, %v2228
  %v2232 = vxor.u32 %v2231, 2147483648
  %v2233 = vsel %vm2150, %v2232, %v2231
  %v2234 = vsub.s32 4, %v2210
  %v2235 = vsel %vm2150, %v2234, %v2210
  %v2236 = vsel %vm2149, %v280, %v2233
  %v2237 = vsel %vm2149, 0, %v2235
  %v2238 = vcosq.f32.pop %v2236
  %v2239 = vsinq.f32.pop %v2236
  %vm2240 = vweird.f32 %v280
  %v2241 = vand.u32 %v2237, 3
  %vm2242 = vcmp.lt.s32.totalorder %v2241, 2
  %vm2243 = vcmp.eq.s32.totalorder %v2241, 0
  %v2244 = vxor.u32 %v2239, 2147483648
  %v2245 = vsel %vm2243, %v2238, %v2244
  %vm2246 = vcmp.eq.s32.totalorder %v2241, 2
  %v2247 = vxor.u32 %v2238, 2147483648
  %v2248 = vsel %vm2246, %v2247, %v2239
  %v2249 = vsel %vm2242, %v2245, %v2248
  %v2250 = vsel %vm2240, nan, %v2249
  %v2251 = vand.u32 2147483647, %v281
  %vm2252 = vcmp.le.f32.partialorder %v2251, 0.7853982
  %vm2253 = vcmp.lt.s32.totalorder %v281, 0
  %v2254 = vand.u32 %v281, 2139095040
  %v2255 = vshrl.u32 %v2254, 23
  %v2256 = vsub.s32 %v2255, 127
  %v2257 = vand.u32 2147483647, %v281
  %v2258 = vand.u32 %v2257, 8388607
  %v2259 = vor.u32 %v2258, 8388608
  %v2260 = vsub.s32 0, %v2259
  %v2261 = vadd.s32 %v2256, 1
  %vm2262 = vcmp.gt.s32.totalorder %v2261, 0
  %v2263 = vsel %vm2262, %v2261, 0
  %v2264 = vshrl.u32 %v2263, 5
  %v2265 = vand.u32 %v2263, 31
  %v2266 = vsub.s32 32, %v2265
  %v2267 = vshrl.u32 683565275, %v2266
  %v2268 = vshll.u32 683565275, %v2265
  %v2269 = vshrl.u32 2475754826, %v2266
  %v2270 = vor.u32 %v2268, %v2269
  %v2271 = vshll.u32 2475754826, %v2265
  %v2272 = vshrl.u32 2131351028, %v2266
  %v2273 = vor.u32 %v2271, %v2272
  %v2274 = vshll.u32 2131351028, %v2265
  %v2275 = vshrl.u32 2102212464, %v2266
  %v2276 = vor.u32 %v2274, %v2275
  %v2277 = vshll.u32 2102212464, %v2265
  %v2278 = vshrl.u32 920167782, %v2266
  %v2279 = vor.u32 %v2277, %v2278
  %v2280 = vshll.u32 920167782, %v2265
  %v2281 = vshrl.u32 1326507024, %v2266
  %v2282 = vor.u32 %v2280, %v2281
  %vm2283 = vcmp.lt.s32.totalorder %v2264, 1
  %vm2284 = vcmp.lt.s32.totalorder %v2264, 2
  %vm2285 = vcmp.lt.s32.totalorder %v2264, 3
  %vm2286 = vcmp.lt.s32.totalorder %v2264, 4
  %v2287 = vsel %vm2283, %v2267, %v2270
  %v2288 = vsel %vm2286, %v2276, 2102212464
  %v2289 = vsel %vm2285, %v2273, %v2288
  %v2290 = vsel %vm2284, %v2287, %v2289
  %v2291 = vsel %vm2283, %v2270, %v2273
  %v2292 = vsel %vm2286, %v2279, 920167782
  %v2293 = vsel %vm2285, %v2276, %v2292
  %v2294 = vsel %vm2284, %v2291, %v2293
  %v2295 = vsel %vm2283, %v2273, %v2276
  %v2296 = vsel %vm2286, %v2282, 1326507024
  %v2297 = vsel %vm2285, %v2279, %v2296
  %v2298 = vsel %vm2284, %v2295, %v2297
  %v2299 = vshll.u32 %v2259, 8
  %v2300 = vmul.u32.u64.compose %v2299, %v2298
  %v2301 = vextract.low.u32 %v2300
  %v2302 = vextract.high.u32 %v2300
  %v2303 = vmul.u32.u64.compose %v2299, %v2294
  %v2304 = vextract.low.u32 %v2303
  %v2305 = vextract.high.u32 %v2303
  %v2306 = vmul.u32 %v2299, %v2290
  %v2307 = vadd.s32 %v2302, %v2304
  %vm2308 = vc.u32 %v2302, %v2304
  %v2309 = vadd.s32 %v2305, 1
  %v2310 = vsel %vm2308, %v2309, %v2305
  %v2311 = vadd.s32 %v2306, %v2310
  %v2312 = vadd.s32 %v2311, 536870912
  %v2313 = vshrl.u32 %v2312, 30
  %v2314 = vshll.u32 %v2313, 30
  %v2315 = vsub.s32 %v2311, %v2314
  %vm2316 = vcmp.lt.s32.totalorder %v2315, 0
  %v2317 = vsub.s32 0, %v2315
  %v2318 = vsel %vm2316, %v2317, %v2315
  %v2319 = vclz %v2318
  %v2320 = vsub.s32 %v2319, 2
  %vm2321 = vcmp.gt.s32.totalorder 0, %v2320
  %v2322 = vsel %vm2321, 0, %v2320
  %v2323 = vsub.s32 32, %v2322
  %v2324 = vshll.u32 %v2315, %v2322
  %v2325 = vshrl.u32 %v2307, %v2323
  %v2326 = vor.u32 %v2324, %v2325
  %v2327 = vsub.s32 4294967266, %v2322
  %v2328 = vadd.s32 %v2327, 127
  %v2329 = vshll.u32 %v2328, 23
  %v2330 = vor.u32 4788187, %v2329
  %v2331 = vand.u32 2147483647, %v2330
  %v2333 = vcvt.s32.f32 %v2326
  %v2334 = vmul.f32 %v2333, %v2331
  %v2335 = vxor.u32 %v2334, 2147483648
  %v2336 = vsel %vm2253, %v2335, %v2334
  %v2337 = vsub.s32 4, %v2313
  %v2338 = vsel %vm2253, %v2337, %v2313
  %v2339 = vsel %vm2252, %v281, %v2336
  %v2340 = vsel %vm2252, 0, %v2338
  %v2341 = vcosq.f32.pop %v2339
  %v2342 = vsinq.f32.pop %v2339
  %vm2343 = vweird.f32 %v281
  %v2344 = vand.u32 %v2340, 3
  %vm2345 = vcmp.lt.s32.totalorder %v2344, 2
  %vm2346 = vcmp.eq.s32.totalorder %v2344, 0
  %v2347 = vxor.u32 %v2342, 2147483648
  %v2348 = vsel %vm2346, %v2341, %v2347
  %vm2349 = vcmp.eq.s32.totalorder %v2344, 2
  %v2350 = vxor.u32 %v2341, 2147483648
  %v2351 = vsel %vm2349, %v2350, %v2342
  %v2352 = vsel %vm2345, %v2348, %v2351
  %v2353 = vsel %vm2343, nan, %v2352
  %v2354 = vand.u32 2147483647, %v282
  %vm2355 = vcmp.le.f32.partialorder %v2354, 0.7853982
  %vm2356 = vcmp.lt.s32.totalorder %v282, 0
  %v2357 = vand.u32 %v282, 2139095040
  %v2358 = vshrl.u32 %v2357, 23
  %v2359 = vsub.s32 %v2358, 127
  %v2360 = vand.u32 2147483647, %v282
  %v2361 = vand.u32 %v2360, 8388607
  %v2362 = vor.u32 %v2361, 8388608
  %v2363 = vsub.s32 0, %v2362
  %v2364 = vadd.s32 %v2359, 1
  %vm2365 = vcmp.gt.s32.totalorder %v2364, 0
  %v2366 = vsel %vm2365, %v2364, 0
  %v2367 = vshrl.u32 %v2366, 5
  %v2368 = vand.u32 %v2366, 31
  %v2369 = vsub.s32 32, %v2368
  %v2370 = vshrl.u32 683565275, %v2369
  %v2371 = vshll.u32 683565275, %v2368
  %v2372 = vshrl.u32 2475754826, %v2369
  %v2373 = vor.u32 %v2371, %v2372
  %v2374 = vshll.u32 2475754826, %v2368
  %v2375 = vshrl.u32 2131351028, %v2369
  %v2376 = vor.u32 %v2374, %v2375
  %v2377 = vshll.u32 2131351028, %v2368
  %v2378 = vshrl.u32 2102212464, %v2369
  %v2379 = vor.u32 %v2377, %v2378
  %v2380 = vshll.u32 2102212464, %v2368
  %v2381 = vshrl.u32 920167782, %v2369
  %v2382 = vor.u32 %v2380, %v2381
  %v2383 = vshll.u32 920167782, %v2368
  %v2384 = vshrl.u32 1326507024, %v2369
  %v2385 = vor.u32 %v2383, %v2384
  %vm2386 = vcmp.lt.s32.totalorder %v2367, 1
  %vm2387 = vcmp.lt.s32.totalorder %v2367, 2
  %vm2388 = vcmp.lt.s32.totalorder %v2367, 3
  %vm2389 = vcmp.lt.s32.totalorder %v2367, 4
  %v2390 = vsel %vm2386, %v2370, %v2373
  %v2391 = vsel %vm2389, %v2379, 2102212464
  %v2392 = vsel %vm2388, %v2376, %v2391
  %v2393 = vsel %vm2387, %v2390, %v2392
  %v2394 = vsel %vm2386, %v2373, %v2376
  %v2395 = vsel %vm2389, %v2382, 920167782
  %v2396 = vsel %vm2388, %v2379, %v2395
  %v2397 = vsel %vm2387, %v2394, %v2396
  %v2398 = vsel %vm2386, %v2376, %v2379
  %v2399 = vsel %vm2389, %v2385, 1326507024
  %v2400 = vsel %vm2388, %v2382, %v2399
  %v2401 = vsel %vm2387, %v2398, %v2400
  %v2402 = vshll.u32 %v2362, 8
  %v2403 = vmul.u32.u64.compose %v2402, %v2401
  %v2404 = vextract.low.u32 %v2403
  %v2405 = vextract.high.u32 %v2403
  %v2406 = vmul.u32.u64.compose %v2402, %v2397
  %v2407 = vextract.low.u32 %v2406
  %v2408 = vextract.high.u32 %v2406
  %v2409 = vmul.u32 %v2402, %v2393
  %v2410 = vadd.s32 %v2405, %v2407
  %vm2411 = vc.u32 %v2405, %v2407
  %v2412 = vadd.s32 %v2408, 1
  %v2413 = vsel %vm2411, %v2412, %v2408
  %v2414 = vadd.s32 %v2409, %v2413
  %v2415 = vadd.s32 %v2414, 536870912
  %v2416 = vshrl.u32 %v2415, 30
  %v2417 = vshll.u32 %v2416, 30
  %v2418 = vsub.s32 %v2414, %v2417
  %vm2419 = vcmp.lt.s32.totalorder %v2418, 0
  %v2420 = vsub.s32 0, %v2418
  %v2421 = vsel %vm2419, %v2420, %v2418
  %v2422 = vclz %v2421
  %v2423 = vsub.s32 %v2422, 2
  %vm2424 = vcmp.gt.s32.totalorder 0, %v2423
  %v2425 = vsel %vm2424, 0, %v2423
  %v2426 = vsub.s32 32, %v2425
  %v2427 = vshll.u32 %v2418, %v2425
  %v2428 = vshrl.u32 %v2410, %v2426
  %v2429 = vor.u32 %v2427, %v2428
  %v2430 = vsub.s32 4294967266, %v2425
  %v2431 = vadd.s32 %v2430, 127
  %v2432 = vshll.u32 %v2431, 23
  %v2433 = vor.u32 4788187, %v2432
  %v2434 = vand.u32 2147483647, %v2433
  %v2436 = vcvt.s32.f32 %v2429
  %v2437 = vmul.f32 %v2436, %v2434
  %v2438 = vxor.u32 %v2437, 2147483648
  %v2439 = vsel %vm2356, %v2438, %v2437
  %v2440 = vsub.s32 4, %v2416
  %v2441 = vsel %vm2356, %v2440, %v2416
  %v2442 = vsel %vm2355, %v282, %v2439
  %v2443 = vsel %vm2355, 0, %v2441
  %v2444 = vcosq.f32.pop %v2442
  %v2445 = vsinq.f32.pop %v2442
  %vm2446 = vweird.f32 %v282
  %v2447 = vand.u32 %v2443, 3
  %vm2448 = vcmp.lt.s32.totalorder %v2447, 2
  %vm2449 = vcmp.eq.s32.totalorder %v2447, 0
  %v2450 = vxor.u32 %v2445, 2147483648
  %v2451 = vsel %vm2449, %v2444, %v2450
  %vm2452 = vcmp.eq.s32.totalorder %v2447, 2
  %v2453 = vxor.u32 %v2444, 2147483648
  %v2454 = vsel %vm2452, %v2453, %v2445
  %v2455 = vsel %vm2448, %v2451, %v2454
  %v2456 = vsel %vm2446, nan, %v2455
  %v2457 = vand.u32 2147483647, %v283
  %vm2458 = vcmp.le.f32.partialorder %v2457, 0.7853982
  %vm2459 = vcmp.lt.s32.totalorder %v283, 0
  %v2460 = vand.u32 %v283, 2139095040
  %v2461 = vshrl.u32 %v2460, 23
  %v2462 = vsub.s32 %v2461, 127
  %v2463 = vand.u32 2147483647, %v283
  %v2464 = vand.u32 %v2463, 8388607
  %v2465 = vor.u32 %v2464, 8388608
  %v2466 = vsub.s32 0, %v2465
  %v2467 = vadd.s32 %v2462, 1
  %vm2468 = vcmp.gt.s32.totalorder %v2467, 0
  %v2469 = vsel %vm2468, %v2467, 0
  %v2470 = vshrl.u32 %v2469, 5
  %v2471 = vand.u32 %v2469, 31
  %v2472 = vsub.s32 32, %v2471
  %v2473 = vshrl.u32 683565275, %v2472
  %v2474 = vshll.u32 683565275, %v2471
  %v2475 = vshrl.u32 2475754826, %v2472
  %v2476 = vor.u32 %v2474, %v2475
  %v2477 = vshll.u32 2475754826, %v2471
  %v2478 = vshrl.u32 2131351028, %v2472
  %v2479 = vor.u32 %v2477, %v2478
  %v2480 = vshll.u32 2131351028, %v2471
  %v2481 = vshrl.u32 2102212464, %v2472
  %v2482 = vor.u32 %v2480, %v2481
  %v2483 = vshll.u32 2102212464, %v2471
  %v2484 = vshrl.u32 920167782, %v2472
  %v2485 = vor.u32 %v2483, %v2484
  %v2486 = vshll.u32 920167782, %v2471
  %v2487 = vshrl.u32 1326507024, %v2472
  %v2488 = vor.u32 %v2486, %v2487
  %vm2489 = vcmp.lt.s32.totalorder %v2470, 1
  %vm2490 = vcmp.lt.s32.totalorder %v2470, 2
  %vm2491 = vcmp.lt.s32.totalorder %v2470, 3
  %vm2492 = vcmp.lt.s32.totalorder %v2470, 4
  %v2493 = vsel %vm2489, %v2473, %v2476
  %v2494 = vsel %vm2492, %v2482, 2102212464
  %v2495 = vsel %vm2491, %v2479, %v2494
  %v2496 = vsel %vm2490, %v2493, %v2495
  %v2497 = vsel %vm2489, %v2476, %v2479
  %v2498 = vsel %vm2492, %v2485, 920167782
  %v2499 = vsel %vm2491, %v2482, %v2498
  %v2500 = vsel %vm2490, %v2497, %v2499
  %v2501 = vsel %vm2489, %v2479, %v2482
  %v2502 = vsel %vm2492, %v2488, 1326507024
  %v2503 = vsel %vm2491, %v2485, %v2502
  %v2504 = vsel %vm2490, %v2501, %v2503
  %v2505 = vshll.u32 %v2465, 8
  %v2506 = vmul.u32.u64.compose %v2505, %v2504
  %v2507 = vextract.low.u32 %v2506
  %v2508 = vextract.high.u32 %v2506
  %v2509 = vmul.u32.u64.compose %v2505, %v2500
  %v2510 = vextract.low.u32 %v2509
  %v2511 = vextract.high.u32 %v2509
  %v2512 = vmul.u32 %v2505, %v2496
  %v2513 = vadd.s32 %v2508, %v2510
  %vm2514 = vc.u32 %v2508, %v2510
  %v2515 = vadd.s32 %v2511, 1
  %v2516 = vsel %vm2514, %v2515, %v2511
  %v2517 = vadd.s32 %v2512, %v2516
  %v2518 = vadd.s32 %v2517, 536870912
  %v2519 = vshrl.u32 %v2518, 30
  %v2520 = vshll.u32 %v2519, 30
  %v2521 = vsub.s32 %v2517, %v2520
  %vm2522 = vcmp.lt.s32.totalorder %v2521, 0
  %v2523 = vsub.s32 0, %v2521
  %v2524 = vsel %vm2522, %v2523, %v2521
  %v2525 = vclz %v2524
  %v2526 = vsub.s32 %v2525, 2
  %vm2527 = vcmp.gt.s32.totalorder 0, %v2526
  %v2528 = vsel %vm2527, 0, %v2526
  %v2529 = vsub.s32 32, %v2528
  %v2530 = vshll.u32 %v2521, %v2528
  %v2531 = vshrl.u32 %v2513, %v2529
  %v2532 = vor.u32 %v2530, %v2531
  %v2533 = vsub.s32 4294967266, %v2528
  %v2534 = vadd.s32 %v2533, 127
  %v2535 = vshll.u32 %v2534, 23
  %v2536 = vor.u32 4788187, %v2535
  %v2537 = vand.u32 2147483647, %v2536
  %v2539 = vcvt.s32.f32 %v2532
  %v2540 = vmul.f32 %v2539, %v2537
  %v2541 = vxor.u32 %v2540, 2147483648
  %v2542 = vsel %vm2459, %v2541, %v2540
  %v2543 = vsub.s32 4, %v2519
  %v2544 = vsel %vm2459, %v2543, %v2519
  %v2545 = vsel %vm2458, %v283, %v2542
  %v2546 = vsel %vm2458, 0, %v2544
  %v2547 = vcosq.f32.pop %v2545
  %v2548 = vsinq.f32.pop %v2545
  %vm2549 = vweird.f32 %v283
  %v2550 = vand.u32 %v2546, 3
  %vm2551 = vcmp.lt.s32.totalorder %v2550, 2
  %vm2552 = vcmp.eq.s32.totalorder %v2550, 0
  %v2553 = vxor.u32 %v2548, 2147483648
  %v2554 = vsel %vm2552, %v2547, %v2553
  %vm2555 = vcmp.eq.s32.totalorder %v2550, 2
  %v2556 = vxor.u32 %v2547, 2147483648
  %v2557 = vsel %vm2555, %v2556, %v2548
  %v2558 = vsel %vm2551, %v2554, %v2557
  %v2559 = vsel %vm2549, nan, %v2558
  %v2560 = vand.u32 2147483647, %v284
  %vm2561 = vcmp.le.f32.partialorder %v2560, 0.7853982
  %vm2562 = vcmp.lt.s32.totalorder %v284, 0
  %v2563 = vand.u32 %v284, 2139095040
  %v2564 = vshrl.u32 %v2563, 23
  %v2565 = vsub.s32 %v2564, 127
  %v2566 = vand.u32 2147483647, %v284
  %v2567 = vand.u32 %v2566, 8388607
  %v2568 = vor.u32 %v2567, 8388608
  %v2569 = vsub.s32 0, %v2568
  %v2570 = vadd.s32 %v2565, 1
  %vm2571 = vcmp.gt.s32.totalorder %v2570, 0
  %v2572 = vsel %vm2571, %v2570, 0
  %v2573 = vshrl.u32 %v2572, 5
  %v2574 = vand.u32 %v2572, 31
  %v2575 = vsub.s32 32, %v2574
  %v2576 = vshrl.u32 683565275, %v2575
  %v2577 = vshll.u32 683565275, %v2574
  %v2578 = vshrl.u32 2475754826, %v2575
  %v2579 = vor.u32 %v2577, %v2578
  %v2580 = vshll.u32 2475754826, %v2574
  %v2581 = vshrl.u32 2131351028, %v2575
  %v2582 = vor.u32 %v2580, %v2581
  %v2583 = vshll.u32 2131351028, %v2574
  %v2584 = vshrl.u32 2102212464, %v2575
  %v2585 = vor.u32 %v2583, %v2584
  %v2586 = vshll.u32 2102212464, %v2574
  %v2587 = vshrl.u32 920167782, %v2575
  %v2588 = vor.u32 %v2586, %v2587
  %v2589 = vshll.u32 920167782, %v2574
  %v2590 = vshrl.u32 1326507024, %v2575
  %v2591 = vor.u32 %v2589, %v2590
  %vm2592 = vcmp.lt.s32.totalorder %v2573, 1
  %vm2593 = vcmp.lt.s32.totalorder %v2573, 2
  %vm2594 = vcmp.lt.s32.totalorder %v2573, 3
  %vm2595 = vcmp.lt.s32.totalorder %v2573, 4
  %v2596 = vsel %vm2592, %v2576, %v2579
  %v2597 = vsel %vm2595, %v2585, 2102212464
  %v2598 = vsel %vm2594, %v2582, %v2597
  %v2599 = vsel %vm2593, %v2596, %v2598
  %v2600 = vsel %vm2592, %v2579, %v2582
  %v2601 = vsel %vm2595, %v2588, 920167782
  %v2602 = vsel %vm2594, %v2585, %v2601
  %v2603 = vsel %vm2593, %v2600, %v2602
  %v2604 = vsel %vm2592, %v2582, %v2585
  %v2605 = vsel %vm2595, %v2591, 1326507024
  %v2606 = vsel %vm2594, %v2588, %v2605
  %v2607 = vsel %vm2593, %v2604, %v2606
  %v2608 = vshll.u32 %v2568, 8
  %v2609 = vmul.u32.u64.compose %v2608, %v2607
  %v2610 = vextract.low.u32 %v2609
  %v2611 = vextract.high.u32 %v2609
  %v2612 = vmul.u32.u64.compose %v2608, %v2603
  %v2613 = vextract.low.u32 %v2612
  %v2614 = vextract.high.u32 %v2612
  %v2615 = vmul.u32 %v2608, %v2599
  %v2616 = vadd.s32 %v2611, %v2613
  %vm2617 = vc.u32 %v2611, %v2613
  %v2618 = vadd.s32 %v2614, 1
  %v2619 = vsel %vm2617, %v2618, %v2614
  %v2620 = vadd.s32 %v2615, %v2619
  %v2621 = vadd.s32 %v2620, 536870912
  %v2622 = vshrl.u32 %v2621, 30
  %v2623 = vshll.u32 %v2622, 30
  %v2624 = vsub.s32 %v2620, %v2623
  %vm2625 = vcmp.lt.s32.totalorder %v2624, 0
  %v2626 = vsub.s32 0, %v2624
  %v2627 = vsel %vm2625, %v2626, %v2624
  %v2628 = vclz %v2627
  %v2629 = vsub.s32 %v2628, 2
  %vm2630 = vcmp.gt.s32.totalorder 0, %v2629
  %v2631 = vsel %vm2630, 0, %v2629
  %v2632 = vsub.s32 32, %v2631
  %v2633 = vshll.u32 %v2624, %v2631
  %v2634 = vshrl.u32 %v2616, %v2632
  %v2635 = vor.u32 %v2633, %v2634
  %v2636 = vsub.s32 4294967266, %v2631
  %v2637 = vadd.s32 %v2636, 127
  %v2638 = vshll.u32 %v2637, 23
  %v2639 = vor.u32 4788187, %v2638
  %v2640 = vand.u32 2147483647, %v2639
  %v2642 = vcvt.s32.f32 %v2635
  %v2643 = vmul.f32 %v2642, %v2640
  %v2644 = vxor.u32 %v2643, 2147483648
  %v2645 = vsel %vm2562, %v2644, %v2643
  %v2646 = vsub.s32 4, %v2622
  %v2647 = vsel %vm2562, %v2646, %v2622
  %v2648 = vsel %vm2561, %v284, %v2645
  %v2649 = vsel %vm2561, 0, %v2647
  %v2650 = vcosq.f32.pop %v2648
  %v2651 = vsinq.f32.pop %v2648
  %vm2652 = vweird.f32 %v284
  %v2653 = vand.u32 %v2649, 3
  %vm2654 = vcmp.lt.s32.totalorder %v2653, 2
  %vm2655 = vcmp.eq.s32.totalorder %v2653, 0
  %v2656 = vxor.u32 %v2651, 2147483648
  %v2657 = vsel %vm2655, %v2650, %v2656
  %vm2658 = vcmp.eq.s32.totalorder %v2653, 2
  %v2659 = vxor.u32 %v2650, 2147483648
  %v2660 = vsel %vm2658, %v2659, %v2651
  %v2661 = vsel %vm2654, %v2657, %v2660
  %v2662 = vsel %vm2652, nan, %v2661
  %v2663 = vand.u32 2147483647, %v285
  %vm2664 = vcmp.le.f32.partialorder %v2663, 0.7853982
  %vm2665 = vcmp.lt.s32.totalorder %v285, 0
  %v2666 = vand.u32 %v285, 2139095040
  %v2667 = vshrl.u32 %v2666, 23
  %v2668 = vsub.s32 %v2667, 127
  %v2669 = vand.u32 2147483647, %v285
  %v2670 = vand.u32 %v2669, 8388607
  %v2671 = vor.u32 %v2670, 8388608
  %v2672 = vsub.s32 0, %v2671
  %v2673 = vadd.s32 %v2668, 1
  %vm2674 = vcmp.gt.s32.totalorder %v2673, 0
  %v2675 = vsel %vm2674, %v2673, 0
  %v2676 = vshrl.u32 %v2675, 5
  %v2677 = vand.u32 %v2675, 31
  %v2678 = vsub.s32 32, %v2677
  %v2679 = vshrl.u32 683565275, %v2678
  %v2680 = vshll.u32 683565275, %v2677
  %v2681 = vshrl.u32 2475754826, %v2678
  %v2682 = vor.u32 %v2680, %v2681
  %v2683 = vshll.u32 2475754826, %v2677
  %v2684 = vshrl.u32 2131351028, %v2678
  %v2685 = vor.u32 %v2683, %v2684
  %v2686 = vshll.u32 2131351028, %v2677
  %v2687 = vshrl.u32 2102212464, %v2678
  %v2688 = vor.u32 %v2686, %v2687
  %v2689 = vshll.u32 2102212464, %v2677
  %v2690 = vshrl.u32 920167782, %v2678
  %v2691 = vor.u32 %v2689, %v2690
  %v2692 = vshll.u32 920167782, %v2677
  %v2693 = vshrl.u32 1326507024, %v2678
  %v2694 = vor.u32 %v2692, %v2693
  %vm2695 = vcmp.lt.s32.totalorder %v2676, 1
  %vm2696 = vcmp.lt.s32.totalorder %v2676, 2
  %vm2697 = vcmp.lt.s32.totalorder %v2676, 3
  %vm2698 = vcmp.lt.s32.totalorder %v2676, 4
  %v2699 = vsel %vm2695, %v2679, %v2682
  %v2700 = vsel %vm2698, %v2688, 2102212464
  %v2701 = vsel %vm2697, %v2685, %v2700
  %v2702 = vsel %vm2696, %v2699, %v2701
  %v2703 = vsel %vm2695, %v2682, %v2685
  %v2704 = vsel %vm2698, %v2691, 920167782
  %v2705 = vsel %vm2697, %v2688, %v2704
  %v2706 = vsel %vm2696, %v2703, %v2705
  %v2707 = vsel %vm2695, %v2685, %v2688
  %v2708 = vsel %vm2698, %v2694, 1326507024
  %v2709 = vsel %vm2697, %v2691, %v2708
  %v2710 = vsel %vm2696, %v2707, %v2709
  %v2711 = vshll.u32 %v2671, 8
  %v2712 = vmul.u32.u64.compose %v2711, %v2710
  %v2713 = vextract.low.u32 %v2712
  %v2714 = vextract.high.u32 %v2712
  %v2715 = vmul.u32.u64.compose %v2711, %v2706
  %v2716 = vextract.low.u32 %v2715
  %v2717 = vextract.high.u32 %v2715
  %v2718 = vmul.u32 %v2711, %v2702
  %v2719 = vadd.s32 %v2714, %v2716
  %vm2720 = vc.u32 %v2714, %v2716
  %v2721 = vadd.s32 %v2717, 1
  %v2722 = vsel %vm2720, %v2721, %v2717
  %v2723 = vadd.s32 %v2718, %v2722
  %v2724 = vadd.s32 %v2723, 536870912
  %v2725 = vshrl.u32 %v2724, 30
  %v2726 = vshll.u32 %v2725, 30
  %v2727 = vsub.s32 %v2723, %v2726
  %vm2728 = vcmp.lt.s32.totalorder %v2727, 0
  %v2729 = vsub.s32 0, %v2727
  %v2730 = vsel %vm2728, %v2729, %v2727
  %v2731 = vclz %v2730
  %v2732 = vsub.s32 %v2731, 2
  %vm2733 = vcmp.gt.s32.totalorder 0, %v2732
  %v2734 = vsel %vm2733, 0, %v2732
  %v2735 = vsub.s32 32, %v2734
  %v2736 = vshll.u32 %v2727, %v2734
  %v2737 = vshrl.u32 %v2719, %v2735
  %v2738 = vor.u32 %v2736, %v2737
  %v2739 = vsub.s32 4294967266, %v2734
  %v2740 = vadd.s32 %v2739, 127
  %v2741 = vshll.u32 %v2740, 23
  %v2742 = vor.u32 4788187, %v2741
  %v2743 = vand.u32 2147483647, %v2742
  %v2745 = vcvt.s32.f32 %v2738
  %v2746 = vmul.f32 %v2745, %v2743
  %v2747 = vxor.u32 %v2746, 2147483648
  %v2748 = vsel %vm2665, %v2747, %v2746
  %v2749 = vsub.s32 4, %v2725
  %v2750 = vsel %vm2665, %v2749, %v2725
  %v2751 = vsel %vm2664, %v285, %v2748
  %v2752 = vsel %vm2664, 0, %v2750
  %v2753 = vcosq.f32.pop %v2751
  %v2754 = vsinq.f32.pop %v2751
  %vm2755 = vweird.f32 %v285
  %v2756 = vand.u32 %v2752, 3
  %vm2757 = vcmp.lt.s32.totalorder %v2756, 2
  %vm2758 = vcmp.eq.s32.totalorder %v2756, 0
  %v2759 = vxor.u32 %v2754, 2147483648
  %v2760 = vsel %vm2758, %v2753, %v2759
  %vm2761 = vcmp.eq.s32.totalorder %v2756, 2
  %v2762 = vxor.u32 %v2753, 2147483648
  %v2763 = vsel %vm2761, %v2762, %v2754
  %v2764 = vsel %vm2757, %v2760, %v2763
  %v2765 = vsel %vm2755, nan, %v2764
  %v2766 = vand.u32 2147483647, %v286
  %vm2767 = vcmp.le.f32.partialorder %v2766, 0.7853982
  %vm2768 = vcmp.lt.s32.totalorder %v286, 0
  %v2769 = vand.u32 %v286, 2139095040
  %v2770 = vshrl.u32 %v2769, 23
  %v2771 = vsub.s32 %v2770, 127
  %v2772 = vand.u32 2147483647, %v286
  %v2773 = vand.u32 %v2772, 8388607
  %v2774 = vor.u32 %v2773, 8388608
  %v2775 = vsub.s32 0, %v2774
  %v2776 = vadd.s32 %v2771, 1
  %vm2777 = vcmp.gt.s32.totalorder %v2776, 0
  %v2778 = vsel %vm2777, %v2776, 0
  %v2779 = vshrl.u32 %v2778, 5
  %v2780 = vand.u32 %v2778, 31
  %v2781 = vsub.s32 32, %v2780
  %v2782 = vshrl.u32 683565275, %v2781
  %v2783 = vshll.u32 683565275, %v2780
  %v2784 = vshrl.u32 2475754826, %v2781
  %v2785 = vor.u32 %v2783, %v2784
  %v2786 = vshll.u32 2475754826, %v2780
  %v2787 = vshrl.u32 2131351028, %v2781
  %v2788 = vor.u32 %v2786, %v2787
  %v2789 = vshll.u32 2131351028, %v2780
  %v2790 = vshrl.u32 2102212464, %v2781
  %v2791 = vor.u32 %v2789, %v2790
  %v2792 = vshll.u32 2102212464, %v2780
  %v2793 = vshrl.u32 920167782, %v2781
  %v2794 = vor.u32 %v2792, %v2793
  %v2795 = vshll.u32 920167782, %v2780
  %v2796 = vshrl.u32 1326507024, %v2781
  %v2797 = vor.u32 %v2795, %v2796
  %vm2798 = vcmp.lt.s32.totalorder %v2779, 1
  %vm2799 = vcmp.lt.s32.totalorder %v2779, 2
  %vm2800 = vcmp.lt.s32.totalorder %v2779, 3
  %vm2801 = vcmp.lt.s32.totalorder %v2779, 4
  %v2802 = vsel %vm2798, %v2782, %v2785
  %v2803 = vsel %vm2801, %v2791, 2102212464
  %v2804 = vsel %vm2800, %v2788, %v2803
  %v2805 = vsel %vm2799, %v2802, %v2804
  %v2806 = vsel %vm2798, %v2785, %v2788
  %v2807 = vsel %vm2801, %v2794, 920167782
  %v2808 = vsel %vm2800, %v2791, %v2807
  %v2809 = vsel %vm2799, %v2806, %v2808
  %v2810 = vsel %vm2798, %v2788, %v2791
  %v2811 = vsel %vm2801, %v2797, 1326507024
  %v2812 = vsel %vm2800, %v2794, %v2811
  %v2813 = vsel %vm2799, %v2810, %v2812
  %v2814 = vshll.u32 %v2774, 8
  %v2815 = vmul.u32.u64.compose %v2814, %v2813
  %v2816 = vextract.low.u32 %v2815
  %v2817 = vextract.high.u32 %v2815
  %v2818 = vmul.u32.u64.compose %v2814, %v2809
  %v2819 = vextract.low.u32 %v2818
  %v2820 = vextract.high.u32 %v2818
  %v2821 = vmul.u32 %v2814, %v2805
  %v2822 = vadd.s32 %v2817, %v2819
  %vm2823 = vc.u32 %v2817, %v2819
  %v2824 = vadd.s32 %v2820, 1
  %v2825 = vsel %vm2823, %v2824, %v2820
  %v2826 = vadd.s32 %v2821, %v2825
  %v2827 = vadd.s32 %v2826, 536870912
  %v2828 = vshrl.u32 %v2827, 30
  %v2829 = vshll.u32 %v2828, 30
  %v2830 = vsub.s32 %v2826, %v2829
  %vm2831 = vcmp.lt.s32.totalorder %v2830, 0
  %v2832 = vsub.s32 0, %v2830
  %v2833 = vsel %vm2831, %v2832, %v2830
  %v2834 = vclz %v2833
  %v2835 = vsub.s32 %v2834, 2
  %vm2836 = vcmp.gt.s32.totalorder 0, %v2835
  %v2837 = vsel %vm2836, 0, %v2835
  %v2838 = vsub.s32 32, %v2837
  %v2839 = vshll.u32 %v2830, %v2837
  %v2840 = vshrl.u32 %v2822, %v2838
  %v2841 = vor.u32 %v2839, %v2840
  %v2842 = vsub.s32 4294967266, %v2837
  %v2843 = vadd.s32 %v2842, 127
  %v2844 = vshll.u32 %v2843, 23
  %v2845 = vor.u32 4788187, %v2844
  %v2846 = vand.u32 2147483647, %v2845
  %v2848 = vcvt.s32.f32 %v2841
  %v2849 = vmul.f32 %v2848, %v2846
  %v2850 = vxor.u32 %v2849, 2147483648
  %v2851 = vsel %vm2768, %v2850, %v2849
  %v2852 = vsub.s32 4, %v2828
  %v2853 = vsel %vm2768, %v2852, %v2828
  %v2854 = vsel %vm2767, %v286, %v2851
  %v2855 = vsel %vm2767, 0, %v2853
  %v2856 = vcosq.f32.pop %v2854
  %v2857 = vsinq.f32.pop %v2854
  %vm2858 = vweird.f32 %v286
  %v2859 = vand.u32 %v2855, 3
  %vm2860 = vcmp.lt.s32.totalorder %v2859, 2
  %vm2861 = vcmp.eq.s32.totalorder %v2859, 0
  %v2862 = vxor.u32 %v2857, 2147483648
  %v2863 = vsel %vm2861, %v2856, %v2862
  %vm2864 = vcmp.eq.s32.totalorder %v2859, 2
  %v2865 = vxor.u32 %v2856, 2147483648
  %v2866 = vsel %vm2864, %v2865, %v2857
  %v2867 = vsel %vm2860, %v2863, %v2866
  %v2868 = vsel %vm2858, nan, %v2867
  %v2869 = vand.u32 2147483647, %v287
  %vm2870 = vcmp.le.f32.partialorder %v2869, 0.7853982
  %vm2871 = vcmp.lt.s32.totalorder %v287, 0
  %v2872 = vand.u32 %v287, 2139095040
  %v2873 = vshrl.u32 %v2872, 23
  %v2874 = vsub.s32 %v2873, 127
  %v2875 = vand.u32 2147483647, %v287
  %v2876 = vand.u32 %v2875, 8388607
  %v2877 = vor.u32 %v2876, 8388608
  %v2878 = vsub.s32 0, %v2877
  %v2879 = vadd.s32 %v2874, 1
  %vm2880 = vcmp.gt.s32.totalorder %v2879, 0
  %v2881 = vsel %vm2880, %v2879, 0
  %v2882 = vshrl.u32 %v2881, 5
  %v2883 = vand.u32 %v2881, 31
  %v2884 = vsub.s32 32, %v2883
  %v2885 = vshrl.u32 683565275, %v2884
  %v2886 = vshll.u32 683565275, %v2883
  %v2887 = vshrl.u32 2475754826, %v2884
  %v2888 = vor.u32 %v2886, %v2887
  %v2889 = vshll.u32 2475754826, %v2883
  %v2890 = vshrl.u32 2131351028, %v2884
  %v2891 = vor.u32 %v2889, %v2890
  %v2892 = vshll.u32 2131351028, %v2883
  %v2893 = vshrl.u32 2102212464, %v2884
  %v2894 = vor.u32 %v2892, %v2893
  %v2895 = vshll.u32 2102212464, %v2883
  %v2896 = vshrl.u32 920167782, %v2884
  %v2897 = vor.u32 %v2895, %v2896
  %v2898 = vshll.u32 920167782, %v2883
  %v2899 = vshrl.u32 1326507024, %v2884
  %v2900 = vor.u32 %v2898, %v2899
  %vm2901 = vcmp.lt.s32.totalorder %v2882, 1
  %vm2902 = vcmp.lt.s32.totalorder %v2882, 2
  %vm2903 = vcmp.lt.s32.totalorder %v2882, 3
  %vm2904 = vcmp.lt.s32.totalorder %v2882, 4
  %v2905 = vsel %vm2901, %v2885, %v2888
  %v2906 = vsel %vm2904, %v2894, 2102212464
  %v2907 = vsel %vm2903, %v2891, %v2906
  %v2908 = vsel %vm2902, %v2905, %v2907
  %v2909 = vsel %vm2901, %v2888, %v2891
  %v2910 = vsel %vm2904, %v2897, 920167782
  %v2911 = vsel %vm2903, %v2894, %v2910
  %v2912 = vsel %vm2902, %v2909, %v2911
  %v2913 = vsel %vm2901, %v2891, %v2894
  %v2914 = vsel %vm2904, %v2900, 1326507024
  %v2915 = vsel %vm2903, %v2897, %v2914
  %v2916 = vsel %vm2902, %v2913, %v2915
  %v2917 = vshll.u32 %v2877, 8
  %v2918 = vmul.u32.u64.compose %v2917, %v2916
  %v2919 = vextract.low.u32 %v2918
  %v2920 = vextract.high.u32 %v2918
  %v2921 = vmul.u32.u64.compose %v2917, %v2912
  %v2922 = vextract.low.u32 %v2921
  %v2923 = vextract.high.u32 %v2921
  %v2924 = vmul.u32 %v2917, %v2908
  %v2925 = vadd.s32 %v2920, %v2922
  %vm2926 = vc.u32 %v2920, %v2922
  %v2927 = vadd.s32 %v2923, 1
  %v2928 = vsel %vm2926, %v2927, %v2923
  %v2929 = vadd.s32 %v2924, %v2928
  %v2930 = vadd.s32 %v2929, 536870912
  %v2931 = vshrl.u32 %v2930, 30
  %v2932 = vshll.u32 %v2931, 30
  %v2933 = vsub.s32 %v2929, %v2932
  %vm2934 = vcmp.lt.s32.totalorder %v2933, 0
  %v2935 = vsub.s32 0, %v2933
  %v2936 = vsel %vm2934, %v2935, %v2933
  %v2937 = vclz %v2936
  %v2938 = vsub.s32 %v2937, 2
  %vm2939 = vcmp.gt.s32.totalorder 0, %v2938
  %v2940 = vsel %vm2939, 0, %v2938
  %v2941 = vsub.s32 32, %v2940
  %v2942 = vshll.u32 %v2933, %v2940
  %v2943 = vshrl.u32 %v2925, %v2941
  %v2944 = vor.u32 %v2942, %v2943
  %v2945 = vsub.s32 4294967266, %v2940
  %v2946 = vadd.s32 %v2945, 127
  %v2947 = vshll.u32 %v2946, 23
  %v2948 = vor.u32 4788187, %v2947
  %v2949 = vand.u32 2147483647, %v2948
  %v2951 = vcvt.s32.f32 %v2944
  %v2952 = vmul.f32 %v2951, %v2949
  %v2953 = vxor.u32 %v2952, 2147483648
  %v2954 = vsel %vm2871, %v2953, %v2952
  %v2955 = vsub.s32 4, %v2931
  %v2956 = vsel %vm2871, %v2955, %v2931
  %v2957 = vsel %vm2870, %v287, %v2954
  %v2958 = vsel %vm2870, 0, %v2956
  %v2959 = vcosq.f32.pop %v2957
  %v2960 = vsinq.f32.pop %v2957
  %vm2961 = vweird.f32 %v287
  %v2962 = vand.u32 %v2958, 3
  %vm2963 = vcmp.lt.s32.totalorder %v2962, 2
  %vm2964 = vcmp.eq.s32.totalorder %v2962, 0
  %v2965 = vxor.u32 %v2960, 2147483648
  %v2966 = vsel %vm2964, %v2959, %v2965
  %vm2967 = vcmp.eq.s32.totalorder %v2962, 2
  %v2968 = vxor.u32 %v2959, 2147483648
  %v2969 = vsel %vm2967, %v2968, %v2960
  %v2970 = vsel %vm2963, %v2966, %v2969
  %v2971 = vsel %vm2961, nan, %v2970
  %v2972 = vand.u32 2147483647, %v288
  %vm2973 = vcmp.le.f32.partialorder %v2972, 0.7853982
  %vm2974 = vcmp.lt.s32.totalorder %v288, 0
  %v2975 = vand.u32 %v288, 2139095040
  %v2976 = vshrl.u32 %v2975, 23
  %v2977 = vsub.s32 %v2976, 127
  %v2978 = vand.u32 2147483647, %v288
  %v2979 = vand.u32 %v2978, 8388607
  %v2980 = vor.u32 %v2979, 8388608
  %v2981 = vsub.s32 0, %v2980
  %v2982 = vadd.s32 %v2977, 1
  %vm2983 = vcmp.gt.s32.totalorder %v2982, 0
  %v2984 = vsel %vm2983, %v2982, 0
  %v2985 = vshrl.u32 %v2984, 5
  %v2986 = vand.u32 %v2984, 31
  %v2987 = vsub.s32 32, %v2986
  %v2988 = vshrl.u32 683565275, %v2987
  %v2989 = vshll.u32 683565275, %v2986
  %v2990 = vshrl.u32 2475754826, %v2987
  %v2991 = vor.u32 %v2989, %v2990
  %v2992 = vshll.u32 2475754826, %v2986
  %v2993 = vshrl.u32 2131351028, %v2987
  %v2994 = vor.u32 %v2992, %v2993
  %v2995 = vshll.u32 2131351028, %v2986
  %v2996 = vshrl.u32 2102212464, %v2987
  %v2997 = vor.u32 %v2995, %v2996
  %v2998 = vshll.u32 2102212464, %v2986
  %v2999 = vshrl.u32 920167782, %v2987
  %v3000 = vor.u32 %v2998, %v2999
  %v3001 = vshll.u32 920167782, %v2986
  %v3002 = vshrl.u32 1326507024, %v2987
  %v3003 = vor.u32 %v3001, %v3002
  %vm3004 = vcmp.lt.s32.totalorder %v2985, 1
  %vm3005 = vcmp.lt.s32.totalorder %v2985, 2
  %vm3006 = vcmp.lt.s32.totalorder %v2985, 3
  %vm3007 = vcmp.lt.s32.totalorder %v2985, 4
  %v3008 = vsel %vm3004, %v2988, %v2991
  %v3009 = vsel %vm3007, %v2997, 2102212464
  %v3010 = vsel %vm3006, %v2994, %v3009
  %v3011 = vsel %vm3005, %v3008, %v3010
  %v3012 = vsel %vm3004, %v2991, %v2994
  %v3013 = vsel %vm3007, %v3000, 920167782
  %v3014 = vsel %vm3006, %v2997, %v3013
  %v3015 = vsel %vm3005, %v3012, %v3014
  %v3016 = vsel %vm3004, %v2994, %v2997
  %v3017 = vsel %vm3007, %v3003, 1326507024
  %v3018 = vsel %vm3006, %v3000, %v3017
  %v3019 = vsel %vm3005, %v3016, %v3018
  %v3020 = vshll.u32 %v2980, 8
  %v3021 = vmul.u32.u64.compose %v3020, %v3019
  %v3022 = vextract.low.u32 %v3021
  %v3023 = vextract.high.u32 %v3021
  %v3024 = vmul.u32.u64.compose %v3020, %v3015
  %v3025 = vextract.low.u32 %v3024
  %v3026 = vextract.high.u32 %v3024
  %v3027 = vmul.u32 %v3020, %v3011
  %v3028 = vadd.s32 %v3023, %v3025
  %vm3029 = vc.u32 %v3023, %v3025
  %v3030 = vadd.s32 %v3026, 1
  %v3031 = vsel %vm3029, %v3030, %v3026
  %v3032 = vadd.s32 %v3027, %v3031
  %v3033 = vadd.s32 %v3032, 536870912
  %v3034 = vshrl.u32 %v3033, 30
  %v3035 = vshll.u32 %v3034, 30
  %v3036 = vsub.s32 %v3032, %v3035
  %vm3037 = vcmp.lt.s32.totalorder %v3036, 0
  %v3038 = vsub.s32 0, %v3036
  %v3039 = vsel %vm3037, %v3038, %v3036
  %v3040 = vclz %v3039
  %v3041 = vsub.s32 %v3040, 2
  %vm3042 = vcmp.gt.s32.totalorder 0, %v3041
  %v3043 = vsel %vm3042, 0, %v3041
  %v3044 = vsub.s32 32, %v3043
  %v3045 = vshll.u32 %v3036, %v3043
  %v3046 = vshrl.u32 %v3028, %v3044
  %v3047 = vor.u32 %v3045, %v3046
  %v3048 = vsub.s32 4294967266, %v3043
  %v3049 = vadd.s32 %v3048, 127
  %v3050 = vshll.u32 %v3049, 23
  %v3051 = vor.u32 4788187, %v3050
  %v3052 = vand.u32 2147483647, %v3051
  %v3054 = vcvt.s32.f32 %v3047
  %v3055 = vmul.f32 %v3054, %v3052
  %v3056 = vxor.u32 %v3055, 2147483648
  %v3057 = vsel %vm2974, %v3056, %v3055
  %v3058 = vsub.s32 4, %v3034
  %v3059 = vsel %vm2974, %v3058, %v3034
  %v3060 = vsel %vm2973, %v288, %v3057
  %v3061 = vsel %vm2973, 0, %v3059
  %v3062 = vcosq.f32.pop %v3060
  %v3063 = vsinq.f32.pop %v3060
  %vm3064 = vweird.f32 %v288
  %v3065 = vand.u32 %v3061, 3
  %vm3066 = vcmp.lt.s32.totalorder %v3065, 2
  %vm3067 = vcmp.eq.s32.totalorder %v3065, 0
  %v3068 = vxor.u32 %v3063, 2147483648
  %v3069 = vsel %vm3067, %v3062, %v3068
  %vm3070 = vcmp.eq.s32.totalorder %v3065, 2
  %v3071 = vxor.u32 %v3062, 2147483648
  %v3072 = vsel %vm3070, %v3071, %v3063
  %v3073 = vsel %vm3066, %v3069, %v3072
  %v3074 = vsel %vm3064, nan, %v3073
  %v3075 = vand.u32 2147483647, %v289
  %vm3076 = vcmp.le.f32.partialorder %v3075, 0.7853982
  %vm3077 = vcmp.lt.s32.totalorder %v289, 0
  %v3078 = vand.u32 %v289, 2139095040
  %v3079 = vshrl.u32 %v3078, 23
  %v3080 = vsub.s32 %v3079, 127
  %v3081 = vand.u32 2147483647, %v289
  %v3082 = vand.u32 %v3081, 8388607
  %v3083 = vor.u32 %v3082, 8388608
  %v3084 = vsub.s32 0, %v3083
  %v3085 = vadd.s32 %v3080, 1
  %vm3086 = vcmp.gt.s32.totalorder %v3085, 0
  %v3087 = vsel %vm3086, %v3085, 0
  %v3088 = vshrl.u32 %v3087, 5
  %v3089 = vand.u32 %v3087, 31
  %v3090 = vsub.s32 32, %v3089
  %v3091 = vshrl.u32 683565275, %v3090
  %v3092 = vshll.u32 683565275, %v3089
  %v3093 = vshrl.u32 2475754826, %v3090
  %v3094 = vor.u32 %v3092, %v3093
  %v3095 = vshll.u32 2475754826, %v3089
  %v3096 = vshrl.u32 2131351028, %v3090
  %v3097 = vor.u32 %v3095, %v3096
  %v3098 = vshll.u32 2131351028, %v3089
  %v3099 = vshrl.u32 2102212464, %v3090
  %v3100 = vor.u32 %v3098, %v3099
  %v3101 = vshll.u32 2102212464, %v3089
  %v3102 = vshrl.u32 920167782, %v3090
  %v3103 = vor.u32 %v3101, %v3102
  %v3104 = vshll.u32 920167782, %v3089
  %v3105 = vshrl.u32 1326507024, %v3090
  %v3106 = vor.u32 %v3104, %v3105
  %vm3107 = vcmp.lt.s32.totalorder %v3088, 1
  %vm3108 = vcmp.lt.s32.totalorder %v3088, 2
  %vm3109 = vcmp.lt.s32.totalorder %v3088, 3
  %vm3110 = vcmp.lt.s32.totalorder %v3088, 4
  %v3111 = vsel %vm3107, %v3091, %v3094
  %v3112 = vsel %vm3110, %v3100, 2102212464
  %v3113 = vsel %vm3109, %v3097, %v3112
  %v3114 = vsel %vm3108, %v3111, %v3113
  %v3115 = vsel %vm3107, %v3094, %v3097
  %v3116 = vsel %vm3110, %v3103, 920167782
  %v3117 = vsel %vm3109, %v3100, %v3116
  %v3118 = vsel %vm3108, %v3115, %v3117
  %v3119 = vsel %vm3107, %v3097, %v3100
  %v3120 = vsel %vm3110, %v3106, 1326507024
  %v3121 = vsel %vm3109, %v3103, %v3120
  %v3122 = vsel %vm3108, %v3119, %v3121
  %v3123 = vshll.u32 %v3083, 8
  %v3124 = vmul.u32.u64.compose %v3123, %v3122
  %v3125 = vextract.low.u32 %v3124
  %v3126 = vextract.high.u32 %v3124
  %v3127 = vmul.u32.u64.compose %v3123, %v3118
  %v3128 = vextract.low.u32 %v3127
  %v3129 = vextract.high.u32 %v3127
  %v3130 = vmul.u32 %v3123, %v3114
  %v3131 = vadd.s32 %v3126, %v3128
  %vm3132 = vc.u32 %v3126, %v3128
  %v3133 = vadd.s32 %v3129, 1
  %v3134 = vsel %vm3132, %v3133, %v3129
  %v3135 = vadd.s32 %v3130, %v3134
  %v3136 = vadd.s32 %v3135, 536870912
  %v3137 = vshrl.u32 %v3136, 30
  %v3138 = vshll.u32 %v3137, 30
  %v3139 = vsub.s32 %v3135, %v3138
  %vm3140 = vcmp.lt.s32.totalorder %v3139, 0
  %v3141 = vsub.s32 0, %v3139
  %v3142 = vsel %vm3140, %v3141, %v3139
  %v3143 = vclz %v3142
  %v3144 = vsub.s32 %v3143, 2
  %vm3145 = vcmp.gt.s32.totalorder 0, %v3144
  %v3146 = vsel %vm3145, 0, %v3144
  %v3147 = vsub.s32 32, %v3146
  %v3148 = vshll.u32 %v3139, %v3146
  %v3149 = vshrl.u32 %v3131, %v3147
  %v3150 = vor.u32 %v3148, %v3149
  %v3151 = vsub.s32 4294967266, %v3146
  %v3152 = vadd.s32 %v3151, 127
  %v3153 = vshll.u32 %v3152, 23
  %v3154 = vor.u32 4788187, %v3153
  %v3155 = vand.u32 2147483647, %v3154
  %v3157 = vcvt.s32.f32 %v3150
  %v3158 = vmul.f32 %v3157, %v3155
  %v3159 = vxor.u32 %v3158, 2147483648
  %v3160 = vsel %vm3077, %v3159, %v3158
  %v3161 = vsub.s32 4, %v3137
  %v3162 = vsel %vm3077, %v3161, %v3137
  %v3163 = vsel %vm3076, %v289, %v3160
  %v3164 = vsel %vm3076, 0, %v3162
  %v3165 = vcosq.f32.pop %v3163
  %v3166 = vsinq.f32.pop %v3163
  %vm3167 = vweird.f32 %v289
  %v3168 = vand.u32 %v3164, 3
  %vm3169 = vcmp.lt.s32.totalorder %v3168, 2
  %vm3170 = vcmp.eq.s32.totalorder %v3168, 0
  %v3171 = vxor.u32 %v3166, 2147483648
  %v3172 = vsel %vm3170, %v3165, %v3171
  %vm3173 = vcmp.eq.s32.totalorder %v3168, 2
  %v3174 = vxor.u32 %v3165, 2147483648
  %v3175 = vsel %vm3173, %v3174, %v3166
  %v3176 = vsel %vm3169, %v3172, %v3175
  %v3177 = vsel %vm3167, nan, %v3176
  %v3178 = vand.u32 2147483647, %v290
  %vm3179 = vcmp.le.f32.partialorder %v3178, 0.7853982
  %vm3180 = vcmp.lt.s32.totalorder %v290, 0
  %v3181 = vand.u32 %v290, 2139095040
  %v3182 = vshrl.u32 %v3181, 23
  %v3183 = vsub.s32 %v3182, 127
  %v3184 = vand.u32 2147483647, %v290
  %v3185 = vand.u32 %v3184, 8388607
  %v3186 = vor.u32 %v3185, 8388608
  %v3187 = vsub.s32 0, %v3186
  %v3188 = vadd.s32 %v3183, 1
  %vm3189 = vcmp.gt.s32.totalorder %v3188, 0
  %v3190 = vsel %vm3189, %v3188, 0
  %v3191 = vshrl.u32 %v3190, 5
  %v3192 = vand.u32 %v3190, 31
  %v3193 = vsub.s32 32, %v3192
  %v3194 = vshrl.u32 683565275, %v3193
  %v3195 = vshll.u32 683565275, %v3192
  %v3196 = vshrl.u32 2475754826, %v3193
  %v3197 = vor.u32 %v3195, %v3196
  %v3198 = vshll.u32 2475754826, %v3192
  %v3199 = vshrl.u32 2131351028, %v3193
  %v3200 = vor.u32 %v3198, %v3199
  %v3201 = vshll.u32 2131351028, %v3192
  %v3202 = vshrl.u32 2102212464, %v3193
  %v3203 = vor.u32 %v3201, %v3202
  %v3204 = vshll.u32 2102212464, %v3192
  %v3205 = vshrl.u32 920167782, %v3193
  %v3206 = vor.u32 %v3204, %v3205
  %v3207 = vshll.u32 920167782, %v3192
  %v3208 = vshrl.u32 1326507024, %v3193
  %v3209 = vor.u32 %v3207, %v3208
  %vm3210 = vcmp.lt.s32.totalorder %v3191, 1
  %vm3211 = vcmp.lt.s32.totalorder %v3191, 2
  %vm3212 = vcmp.lt.s32.totalorder %v3191, 3
  %vm3213 = vcmp.lt.s32.totalorder %v3191, 4
  %v3214 = vsel %vm3210, %v3194, %v3197
  %v3215 = vsel %vm3213, %v3203, 2102212464
  %v3216 = vsel %vm3212, %v3200, %v3215
  %v3217 = vsel %vm3211, %v3214, %v3216
  %v3218 = vsel %vm3210, %v3197, %v3200
  %v3219 = vsel %vm3213, %v3206, 920167782
  %v3220 = vsel %vm3212, %v3203, %v3219
  %v3221 = vsel %vm3211, %v3218, %v3220
  %v3222 = vsel %vm3210, %v3200, %v3203
  %v3223 = vsel %vm3213, %v3209, 1326507024
  %v3224 = vsel %vm3212, %v3206, %v3223
  %v3225 = vsel %vm3211, %v3222, %v3224
  %v3226 = vshll.u32 %v3186, 8
  %v3227 = vmul.u32.u64.compose %v3226, %v3225
  %v3228 = vextract.low.u32 %v3227
  %v3229 = vextract.high.u32 %v3227
  %v3230 = vmul.u32.u64.compose %v3226, %v3221
  %v3231 = vextract.low.u32 %v3230
  %v3232 = vextract.high.u32 %v3230
  %v3233 = vmul.u32 %v3226, %v3217
  %v3234 = vadd.s32 %v3229, %v3231
  %vm3235 = vc.u32 %v3229, %v3231
  %v3236 = vadd.s32 %v3232, 1
  %v3237 = vsel %vm3235, %v3236, %v3232
  %v3238 = vadd.s32 %v3233, %v3237
  %v3239 = vadd.s32 %v3238, 536870912
  %v3240 = vshrl.u32 %v3239, 30
  %v3241 = vshll.u32 %v3240, 30
  %v3242 = vsub.s32 %v3238, %v3241
  %vm3243 = vcmp.lt.s32.totalorder %v3242, 0
  %v3244 = vsub.s32 0, %v3242
  %v3245 = vsel %vm3243, %v3244, %v3242
  %v3246 = vclz %v3245
  %v3247 = vsub.s32 %v3246, 2
  %vm3248 = vcmp.gt.s32.totalorder 0, %v3247
  %v3249 = vsel %vm3248, 0, %v3247
  %v3250 = vsub.s32 32, %v3249
  %v3251 = vshll.u32 %v3242, %v3249
  %v3252 = vshrl.u32 %v3234, %v3250
  %v3253 = vor.u32 %v3251, %v3252
  %v3254 = vsub.s32 4294967266, %v3249
  %v3255 = vadd.s32 %v3254, 127
  %v3256 = vshll.u32 %v3255, 23
  %v3257 = vor.u32 4788187, %v3256
  %v3258 = vand.u32 2147483647, %v3257
  %v3260 = vcvt.s32.f32 %v3253
  %v3261 = vmul.f32 %v3260, %v3258
  %v3262 = vxor.u32 %v3261, 2147483648
  %v3263 = vsel %vm3180, %v3262, %v3261
  %v3264 = vsub.s32 4, %v3240
  %v3265 = vsel %vm3180, %v3264, %v3240
  %v3266 = vsel %vm3179, %v290, %v3263
  %v3267 = vsel %vm3179, 0, %v3265
  %v3268 = vcosq.f32.pop %v3266
  %v3269 = vsinq.f32.pop %v3266
  %vm3270 = vweird.f32 %v290
  %v3271 = vand.u32 %v3267, 3
  %vm3272 = vcmp.lt.s32.totalorder %v3271, 2
  %vm3273 = vcmp.eq.s32.totalorder %v3271, 0
  %v3274 = vxor.u32 %v3269, 2147483648
  %v3275 = vsel %vm3273, %v3268, %v3274
  %vm3276 = vcmp.eq.s32.totalorder %v3271, 2
  %v3277 = vxor.u32 %v3268, 2147483648
  %v3278 = vsel %vm3276, %v3277, %v3269
  %v3279 = vsel %vm3272, %v3275, %v3278
  %v3280 = vsel %vm3270, nan, %v3279
  %v3281 = vand.u32 2147483647, %v291
  %vm3282 = vcmp.le.f32.partialorder %v3281, 0.7853982
  %vm3283 = vcmp.lt.s32.totalorder %v291, 0
  %v3284 = vand.u32 %v291, 2139095040
  %v3285 = vshrl.u32 %v3284, 23
  %v3286 = vsub.s32 %v3285, 127
  %v3287 = vand.u32 2147483647, %v291
  %v3288 = vand.u32 %v3287, 8388607
  %v3289 = vor.u32 %v3288, 8388608
  %v3290 = vsub.s32 0, %v3289
  %v3291 = vadd.s32 %v3286, 1
  %vm3292 = vcmp.gt.s32.totalorder %v3291, 0
  %v3293 = vsel %vm3292, %v3291, 0
  %v3294 = vshrl.u32 %v3293, 5
  %v3295 = vand.u32 %v3293, 31
  %v3296 = vsub.s32 32, %v3295
  %v3297 = vshrl.u32 683565275, %v3296
  %v3298 = vshll.u32 683565275, %v3295
  %v3299 = vshrl.u32 2475754826, %v3296
  %v3300 = vor.u32 %v3298, %v3299
  %v3301 = vshll.u32 2475754826, %v3295
  %v3302 = vshrl.u32 2131351028, %v3296
  %v3303 = vor.u32 %v3301, %v3302
  %v3304 = vshll.u32 2131351028, %v3295
  %v3305 = vshrl.u32 2102212464, %v3296
  %v3306 = vor.u32 %v3304, %v3305
  %v3307 = vshll.u32 2102212464, %v3295
  %v3308 = vshrl.u32 920167782, %v3296
  %v3309 = vor.u32 %v3307, %v3308
  %v3310 = vshll.u32 920167782, %v3295
  %v3311 = vshrl.u32 1326507024, %v3296
  %v3312 = vor.u32 %v3310, %v3311
  %vm3313 = vcmp.lt.s32.totalorder %v3294, 1
  %vm3314 = vcmp.lt.s32.totalorder %v3294, 2
  %vm3315 = vcmp.lt.s32.totalorder %v3294, 3
  %vm3316 = vcmp.lt.s32.totalorder %v3294, 4
  %v3317 = vsel %vm3313, %v3297, %v3300
  %v3318 = vsel %vm3316, %v3306, 2102212464
  %v3319 = vsel %vm3315, %v3303, %v3318
  %v3320 = vsel %vm3314, %v3317, %v3319
  %v3321 = vsel %vm3313, %v3300, %v3303
  %v3322 = vsel %vm3316, %v3309, 920167782
  %v3323 = vsel %vm3315, %v3306, %v3322
  %v3324 = vsel %vm3314, %v3321, %v3323
  %v3325 = vsel %vm3313, %v3303, %v3306
  %v3326 = vsel %vm3316, %v3312, 1326507024
  %v3327 = vsel %vm3315, %v3309, %v3326
  %v3328 = vsel %vm3314, %v3325, %v3327
  %v3329 = vshll.u32 %v3289, 8
  %v3330 = vmul.u32.u64.compose %v3329, %v3328
  %v3331 = vextract.low.u32 %v3330
  %v3332 = vextract.high.u32 %v3330
  %v3333 = vmul.u32.u64.compose %v3329, %v3324
  %v3334 = vextract.low.u32 %v3333
  %v3335 = vextract.high.u32 %v3333
  %v3336 = vmul.u32 %v3329, %v3320
  %v3337 = vadd.s32 %v3332, %v3334
  %vm3338 = vc.u32 %v3332, %v3334
  %v3339 = vadd.s32 %v3335, 1
  %v3340 = vsel %vm3338, %v3339, %v3335
  %v3341 = vadd.s32 %v3336, %v3340
  %v3342 = vadd.s32 %v3341, 536870912
  %v3343 = vshrl.u32 %v3342, 30
  %v3344 = vshll.u32 %v3343, 30
  %v3345 = vsub.s32 %v3341, %v3344
  %vm3346 = vcmp.lt.s32.totalorder %v3345, 0
  %v3347 = vsub.s32 0, %v3345
  %v3348 = vsel %vm3346, %v3347, %v3345
  %v3349 = vclz %v3348
  %v3350 = vsub.s32 %v3349, 2
  %vm3351 = vcmp.gt.s32.totalorder 0, %v3350
  %v3352 = vsel %vm3351, 0, %v3350
  %v3353 = vsub.s32 32, %v3352
  %v3354 = vshll.u32 %v3345, %v3352
  %v3355 = vshrl.u32 %v3337, %v3353
  %v3356 = vor.u32 %v3354, %v3355
  %v3357 = vsub.s32 4294967266, %v3352
  %v3358 = vadd.s32 %v3357, 127
  %v3359 = vshll.u32 %v3358, 23
  %v3360 = vor.u32 4788187, %v3359
  %v3361 = vand.u32 2147483647, %v3360
  %v3363 = vcvt.s32.f32 %v3356
  %v3364 = vmul.f32 %v3363, %v3361
  %v3365 = vxor.u32 %v3364, 2147483648
  %v3366 = vsel %vm3283, %v3365, %v3364
  %v3367 = vsub.s32 4, %v3343
  %v3368 = vsel %vm3283, %v3367, %v3343
  %v3369 = vsel %vm3282, %v291, %v3366
  %v3370 = vsel %vm3282, 0, %v3368
  %v3371 = vcosq.f32.pop %v3369
  %v3372 = vsinq.f32.pop %v3369
  %vm3373 = vweird.f32 %v291
  %v3374 = vand.u32 %v3370, 3
  %vm3375 = vcmp.lt.s32.totalorder %v3374, 2
  %vm3376 = vcmp.eq.s32.totalorder %v3374, 0
  %v3377 = vxor.u32 %v3372, 2147483648
  %v3378 = vsel %vm3376, %v3371, %v3377
  %vm3379 = vcmp.eq.s32.totalorder %v3374, 2
  %v3380 = vxor.u32 %v3371, 2147483648
  %v3381 = vsel %vm3379, %v3380, %v3372
  %v3382 = vsel %vm3375, %v3378, %v3381
  %v3383 = vsel %vm3373, nan, %v3382
  %v3384 = vand.u32 2147483647, %v292
  %vm3385 = vcmp.le.f32.partialorder %v3384, 0.7853982
  %vm3386 = vcmp.lt.s32.totalorder %v292, 0
  %v3387 = vand.u32 %v292, 2139095040
  %v3388 = vshrl.u32 %v3387, 23
  %v3389 = vsub.s32 %v3388, 127
  %v3390 = vand.u32 2147483647, %v292
  %v3391 = vand.u32 %v3390, 8388607
  %v3392 = vor.u32 %v3391, 8388608
  %v3393 = vsub.s32 0, %v3392
  %v3394 = vadd.s32 %v3389, 1
  %vm3395 = vcmp.gt.s32.totalorder %v3394, 0
  %v3396 = vsel %vm3395, %v3394, 0
  %v3397 = vshrl.u32 %v3396, 5
  %v3398 = vand.u32 %v3396, 31
  %v3399 = vsub.s32 32, %v3398
  %v3400 = vshrl.u32 683565275, %v3399
  %v3401 = vshll.u32 683565275, %v3398
  %v3402 = vshrl.u32 2475754826, %v3399
  %v3403 = vor.u32 %v3401, %v3402
  %v3404 = vshll.u32 2475754826, %v3398
  %v3405 = vshrl.u32 2131351028, %v3399
  %v3406 = vor.u32 %v3404, %v3405
  %v3407 = vshll.u32 2131351028, %v3398
  %v3408 = vshrl.u32 2102212464, %v3399
  %v3409 = vor.u32 %v3407, %v3408
  %v3410 = vshll.u32 2102212464, %v3398
  %v3411 = vshrl.u32 920167782, %v3399
  %v3412 = vor.u32 %v3410, %v3411
  %v3413 = vshll.u32 920167782, %v3398
  %v3414 = vshrl.u32 1326507024, %v3399
  %v3415 = vor.u32 %v3413, %v3414
  %vm3416 = vcmp.lt.s32.totalorder %v3397, 1
  %vm3417 = vcmp.lt.s32.totalorder %v3397, 2
  %vm3418 = vcmp.lt.s32.totalorder %v3397, 3
  %vm3419 = vcmp.lt.s32.totalorder %v3397, 4
  %v3420 = vsel %vm3416, %v3400, %v3403
  %v3421 = vsel %vm3419, %v3409, 2102212464
  %v3422 = vsel %vm3418, %v3406, %v3421
  %v3423 = vsel %vm3417, %v3420, %v3422
  %v3424 = vsel %vm3416, %v3403, %v3406
  %v3425 = vsel %vm3419, %v3412, 920167782
  %v3426 = vsel %vm3418, %v3409, %v3425
  %v3427 = vsel %vm3417, %v3424, %v3426
  %v3428 = vsel %vm3416, %v3406, %v3409
  %v3429 = vsel %vm3419, %v3415, 1326507024
  %v3430 = vsel %vm3418, %v3412, %v3429
  %v3431 = vsel %vm3417, %v3428, %v3430
  %v3432 = vshll.u32 %v3392, 8
  %v3433 = vmul.u32.u64.compose %v3432, %v3431
  %v3434 = vextract.low.u32 %v3433
  %v3435 = vextract.high.u32 %v3433
  %v3436 = vmul.u32.u64.compose %v3432, %v3427
  %v3437 = vextract.low.u32 %v3436
  %v3438 = vextract.high.u32 %v3436
  %v3439 = vmul.u32 %v3432, %v3423
  %v3440 = vadd.s32 %v3435, %v3437
  %vm3441 = vc.u32 %v3435, %v3437
  %v3442 = vadd.s32 %v3438, 1
  %v3443 = vsel %vm3441, %v3442, %v3438
  %v3444 = vadd.s32 %v3439, %v3443
  %v3445 = vadd.s32 %v3444, 536870912
  %v3446 = vshrl.u32 %v3445, 30
  %v3447 = vshll.u32 %v3446, 30
  %v3448 = vsub.s32 %v3444, %v3447
  %vm3449 = vcmp.lt.s32.totalorder %v3448, 0
  %v3450 = vsub.s32 0, %v3448
  %v3451 = vsel %vm3449, %v3450, %v3448
  %v3452 = vclz %v3451
  %v3453 = vsub.s32 %v3452, 2
  %vm3454 = vcmp.gt.s32.totalorder 0, %v3453
  %v3455 = vsel %vm3454, 0, %v3453
  %v3456 = vsub.s32 32, %v3455
  %v3457 = vshll.u32 %v3448, %v3455
  %v3458 = vshrl.u32 %v3440, %v3456
  %v3459 = vor.u32 %v3457, %v3458
  %v3460 = vsub.s32 4294967266, %v3455
  %v3461 = vadd.s32 %v3460, 127
  %v3462 = vshll.u32 %v3461, 23
  %v3463 = vor.u32 4788187, %v3462
  %v3464 = vand.u32 2147483647, %v3463
  %v3466 = vcvt.s32.f32 %v3459
  %v3467 = vmul.f32 %v3466, %v3464
  %v3468 = vxor.u32 %v3467, 2147483648
  %v3469 = vsel %vm3386, %v3468, %v3467
  %v3470 = vsub.s32 4, %v3446
  %v3471 = vsel %vm3386, %v3470, %v3446
  %v3472 = vsel %vm3385, %v292, %v3469
  %v3473 = vsel %vm3385, 0, %v3471
  %v3474 = vcosq.f32.pop %v3472
  %v3475 = vsinq.f32.pop %v3472
  %vm3476 = vweird.f32 %v292
  %v3477 = vand.u32 %v3473, 3
  %vm3478 = vcmp.lt.s32.totalorder %v3477, 2
  %vm3479 = vcmp.eq.s32.totalorder %v3477, 0
  %v3480 = vxor.u32 %v3475, 2147483648
  %v3481 = vsel %vm3479, %v3474, %v3480
  %vm3482 = vcmp.eq.s32.totalorder %v3477, 2
  %v3483 = vxor.u32 %v3474, 2147483648
  %v3484 = vsel %vm3482, %v3483, %v3475
  %v3485 = vsel %vm3478, %v3481, %v3484
  %v3486 = vsel %vm3476, nan, %v3485
  %v3487 = vand.u32 2147483647, %v293
  %vm3488 = vcmp.le.f32.partialorder %v3487, 0.7853982
  %vm3489 = vcmp.lt.s32.totalorder %v293, 0
  %v3490 = vand.u32 %v293, 2139095040
  %v3491 = vshrl.u32 %v3490, 23
  %v3492 = vsub.s32 %v3491, 127
  %v3493 = vand.u32 2147483647, %v293
  %v3494 = vand.u32 %v3493, 8388607
  %v3495 = vor.u32 %v3494, 8388608
  %v3496 = vsub.s32 0, %v3495
  %v3497 = vadd.s32 %v3492, 1
  %vm3498 = vcmp.gt.s32.totalorder %v3497, 0
  %v3499 = vsel %vm3498, %v3497, 0
  %v3500 = vshrl.u32 %v3499, 5
  %v3501 = vand.u32 %v3499, 31
  %v3502 = vsub.s32 32, %v3501
  %v3503 = vshrl.u32 683565275, %v3502
  %v3504 = vshll.u32 683565275, %v3501
  %v3505 = vshrl.u32 2475754826, %v3502
  %v3506 = vor.u32 %v3504, %v3505
  %v3507 = vshll.u32 2475754826, %v3501
  %v3508 = vshrl.u32 2131351028, %v3502
  %v3509 = vor.u32 %v3507, %v3508
  %v3510 = vshll.u32 2131351028, %v3501
  %v3511 = vshrl.u32 2102212464, %v3502
  %v3512 = vor.u32 %v3510, %v3511
  %v3513 = vshll.u32 2102212464, %v3501
  %v3514 = vshrl.u32 920167782, %v3502
  %v3515 = vor.u32 %v3513, %v3514
  %v3516 = vshll.u32 920167782, %v3501
  %v3517 = vshrl.u32 1326507024, %v3502
  %v3518 = vor.u32 %v3516, %v3517
  %vm3519 = vcmp.lt.s32.totalorder %v3500, 1
  %vm3520 = vcmp.lt.s32.totalorder %v3500, 2
  %vm3521 = vcmp.lt.s32.totalorder %v3500, 3
  %vm3522 = vcmp.lt.s32.totalorder %v3500, 4
  %v3523 = vsel %vm3519, %v3503, %v3506
  %v3524 = vsel %vm3522, %v3512, 2102212464
  %v3525 = vsel %vm3521, %v3509, %v3524
  %v3526 = vsel %vm3520, %v3523, %v3525
  %v3527 = vsel %vm3519, %v3506, %v3509
  %v3528 = vsel %vm3522, %v3515, 920167782
  %v3529 = vsel %vm3521, %v3512, %v3528
  %v3530 = vsel %vm3520, %v3527, %v3529
  %v3531 = vsel %vm3519, %v3509, %v3512
  %v3532 = vsel %vm3522, %v3518, 1326507024
  %v3533 = vsel %vm3521, %v3515, %v3532
  %v3534 = vsel %vm3520, %v3531, %v3533
  %v3535 = vshll.u32 %v3495, 8
  %v3536 = vmul.u32.u64.compose %v3535, %v3534
  %v3537 = vextract.low.u32 %v3536
  %v3538 = vextract.high.u32 %v3536
  %v3539 = vmul.u32.u64.compose %v3535, %v3530
  %v3540 = vextract.low.u32 %v3539
  %v3541 = vextract.high.u32 %v3539
  %v3542 = vmul.u32 %v3535, %v3526
  %v3543 = vadd.s32 %v3538, %v3540
  %vm3544 = vc.u32 %v3538, %v3540
  %v3545 = vadd.s32 %v3541, 1
  %v3546 = vsel %vm3544, %v3545, %v3541
  %v3547 = vadd.s32 %v3542, %v3546
  %v3548 = vadd.s32 %v3547, 536870912
  %v3549 = vshrl.u32 %v3548, 30
  %v3550 = vshll.u32 %v3549, 30
  %v3551 = vsub.s32 %v3547, %v3550
  %vm3552 = vcmp.lt.s32.totalorder %v3551, 0
  %v3553 = vsub.s32 0, %v3551
  %v3554 = vsel %vm3552, %v3553, %v3551
  %v3555 = vclz %v3554
  %v3556 = vsub.s32 %v3555, 2
  %vm3557 = vcmp.gt.s32.totalorder 0, %v3556
  %v3558 = vsel %vm3557, 0, %v3556
  %v3559 = vsub.s32 32, %v3558
  %v3560 = vshll.u32 %v3551, %v3558
  %v3561 = vshrl.u32 %v3543, %v3559
  %v3562 = vor.u32 %v3560, %v3561
  %v3563 = vsub.s32 4294967266, %v3558
  %v3564 = vadd.s32 %v3563, 127
  %v3565 = vshll.u32 %v3564, 23
  %v3566 = vor.u32 4788187, %v3565
  %v3567 = vand.u32 2147483647, %v3566
  %v3569 = vcvt.s32.f32 %v3562
  %v3570 = vmul.f32 %v3569, %v3567
  %v3571 = vxor.u32 %v3570, 2147483648
  %v3572 = vsel %vm3489, %v3571, %v3570
  %v3573 = vsub.s32 4, %v3549
  %v3574 = vsel %vm3489, %v3573, %v3549
  %v3575 = vsel %vm3488, %v293, %v3572
  %v3576 = vsel %vm3488, 0, %v3574
  %v3577 = vcosq.f32.pop %v3575
  %v3578 = vsinq.f32.pop %v3575
  %vm3579 = vweird.f32 %v293
  %v3580 = vand.u32 %v3576, 3
  %vm3581 = vcmp.lt.s32.totalorder %v3580, 2
  %vm3582 = vcmp.eq.s32.totalorder %v3580, 0
  %v3583 = vxor.u32 %v3578, 2147483648
  %v3584 = vsel %vm3582, %v3577, %v3583
  %vm3585 = vcmp.eq.s32.totalorder %v3580, 2
  %v3586 = vxor.u32 %v3577, 2147483648
  %v3587 = vsel %vm3585, %v3586, %v3578
  %v3588 = vsel %vm3581, %v3584, %v3587
  %v3589 = vsel %vm3579, nan, %v3588
  %v3590 = vld [vmem:[%s1] sm:$0xff]
  %v3591 = vld [vmem:[%s1 + $0x8] sm:$0xff]
  %v3592 = vld [vmem:[%s1 + $0x10] sm:$0xff]
  %v3593 = vld [vmem:[%s1 + $0x18] sm:$0xff]
  %v3594 = vld [vmem:[%s1 + $0x20] sm:$0xff]
  %v3595 = vld [vmem:[%s1 + $0x28] sm:$0xff]
  %v3596 = vld [vmem:[%s1 + $0x30] sm:$0xff]
  %v3597 = vld [vmem:[%s1 + $0x38] sm:$0xff]
  %v3598 = vld [vmem:[%s1 + $0x40] sm:$0xff]
  %v3599 = vld [vmem:[%s1 + $0x48] sm:$0xff]
  %v3600 = vld [vmem:[%s1 + $0x50] sm:$0xff]
  %v3601 = vld [vmem:[%s1 + $0x58] sm:$0xff]
  %v3602 = vld [vmem:[%s1 + $0x60] sm:$0xff]
  %v3603 = vld [vmem:[%s1 + $0x68] sm:$0xff]
  %v3604 = vld [vmem:[%s1 + $0x70] sm:$0xff]
  %v3605 = vld [vmem:[%s1 + $0x78] sm:$0xff]
  %v3606 = vld [vmem:[%s1 + $0x80] sm:$0xff]
  %v3607 = vld [vmem:[%s1 + $0x88] sm:$0xff]
  %v3608 = vld [vmem:[%s1 + $0x90] sm:$0xff]
  %v3609 = vld [vmem:[%s1 + $0x98] sm:$0xff]
  %v3610 = vld [vmem:[%s1 + $0xa0] sm:$0xff]
  %v3611 = vld [vmem:[%s1 + $0xa8] sm:$0xff]
  %v3612 = vld [vmem:[%s1 + $0xb0] sm:$0xff]
  %v3613 = vld [vmem:[%s1 + $0xb8] sm:$0xff]
  %v3614 = vld [vmem:[%s1 + $0xc0] sm:$0xff]
  %v3615 = vld [vmem:[%s1 + $0xc8] sm:$0xff]
  %v3616 = vld [vmem:[%s1 + $0xd0] sm:$0xff]
  %v3617 = vld [vmem:[%s1 + $0xd8] sm:$0xff]
  %v3618 = vld [vmem:[%s1 + $0xe0] sm:$0xff]
  %v3619 = vld [vmem:[%s1 + $0xe8] sm:$0xff]
  %v3620 = vld [vmem:[%s1 + $0xf0] sm:$0xff]
  %v3621 = vld [vmem:[%s1 + $0xf8] sm:$0xff]
  %v3622 = vld [vmem:[%s3] sm:$0xff]
  %v3623 = vld [vmem:[%s3 + $0x8] sm:$0xff]
  %v3624 = vld [vmem:[%s3 + $0x10] sm:$0xff]
  %v3625 = vld [vmem:[%s3 + $0x18] sm:$0xff]
  %v3626 = vld [vmem:[%s4] sm:$0xff]
  %vm3627 = vcmask 64512
  %v3629 = vsel %vm3627, %v396, 0
  %v3632 = vsel %vm3627, %v499, 0
  %v3635 = vsel %vm3627, %v602, 0
  %v3638 = vsel %vm3627, %v705, 0
  %v3641 = vsel %vm3627, %v808, 0
  %v3644 = vsel %vm3627, %v911, 0
  %v3647 = vsel %vm3627, %v1014, 0
  %v3650 = vsel %vm3627, %v1117, 0
  %v3653 = vsel %vm3627, %v1220, 0
  %v3656 = vsel %vm3627, %v1323, 0
  %v3659 = vsel %vm3627, %v1426, 0
  %v3662 = vsel %vm3627, %v1529, 0
  %v3665 = vsel %vm3627, %v1632, 0
  %v3668 = vsel %vm3627, %v1735, 0
  %v3671 = vsel %vm3627, %v1838, 0
  %v3674 = vsel %vm3627, %v1941, 0
  %v3677 = vsel %vm3627, %v2044, 0
  %v3680 = vsel %vm3627, %v2147, 0
  %v3683 = vsel %vm3627, %v2250, 0
  %v3686 = vsel %vm3627, %v2353, 0
  %v3689 = vsel %vm3627, %v2456, 0
  %v3692 = vsel %vm3627, %v2559, 0
  %v3695 = vsel %vm3627, %v2662, 0
  %v3698 = vsel %vm3627, %v2765, 0
  %v3701 = vsel %vm3627, %v2868, 0
  %v3704 = vsel %vm3627, %v2971, 0
  %v3707 = vsel %vm3627, %v3074, 0
  %v3710 = vsel %vm3627, %v3177, 0
  %v3713 = vsel %vm3627, %v3280, 0
  %v3716 = vsel %vm3627, %v3383, 0
  %v3719 = vsel %vm3627, %v3486, 0
  %v3722 = vsel %vm3627, %v3589, 0
  %3724 = vmatprep.subr.mxu0 0.0
  %3725 = vmatpush1.msra.mxu0 %v3626
  %3726 = vmatprep.subr.mxu0 0.0
  %3727 = vmatpush1.msra.mxu0 0.0
  %3728 = vmatprep.subr.mxu0 0.0
  %3729 = vmatpush1.msra.mxu0 0.0
  %3730 = vmatprep.subr.mxu0 0.0
  %3731 = vmatpush1.msra.mxu0 0.0
  %3732 = vmatprep.subr.mxu0 0.0
  %3733 = vmatpush1.msra.mxu0 0.0
  %3734 = vmatprep.subr.mxu0 0.0
  %3735 = vmatpush1.msra.mxu0 0.0
  %3736 = vmatprep.subr.mxu0 0.0
  %3737 = vmatpush1.msra.mxu0 0.0
  %3738 = vmatprep.subr.mxu0 0.0
  %3739 = vmatpush1.msra.mxu0 0.0
  %3740 = vmatprep.subr.mxu0 0.0
  %3741 = vmatpush1.msra.mxu0 0.0
  %3742 = vmatprep.subr.mxu0 0.0
  %3743 = vmatpush1.msra.mxu0 0.0
  %3744 = vmatprep.subr.mxu0 0.0
  %3745 = vmatpush1.msra.mxu0 0.0
  %3746 = vmatprep.subr.mxu0 0.0
  %3747 = vmatpush1.msra.mxu0 0.0
  %3748 = vmatprep.subr.mxu0 0.0
  %3749 = vmatpush1.msra.mxu0 0.0
  %3750 = vmatprep.subr.mxu0 0.0
  %3751 = vmatpush1.msra.mxu0 0.0
  %3752 = vmatprep.subr.mxu0 0.0
  %3753 = vmatpush1.msra.mxu0 0.0
  %3754 = vmatprep.subr.mxu0 0.0
  %3755 = vmatpush1.msra.mxu0 0.0
  %3756 = vmatprep.subr.mxu0 0.0
  %3757 = vmatpush1.msra.mxu0 0.0
  %3758 = vmatprep.subr.mxu0 0.0
  %3759 = vmatpush1.msra.mxu0 0.0
  %3760 = vmatprep.subr.mxu0 0.0
  %3761 = vmatpush1.msra.mxu0 0.0
  %3762 = vmatprep.subr.mxu0 0.0
  %3763 = vmatpush1.msra.mxu0 0.0
  %3764 = vmatprep.subr.mxu0 0.0
  %3765 = vmatpush1.msra.mxu0 0.0
  %3766 = vmatprep.subr.mxu0 0.0
  %3767 = vmatpush1.msra.mxu0 0.0
  %3768 = vmatprep.subr.mxu0 0.0
  %3769 = vmatpush1.msra.mxu0 0.0
  %3770 = vmatprep.subr.mxu0 0.0
  %3771 = vmatpush1.msra.mxu0 0.0
  %3772 = vmatprep.subr.mxu0 0.0
  %3773 = vmatpush1.msra.mxu0 0.0
  %3774 = vmatprep.subr.mxu0 0.0
  %3775 = vmatpush1.msra.mxu0 0.0
  %3776 = vmatprep.subr.mxu0 0.0
  %3777 = vmatpush1.msra.mxu0 0.0
  %3778 = vmatprep.subr.mxu0 0.0
  %3779 = vmatpush1.msra.mxu0 0.0
  %3780 = vmatprep.subr.mxu0 0.0
  %3781 = vmatpush1.msra.mxu0 0.0
  %3782 = vmatprep.subr.mxu0 0.0
  %3783 = vmatpush1.msra.mxu0 0.0
  %3784 = vmatprep.subr.mxu0 0.0
  %3785 = vmatpush1.msra.mxu0 0.0
  %3786 = vmatprep.subr.mxu0 0.0
  %3787 = vmatpush1.msra.mxu0 0.0
  %3788 = vmatprep.mubr.f32.mxu0 0.0
  %3789 = vmatmul.mubr.f32.gmra.mrb[0].mxu0 %v3629
  %v3790 = vpop.f32.mrb[0].mxu0
  %v3791 = vadd.f32 0.0, %v3790
  %v3792 = vpop.f32.mrb[0].mxu0
  %3793 = vmatprep.mubr.f32.mxu0 0.0
  %3794 = vmatmul.mubr.f32.gmra.mrb[0].mxu0 %v3632
  %v3795 = vpop.f32.mrb[0].mxu0
  %v3796 = vadd.f32 0.0, %v3795
  %v3797 = vpop.f32.mrb[0].mxu0
  %3798 = vmatprep.mubr.f32.mxu0 0.0
  %3799 = vmatmul.mubr.f32.gmra.mrb[0].mxu0 %v3635
  %v3800 = vpop.f32.mrb[0].mxu0
  %v3801 = vadd.f32 0.0, %v3800
  %v3802 = vpop.f32.mrb[0].mxu0
  %3803 = vmatprep.mubr.f32.mxu0 0.0
  %3804 = vmatmul.mubr.f32.gmra.mrb[0].mxu0 %v3638
  %v3805 = vpop.f32.mrb[0].mxu0
  %v3806 = vadd.f32 0.0, %v3805
  %v3807 = vpop.f32.mrb[0].mxu0
  %3808 = vmatprep.mubr.f32.mxu0 0.0
  %3809 = vmatmul.mubr.f32.gmra.mrb[0].mxu0 %v3641
  %v3810 = vpop.f32.mrb[0].mxu0
  %v3811 = vadd.f32 0.0, %v3810
  %v3812 = vpop.f32.mrb[0].mxu0
  %3813 = vmatprep.mubr.f32.mxu0 0.0
  %3814 = vmatmul.mubr.f32.gmra.mrb[0].mxu0 %v3644
  %v3815 = vpop.f32.mrb[0].mxu0
  %v3816 = vadd.f32 0.0, %v3815
  %v3817 = vpop.f32.mrb[0].mxu0
  %3818 = vmatprep.mubr.f32.mxu0 0.0
  %3819 = vmatmul.mubr.f32.gmra.mrb[0].mxu0 %v3647
  %v3820 = vpop.f32.mrb[0].mxu0
  %v3821 = vadd.f32 0.0, %v3820
  %v3822 = vpop.f32.mrb[0].mxu0
  %3823 = vmatprep.mubr.f32.mxu0 0.0
  %3824 = vmatmul.mubr.f32.gmra.mrb[0].mxu0 %v3650
  %v3825 = vpop.f32.mrb[0].mxu0
  %v3826 = vadd.f32 0.0, %v3825
  %v3827 = vpop.f32.mrb[0].mxu0
  %3828 = vmatprep.mubr.f32.mxu0 0.0
  %3829 = vmatmul.mubr.f32.gmra.mrb[0].mxu0 %v3653
  %v3830 = vpop.f32.mrb[0].mxu0
  %v3831 = vadd.f32 0.0, %v3830
  %v3832 = vpop.f32.mrb[0].mxu0
  %3833 = vmatprep.mubr.f32.mxu0 0.0
  %3834 = vmatmul.mubr.f32.gmra.mrb[0].mxu0 %v3656
  %v3835 = vpop.f32.mrb[0].mxu0
  %v3836 = vadd.f32 0.0, %v3835
  %v3837 = vpop.f32.mrb[0].mxu0
  %3838 = vmatprep.mubr.f32.mxu0 0.0
  %3839 = vmatmul.mubr.f32.gmra.mrb[0].mxu0 %v3659
  %v3840 = vpop.f32.mrb[0].mxu0
  %v3841 = vadd.f32 0.0, %v3840
  %v3842 = vpop.f32.mrb[0].mxu0
  %3843 = vmatprep.mubr.f32.mxu0 0.0
  %3844 = vmatmul.mubr.f32.gmra.mrb[0].mxu0 %v3662
  %v3845 = vpop.f32.mrb[0].mxu0
  %v3846 = vadd.f32 0.0, %v3845
  %v3847 = vpop.f32.mrb[0].mxu0
  %3848 = vmatprep.mubr.f32.mxu0 0.0
  %3849 = vmatmul.mubr.f32.gmra.mrb[0].mxu0 %v3665
  %v3850 = vpop.f32.mrb[0].mxu0
  %v3851 = vadd.f32 0.0, %v3850
  %v3852 = vpop.f32.mrb[0].mxu0
  %3853 = vmatprep.mubr.f32.mxu0 0.0
  %3854 = vmatmul.mubr.f32.gmra.mrb[0].mxu0 %v3668
  %v3855 = vpop.f32.mrb[0].mxu0
  %v3856 = vadd.f32 0.0, %v3855
  %v3857 = vpop.f32.mrb[0].mxu0
  %3858 = vmatprep.mubr.f32.mxu0 0.0
  %3859 = vmatmul.mubr.f32.gmra.mrb[0].mxu0 %v3671
  %v3860 = vpop.f32.mrb[0].mxu0
  %v3861 = vadd.f32 0.0, %v3860
  %v3862 = vpop.f32.mrb[0].mxu0
  %3863 = vmatprep.mubr.f32.mxu0 0.0
  %3864 = vmatmul.mubr.f32.gmra.mrb[0].mxu0 %v3674
  %v3865 = vpop.f32.mrb[0].mxu0
  %v3866 = vadd.f32 0.0, %v3865
  %v3867 = vpop.f32.mrb[0].mxu0
  %3868 = vmatprep.mubr.f32.mxu0 0.0
  %3869 = vmatmul.mubr.f32.gmra.mrb[0].mxu0 %v3677
  %v3870 = vpop.f32.mrb[0].mxu0
  %v3871 = vadd.f32 0.0, %v3870
  %v3872 = vpop.f32.mrb[0].mxu0
  %3873 = vmatprep.mubr.f32.mxu0 0.0
  %3874 = vmatmul.mubr.f32.gmra.mrb[0].mxu0 %v3680
  %v3875 = vpop.f32.mrb[0].mxu0
  %v3876 = vadd.f32 0.0, %v3875
  %v3877 = vpop.f32.mrb[0].mxu0
  %3878 = vmatprep.mubr.f32.mxu0 0.0
  %3879 = vmatmul.mubr.f32.gmra.mrb[0].mxu0 %v3683
  %v3880 = vpop.f32.mrb[0].mxu0
  %v3881 = vadd.f32 0.0, %v3880
  %v3882 = vpop.f32.mrb[0].mxu0
  %3883 = vmatprep.mubr.f32.mxu0 0.0
  %3884 = vmatmul.mubr.f32.gmra.mrb[0].mxu0 %v3686
  %v3885 = vpop.f32.mrb[0].mxu0
  %v3886 = vadd.f32 0.0, %v3885
  %v3887 = vpop.f32.mrb[0].mxu0
  %3888 = vmatprep.mubr.f32.mxu0 0.0
  %3889 = vmatmul.mubr.f32.gmra.mrb[0].mxu0 %v3689
  %v3890 = vpop.f32.mrb[0].mxu0
  %v3891 = vadd.f32 0.0, %v3890
  %v3892 = vpop.f32.mrb[0].mxu0
  %3893 = vmatprep.mubr.f32.mxu0 0.0
  %3894 = vmatmul.mubr.f32.gmra.mrb[0].mxu0 %v3692
  %v3895 = vpop.f32.mrb[0].mxu0
  %v3896 = vadd.f32 0.0, %v3895
  %v3897 = vpop.f32.mrb[0].mxu0
  %3898 = vmatprep.mubr.f32.mxu0 0.0
  %3899 = vmatmul.mubr.f32.gmra.mrb[0].mxu0 %v3695
  %v3900 = vpop.f32.mrb[0].mxu0
  %v3901 = vadd.f32 0.0, %v3900
  %v3902 = vpop.f32.mrb[0].mxu0
  %3903 = vmatprep.mubr.f32.mxu0 0.0
  %3904 = vmatmul.mubr.f32.gmra.mrb[0].mxu0 %v3698
  %v3905 = vpop.f32.mrb[0].mxu0
  %v3906 = vadd.f32 0.0, %v3905
  %v3907 = vpop.f32.mrb[0].mxu0
  %3908 = vmatprep.mubr.f32.mxu0 0.0
  %3909 = vmatmul.mubr.f32.gmra.mrb[0].mxu0 %v3701
  %v3910 = vpop.f32.mrb[0].mxu0
  %v3911 = vadd.f32 0.0, %v3910
  %v3912 = vpop.f32.mrb[0].mxu0
  %3913 = vmatprep.mubr.f32.mxu0 0.0
  %3914 = vmatmul.mubr.f32.gmra.mrb[0].mxu0 %v3704
  %v3915 = vpop.f32.mrb[0].mxu0
  %v3916 = vadd.f32 0.0, %v3915
  %v3917 = vpop.f32.mrb[0].mxu0
  %3918 = vmatprep.mubr.f32.mxu0 0.0
  %3919 = vmatmul.mubr.f32.gmra.mrb[0].mxu0 %v3707
  %v3920 = vpop.f32.mrb[0].mxu0
  %v3921 = vadd.f32 0.0, %v3920
  %v3922 = vpop.f32.mrb[0].mxu0
  %3923 = vmatprep.mubr.f32.mxu0 0.0
  %3924 = vmatmul.mubr.f32.gmra.mrb[0].mxu0 %v3710
  %v3925 = vpop.f32.mrb[0].mxu0
  %v3926 = vadd.f32 0.0, %v3925
  %v3927 = vpop.f32.mrb[0].mxu0
  %3928 = vmatprep.mubr.f32.mxu0 0.0
  %3929 = vmatmul.mubr.f32.gmra.mrb[0].mxu0 %v3713
  %v3930 = vpop.f32.mrb[0].mxu0
  %v3931 = vadd.f32 0.0, %v3930
  %v3932 = vpop.f32.mrb[0].mxu0
  %3933 = vmatprep.mubr.f32.mxu0 0.0
  %3934 = vmatmul.mubr.f32.gmra.mrb[0].mxu0 %v3716
  %v3935 = vpop.f32.mrb[0].mxu0
  %v3936 = vadd.f32 0.0, %v3935
  %v3937 = vpop.f32.mrb[0].mxu0
  %3938 = vmatprep.mubr.f32.mxu0 0.0
  %3939 = vmatmul.mubr.f32.gmra.mrb[0].mxu0 %v3719
  %v3940 = vpop.f32.mrb[0].mxu0
  %v3941 = vadd.f32 0.0, %v3940
  %v3942 = vpop.f32.mrb[0].mxu0
  %3943 = vmatprep.mubr.f32.mxu0 0.0
  %3944 = vmatmul.mubr.f32.gmra.mrb[0].mxu0 %v3722
  %v3945 = vpop.f32.mrb[0].mxu0
  %v3946 = vadd.f32 0.0, %v3945
  %v3947 = vpop.f32.mrb[0].mxu0
  %3948 = vdwg.mxu0
  %vm3949 = vcmask 261120
  %v3951 = vsel %vm3949, %v3590, 0
  %v3954 = vsel %vm3949, %v3591, 0
  %v3957 = vsel %vm3949, %v3592, 0
  %v3960 = vsel %vm3949, %v3593, 0
  %v3963 = vsel %vm3949, %v3594, 0
  %v3966 = vsel %vm3949, %v3595, 0
  %v3969 = vsel %vm3949, %v3596, 0
  %v3972 = vsel %vm3949, %v3597, 0
  %v3975 = vsel %vm3949, %v3598, 0
  %v3978 = vsel %vm3949, %v3599, 0
  %v3981 = vsel %vm3949, %v3600, 0
  %v3984 = vsel %vm3949, %v3601, 0
  %v3987 = vsel %vm3949, %v3602, 0
  %v3990 = vsel %vm3949, %v3603, 0
  %v3993 = vsel %vm3949, %v3604, 0
  %v3996 = vsel %vm3949, %v3605, 0
  %v3999 = vsel %vm3949, %v3606, 0
  %v4002 = vsel %vm3949, %v3607, 0
  %v4005 = vsel %vm3949, %v3608, 0
  %v4008 = vsel %vm3949, %v3609, 0
  %v4011 = vsel %vm3949, %v3610, 0
  %v4014 = vsel %vm3949, %v3611, 0
  %v4017 = vsel %vm3949, %v3612, 0
  %v4020 = vsel %vm3949, %v3613, 0
  %v4023 = vsel %vm3949, %v3614, 0
  %v4026 = vsel %vm3949, %v3615, 0
  %v4029 = vsel %vm3949, %v3616, 0
  %v4032 = vsel %vm3949, %v3617, 0
  %v4035 = vsel %vm3949, %v3618, 0
  %v4038 = vsel %vm3949, %v3619, 0
  %v4041 = vsel %vm3949, %v3620, 0
  %v4044 = vsel %vm3949, %v3621, 0
  %4046 = vmatprep.subr.mxu0 0.0
  %4047 = vmatpush1.msra.mxu0 %v3622
  %4048 = vmatprep.subr.mxu0 0.0
  %4049 = vmatpush1.msra.mxu0 %v3623
  %4050 = vmatprep.subr.mxu0 0.0
  %4051 = vmatpush1.msra.mxu0 %v3624
  %4052 = vmatprep.subr.mxu0 0.0
  %4053 = vmatpush1.msra.mxu0 %v3625
  %4054 = vmatprep.subr.mxu0 0.0
  %4055 = vmatpush1.msra.mxu0 0.0
  %4056 = vmatprep.subr.mxu0 0.0
  %4057 = vmatpush1.msra.mxu0 0.0
  %4058 = vmatprep.subr.mxu0 0.0
  %4059 = vmatpush1.msra.mxu0 0.0
  %4060 = vmatprep.subr.mxu0 0.0
  %4061 = vmatpush1.msra.mxu0 0.0
  %4062 = vmatprep.subr.mxu0 0.0
  %4063 = vmatpush1.msra.mxu0 0.0
  %4064 = vmatprep.subr.mxu0 0.0
  %4065 = vmatpush1.msra.mxu0 0.0
  %4066 = vmatprep.subr.mxu0 0.0
  %4067 = vmatpush1.msra.mxu0 0.0
  %4068 = vmatprep.subr.mxu0 0.0
  %4069 = vmatpush1.msra.mxu0 0.0
  %4070 = vmatprep.subr.mxu0 0.0
  %4071 = vmatpush1.msra.mxu0 0.0
  %4072 = vmatprep.subr.mxu0 0.0
  %4073 = vmatpush1.msra.mxu0 0.0
  %4074 = vmatprep.subr.mxu0 0.0
  %4075 = vmatpush1.msra.mxu0 0.0
  %4076 = vmatprep.subr.mxu0 0.0
  %4077 = vmatpush1.msra.mxu0 0.0
  %4078 = vmatprep.subr.mxu0 0.0
  %4079 = vmatpush1.msra.mxu0 0.0
  %4080 = vmatprep.subr.mxu0 0.0
  %4081 = vmatpush1.msra.mxu0 0.0
  %4082 = vmatprep.subr.mxu0 0.0
  %4083 = vmatpush1.msra.mxu0 0.0
  %4084 = vmatprep.subr.mxu0 0.0
  %4085 = vmatpush1.msra.mxu0 0.0
  %4086 = vmatprep.subr.mxu0 0.0
  %4087 = vmatpush1.msra.mxu0 0.0
  %4088 = vmatprep.subr.mxu0 0.0
  %4089 = vmatpush1.msra.mxu0 0.0
  %4090 = vmatprep.subr.mxu0 0.0
  %4091 = vmatpush1.msra.mxu0 0.0
  %4092 = vmatprep.subr.mxu0 0.0
  %4093 = vmatpush1.msra.mxu0 0.0
  %4094 = vmatprep.subr.mxu0 0.0
  %4095 = vmatpush1.msra.mxu0 0.0
  %4096 = vmatprep.subr.mxu0 0.0
  %4097 = vmatpush1.msra.mxu0 0.0
  %4098 = vmatprep.subr.mxu0 0.0
  %4099 = vmatpush1.msra.mxu0 0.0
  %4100 = vmatprep.subr.mxu0 0.0
  %4101 = vmatpush1.msra.mxu0 0.0
  %4102 = vmatprep.subr.mxu0 0.0
  %4103 = vmatpush1.msra.mxu0 0.0
  %4104 = vmatprep.subr.mxu0 0.0
  %4105 = vmatpush1.msra.mxu0 0.0
  %4106 = vmatprep.subr.mxu0 0.0
  %4107 = vmatpush1.msra.mxu0 0.0
  %4108 = vmatprep.subr.mxu0 0.0
  %4109 = vmatpush1.msra.mxu0 0.0
  %4110 = vmatprep.mubr.f32.mxu0 0.0
  %4111 = vmatmul.mubr.f32.gmra.mrb[0].mxu0 %v3951
  %v4112 = vpop.f32.mrb[0].mxu0
  %v4113 = vadd.f32 %v3791, %v4112
  %v4114 = vpop.f32.mrb[0].mxu0
  %4115 = vmatprep.mubr.f32.mxu0 0.0
  %4116 = vmatmul.mubr.f32.gmra.mrb[0].mxu0 %v3954
  %v4117 = vpop.f32.mrb[0].mxu0
  %v4118 = vadd.f32 %v3796, %v4117
  %v4119 = vpop.f32.mrb[0].mxu0
  %4120 = vmatprep.mubr.f32.mxu0 0.0
  %4121 = vmatmul.mubr.f32.gmra.mrb[0].mxu0 %v3957
  %v4122 = vpop.f32.mrb[0].mxu0
  %v4123 = vadd.f32 %v3801, %v4122
  %v4124 = vpop.f32.mrb[0].mxu0
  %4125 = vmatprep.mubr.f32.mxu0 0.0
  %4126 = vmatmul.mubr.f32.gmra.mrb[0].mxu0 %v3960
  %v4127 = vpop.f32.mrb[0].mxu0
  %v4128 = vadd.f32 %v3806, %v4127
  %v4129 = vpop.f32.mrb[0].mxu0
  %4130 = vmatprep.mubr.f32.mxu0 0.0
  %4131 = vmatmul.mubr.f32.gmra.mrb[0].mxu0 %v3963
  %v4132 = vpop.f32.mrb[0].mxu0
  %v4133 = vadd.f32 %v3811, %v4132
  %v4134 = vpop.f32.mrb[0].mxu0
  %4135 = vmatprep.mubr.f32.mxu0 0.0
  %4136 = vmatmul.mubr.f32.gmra.mrb[0].mxu0 %v3966
  %v4137 = vpop.f32.mrb[0].mxu0
  %v4138 = vadd.f32 %v3816, %v4137
  %v4139 = vpop.f32.mrb[0].mxu0
  %4140 = vmatprep.mubr.f32.mxu0 0.0
  %4141 = vmatmul.mubr.f32.gmra.mrb[0].mxu0 %v3969
  %v4142 = vpop.f32.mrb[0].mxu0
  %v4143 = vadd.f32 %v3821, %v4142
  %v4144 = vpop.f32.mrb[0].mxu0
  %4145 = vmatprep.mubr.f32.mxu0 0.0
  %4146 = vmatmul.mubr.f32.gmra.mrb[0].mxu0 %v3972
  %v4147 = vpop.f32.mrb[0].mxu0
  %v4148 = vadd.f32 %v3826, %v4147
  %v4149 = vpop.f32.mrb[0].mxu0
  %4150 = vmatprep.mubr.f32.mxu0 0.0
  %4151 = vmatmul.mubr.f32.gmra.mrb[0].mxu0 %v3975
  %v4152 = vpop.f32.mrb[0].mxu0
  %v4153 = vadd.f32 %v3831, %v4152
  %v4154 = vpop.f32.mrb[0].mxu0
  %4155 = vmatprep.mubr.f32.mxu0 0.0
  %4156 = vmatmul.mubr.f32.gmra.mrb[0].mxu0 %v3978
  %v4157 = vpop.f32.mrb[0].mxu0
  %v4158 = vadd.f32 %v3836, %v4157
  %v4159 = vpop.f32.mrb[0].mxu0
  %4160 = vmatprep.mubr.f32.mxu0 0.0
  %4161 = vmatmul.mubr.f32.gmra.mrb[0].mxu0 %v3981
  %v4162 = vpop.f32.mrb[0].mxu0
  %v4163 = vadd.f32 %v3841, %v4162
  %v4164 = vpop.f32.mrb[0].mxu0
  %4165 = vmatprep.mubr.f32.mxu0 0.0
  %4166 = vmatmul.mubr.f32.gmra.mrb[0].mxu0 %v3984
  %v4167 = vpop.f32.mrb[0].mxu0
  %v4168 = vadd.f32 %v3846, %v4167
  %v4169 = vpop.f32.mrb[0].mxu0
  %4170 = vmatprep.mubr.f32.mxu0 0.0
  %4171 = vmatmul.mubr.f32.gmra.mrb[0].mxu0 %v3987
  %v4172 = vpop.f32.mrb[0].mxu0
  %v4173 = vadd.f32 %v3851, %v4172
  %v4174 = vpop.f32.mrb[0].mxu0
  %4175 = vmatprep.mubr.f32.mxu0 0.0
  %4176 = vmatmul.mubr.f32.gmra.mrb[0].mxu0 %v3990
  %v4177 = vpop.f32.mrb[0].mxu0
  %v4178 = vadd.f32 %v3856, %v4177
  %v4179 = vpop.f32.mrb[0].mxu0
  %4180 = vmatprep.mubr.f32.mxu0 0.0
  %4181 = vmatmul.mubr.f32.gmra.mrb[0].mxu0 %v3993
  %v4182 = vpop.f32.mrb[0].mxu0
  %v4183 = vadd.f32 %v3861, %v4182
  %v4184 = vpop.f32.mrb[0].mxu0
  %4185 = vmatprep.mubr.f32.mxu0 0.0
  %4186 = vmatmul.mubr.f32.gmra.mrb[0].mxu0 %v3996
  %v4187 = vpop.f32.mrb[0].mxu0
  %v4188 = vadd.f32 %v3866, %v4187
  %v4189 = vpop.f32.mrb[0].mxu0
  %4190 = vmatprep.mubr.f32.mxu0 0.0
  %4191 = vmatmul.mubr.f32.gmra.mrb[0].mxu0 %v3999
  %v4192 = vpop.f32.mrb[0].mxu0
  %v4193 = vadd.f32 %v3871, %v4192
  %v4194 = vpop.f32.mrb[0].mxu0
  %4195 = vmatprep.mubr.f32.mxu0 0.0
  %4196 = vmatmul.mubr.f32.gmra.mrb[0].mxu0 %v4002
  %v4197 = vpop.f32.mrb[0].mxu0
  %v4198 = vadd.f32 %v3876, %v4197
  %v4199 = vpop.f32.mrb[0].mxu0
  %4200 = vmatprep.mubr.f32.mxu0 0.0
  %4201 = vmatmul.mubr.f32.gmra.mrb[0].mxu0 %v4005
  %v4202 = vpop.f32.mrb[0].mxu0
  %v4203 = vadd.f32 %v3881, %v4202
  %v4204 = vpop.f32.mrb[0].mxu0
  %4205 = vmatprep.mubr.f32.mxu0 0.0
  %4206 = vmatmul.mubr.f32.gmra.mrb[0].mxu0 %v4008
  %v4207 = vpop.f32.mrb[0].mxu0
  %v4208 = vadd.f32 %v3886, %v4207
  %v4209 = vpop.f32.mrb[0].mxu0
  %4210 = vmatprep.mubr.f32.mxu0 0.0
  %4211 = vmatmul.mubr.f32.gmra.mrb[0].mxu0 %v4011
  %v4212 = vpop.f32.mrb[0].mxu0
  %v4213 = vadd.f32 %v3891, %v4212
  %v4214 = vpop.f32.mrb[0].mxu0
  %4215 = vmatprep.mubr.f32.mxu0 0.0
  %4216 = vmatmul.mubr.f32.gmra.mrb[0].mxu0 %v4014
  %v4217 = vpop.f32.mrb[0].mxu0
  %v4218 = vadd.f32 %v3896, %v4217
  %v4219 = vpop.f32.mrb[0].mxu0
  %4220 = vmatprep.mubr.f32.mxu0 0.0
  %4221 = vmatmul.mubr.f32.gmra.mrb[0].mxu0 %v4017
  %v4222 = vpop.f32.mrb[0].mxu0
  %v4223 = vadd.f32 %v3901, %v4222
  %v4224 = vpop.f32.mrb[0].mxu0
  %4225 = vmatprep.mubr.f32.mxu0 0.0
  %4226 = vmatmul.mubr.f32.gmra.mrb[0].mxu0 %v4020
  %v4227 = vpop.f32.mrb[0].mxu0
  %v4228 = vadd.f32 %v3906, %v4227
  %v4229 = vpop.f32.mrb[0].mxu0
  %4230 = vmatprep.mubr.f32.mxu0 0.0
  %4231 = vmatmul.mubr.f32.gmra.mrb[0].mxu0 %v4023
  %v4232 = vpop.f32.mrb[0].mxu0
  %v4233 = vadd.f32 %v3911, %v4232
  %v4234 = vpop.f32.mrb[0].mxu0
  %4235 = vmatprep.mubr.f32.mxu0 0.0
  %4236 = vmatmul.mubr.f32.gmra.mrb[0].mxu0 %v4026
  %v4237 = vpop.f32.mrb[0].mxu0
  %v4238 = vadd.f32 %v3916, %v4237
  %v4239 = vpop.f32.mrb[0].mxu0
  %4240 = vmatprep.mubr.f32.mxu0 0.0
  %4241 = vmatmul.mubr.f32.gmra.mrb[0].mxu0 %v4029
  %v4242 = vpop.f32.mrb[0].mxu0
  %v4243 = vadd.f32 %v3921, %v4242
  %v4244 = vpop.f32.mrb[0].mxu0
  %4245 = vmatprep.mubr.f32.mxu0 0.0
  %4246 = vmatmul.mubr.f32.gmra.mrb[0].mxu0 %v4032
  %v4247 = vpop.f32.mrb[0].mxu0
  %v4248 = vadd.f32 %v3926, %v4247
  %v4249 = vpop.f32.mrb[0].mxu0
  %4250 = vmatprep.mubr.f32.mxu0 0.0
  %4251 = vmatmul.mubr.f32.gmra.mrb[0].mxu0 %v4035
  %v4252 = vpop.f32.mrb[0].mxu0
  %v4253 = vadd.f32 %v3931, %v4252
  %v4254 = vpop.f32.mrb[0].mxu0
  %4255 = vmatprep.mubr.f32.mxu0 0.0
  %4256 = vmatmul.mubr.f32.gmra.mrb[0].mxu0 %v4038
  %v4257 = vpop.f32.mrb[0].mxu0
  %v4258 = vadd.f32 %v3936, %v4257
  %v4259 = vpop.f32.mrb[0].mxu0
  %4260 = vmatprep.mubr.f32.mxu0 0.0
  %4261 = vmatmul.mubr.f32.gmra.mrb[0].mxu0 %v4041
  %v4262 = vpop.f32.mrb[0].mxu0
  %v4263 = vadd.f32 %v3941, %v4262
  %v4264 = vpop.f32.mrb[0].mxu0
  %4265 = vmatprep.mubr.f32.mxu0 0.0
  %4266 = vmatmul.mubr.f32.gmra.mrb[0].mxu0 %v4044
  %v4267 = vpop.f32.mrb[0].mxu0
  %v4268 = vadd.f32 %v3946, %v4267
  %v4269 = vpop.f32.mrb[0].mxu0
  %4270 = vdwg.mxu0
  %v4271 = vld [vmem:[%s5] sm:$0x1]
  %v4273 = vlaneseq
  %v4274 = vshrl.u32 %v4273, 7
  %v4275 = vsub.s32 0, %v4274
  %v4276 = vrot.slane %v4271, %v4275
  %v4278 = vadd.f32 %v4113, %v4276
  %v4279 = vadd.f32 %v4118, %v4276
  %v4280 = vadd.f32 %v4123, %v4276
  %v4281 = vadd.f32 %v4128, %v4276
  %v4282 = vadd.f32 %v4133, %v4276
  %v4283 = vadd.f32 %v4138, %v4276
  %v4284 = vadd.f32 %v4143, %v4276
  %v4285 = vadd.f32 %v4148, %v4276
  %v4286 = vadd.f32 %v4153, %v4276
  %v4287 = vadd.f32 %v4158, %v4276
  %v4288 = vadd.f32 %v4163, %v4276
  %v4289 = vadd.f32 %v4168, %v4276
  %v4290 = vadd.f32 %v4173, %v4276
  %v4291 = vadd.f32 %v4178, %v4276
  %v4292 = vadd.f32 %v4183, %v4276
  %v4293 = vadd.f32 %v4188, %v4276
  %v4294 = vadd.f32 %v4193, %v4276
  %v4295 = vadd.f32 %v4198, %v4276
  %v4296 = vadd.f32 %v4203, %v4276
  %v4297 = vadd.f32 %v4208, %v4276
  %v4298 = vadd.f32 %v4213, %v4276
  %v4299 = vadd.f32 %v4218, %v4276
  %v4300 = vadd.f32 %v4223, %v4276
  %v4301 = vadd.f32 %v4228, %v4276
  %v4302 = vadd.f32 %v4233, %v4276
  %v4303 = vadd.f32 %v4238, %v4276
  %v4304 = vadd.f32 %v4243, %v4276
  %v4305 = vadd.f32 %v4248, %v4276
  %v4306 = vadd.f32 %v4253, %v4276
  %v4307 = vadd.f32 %v4258, %v4276
  %v4308 = vadd.f32 %v4263, %v4276
  %v4309 = vadd.f32 %v4268, %v4276
  %v4310 = vtanh.pop %v4278
  %v4311 = vtanh.pop %v4279
  %v4312 = vtanh.pop %v4280
  %v4313 = vtanh.pop %v4281
  %v4314 = vtanh.pop %v4282
  %v4315 = vtanh.pop %v4283
  %v4316 = vtanh.pop %v4284
  %v4317 = vtanh.pop %v4285
  %v4318 = vtanh.pop %v4286
  %v4319 = vtanh.pop %v4287
  %v4320 = vtanh.pop %v4288
  %v4321 = vtanh.pop %v4289
  %v4322 = vtanh.pop %v4290
  %v4323 = vtanh.pop %v4291
  %v4324 = vtanh.pop %v4292
  %v4325 = vtanh.pop %v4293
  %v4326 = vtanh.pop %v4294
  %v4327 = vtanh.pop %v4295
  %v4328 = vtanh.pop %v4296
  %v4329 = vtanh.pop %v4297
  %v4330 = vtanh.pop %v4298
  %v4331 = vtanh.pop %v4299
  %v4332 = vtanh.pop %v4300
  %v4333 = vtanh.pop %v4301
  %v4334 = vtanh.pop %v4302
  %v4335 = vtanh.pop %v4303
  %v4336 = vtanh.pop %v4304
  %v4337 = vtanh.pop %v4305
  %v4338 = vtanh.pop %v4306
  %v4339 = vtanh.pop %v4307
  %v4340 = vtanh.pop %v4308
  %v4341 = vtanh.pop %v4309
  %v4342 = vld [vmem:[%s6] sm:$0xff]
  %v4343 = vld [vmem:[%s6 + $0x8] sm:$0xff]
  %v4344 = vld [vmem:[%s7] sm:$0x1]
  %v4346 = vlaneseq
  %v4347 = vshrl.u32 %v4346, 7
  %v4348 = vsub.s32 0, %v4347
  %v4349 = vrot.slane %v4344, %v4348
  %vm4351 = vcmask 130048
  %v4353 = vsel %vm4351, %v4310, 0
  %v4356 = vsel %vm4351, %v4311, 0
  %v4359 = vsel %vm4351, %v4312, 0
  %v4362 = vsel %vm4351, %v4313, 0
  %v4365 = vsel %vm4351, %v4314, 0
  %v4368 = vsel %vm4351, %v4315, 0
  %v4371 = vsel %vm4351, %v4316, 0
  %v4374 = vsel %vm4351, %v4317, 0
  %v4377 = vsel %vm4351, %v4318, 0
  %v4380 = vsel %vm4351, %v4319, 0
  %v4383 = vsel %vm4351, %v4320, 0
  %v4386 = vsel %vm4351, %v4321, 0
  %v4389 = vsel %vm4351, %v4322, 0
  %v4392 = vsel %vm4351, %v4323, 0
  %v4395 = vsel %vm4351, %v4324, 0
  %v4398 = vsel %vm4351, %v4325, 0
  %v4401 = vsel %vm4351, %v4326, 0
  %v4404 = vsel %vm4351, %v4327, 0
  %v4407 = vsel %vm4351, %v4328, 0
  %v4410 = vsel %vm4351, %v4329, 0
  %v4413 = vsel %vm4351, %v4330, 0
  %v4416 = vsel %vm4351, %v4331, 0
  %v4419 = vsel %vm4351, %v4332, 0
  %v4422 = vsel %vm4351, %v4333, 0
  %v4425 = vsel %vm4351, %v4334, 0
  %v4428 = vsel %vm4351, %v4335, 0
  %v4431 = vsel %vm4351, %v4336, 0
  %v4434 = vsel %vm4351, %v4337, 0
  %v4437 = vsel %vm4351, %v4338, 0
  %v4440 = vsel %vm4351, %v4339, 0
  %v4443 = vsel %vm4351, %v4340, 0
  %v4446 = vsel %vm4351, %v4341, 0
  %4448 = vmatprep.subr.mxu0 0.0
  %4449 = vmatpush1.msra.mxu0 %v4342
  %4450 = vmatprep.subr.mxu0 0.0
  %4451 = vmatpush1.msra.mxu0 %v4343
  %4452 = vmatprep.subr.mxu0 0.0
  %4453 = vmatpush1.msra.mxu0 0.0
  %4454 = vmatprep.subr.mxu0 0.0
  %4455 = vmatpush1.msra.mxu0 0.0
  %4456 = vmatprep.subr.mxu0 0.0
  %4457 = vmatpush1.msra.mxu0 0.0
  %4458 = vmatprep.subr.mxu0 0.0
  %4459 = vmatpush1.msra.mxu0 0.0
  %4460 = vmatprep.subr.mxu0 0.0
  %4461 = vmatpush1.msra.mxu0 0.0
  %4462 = vmatprep.subr.mxu0 0.0
  %4463 = vmatpush1.msra.mxu0 0.0
  %4464 = vmatprep.subr.mxu0 0.0
  %4465 = vmatpush1.msra.mxu0 0.0
  %4466 = vmatprep.subr.mxu0 0.0
  %4467 = vmatpush1.msra.mxu0 0.0
  %4468 = vmatprep.subr.mxu0 0.0
  %4469 = vmatpush1.msra.mxu0 0.0
  %4470 = vmatprep.subr.mxu0 0.0
  %4471 = vmatpush1.msra.mxu0 0.0
  %4472 = vmatprep.subr.mxu0 0.0
  %4473 = vmatpush1.msra.mxu0 0.0
  %4474 = vmatprep.subr.mxu0 0.0
  %4475 = vmatpush1.msra.mxu0 0.0
  %4476 = vmatprep.subr.mxu0 0.0
  %4477 = vmatpush1.msra.mxu0 0.0
  %4478 = vmatprep.subr.mxu0 0.0
  %4479 = vmatpush1.msra.mxu0 0.0
  %4480 = vmatprep.subr.mxu0 0.0
  %4481 = vmatpush1.msra.mxu0 0.0
  %4482 = vmatprep.subr.mxu0 0.0
  %4483 = vmatpush1.msra.mxu0 0.0
  %4484 = vmatprep.subr.mxu0 0.0
  %4485 = vmatpush1.msra.mxu0 0.0
  %4486 = vmatprep.subr.mxu0 0.0
  %4487 = vmatpush1.msra.mxu0 0.0
  %4488 = vmatprep.subr.mxu0 0.0
  %4489 = vmatpush1.msra.mxu0 0.0
  %4490 = vmatprep.subr.mxu0 0.0
  %4491 = vmatpush1.msra.mxu0 0.0
  %4492 = vmatprep.subr.mxu0 0.0
  %4493 = vmatpush1.msra.mxu0 0.0
  %4494 = vmatprep.subr.mxu0 0.0
  %4495 = vmatpush1.msra.mxu0 0.0
  %4496 = vmatprep.subr.mxu0 0.0
  %4497 = vmatpush1.msra.mxu0 0.0
  %4498 = vmatprep.subr.mxu0 0.0
  %4499 = vmatpush1.msra.mxu0 0.0
  %4500 = vmatprep.subr.mxu0 0.0
  %4501 = vmatpush1.msra.mxu0 0.0
  %4502 = vmatprep.subr.mxu0 0.0
  %4503 = vmatpush1.msra.mxu0 0.0
  %4504 = vmatprep.subr.mxu0 0.0
  %4505 = vmatpush1.msra.mxu0 0.0
  %4506 = vmatprep.subr.mxu0 0.0
  %4507 = vmatpush1.msra.mxu0 0.0
  %4508 = vmatprep.subr.mxu0 0.0
  %4509 = vmatpush1.msra.mxu0 0.0
  %4510 = vmatprep.subr.mxu0 0.0
  %4511 = vmatpush1.msra.mxu0 0.0
  %4512 = vmatprep.mubr.f32.mxu0 0.0
  %4513 = vmatmul.mubr.f32.gmra.mrb[0].mxu0 %v4353
  %v4514 = vpop.f32.mrb[0].mxu0
  %v4515 = vadd.f32 %v4349, %v4514
  %v4516 = vpop.f32.mrb[0].mxu0
  %4517 = vmatprep.mubr.f32.mxu0 0.0
  %4518 = vmatmul.mubr.f32.gmra.mrb[0].mxu0 %v4356
  %v4519 = vpop.f32.mrb[0].mxu0
  %v4520 = vadd.f32 %v4349, %v4519
  %v4521 = vpop.f32.mrb[0].mxu0
  %4522 = vmatprep.mubr.f32.mxu0 0.0
  %4523 = vmatmul.mubr.f32.gmra.mrb[0].mxu0 %v4359
  %v4524 = vpop.f32.mrb[0].mxu0
  %v4525 = vadd.f32 %v4349, %v4524
  %v4526 = vpop.f32.mrb[0].mxu0
  %4527 = vmatprep.mubr.f32.mxu0 0.0
  %4528 = vmatmul.mubr.f32.gmra.mrb[0].mxu0 %v4362
  %v4529 = vpop.f32.mrb[0].mxu0
  %v4530 = vadd.f32 %v4349, %v4529
  %v4531 = vpop.f32.mrb[0].mxu0
  %4532 = vmatprep.mubr.f32.mxu0 0.0
  %4533 = vmatmul.mubr.f32.gmra.mrb[0].mxu0 %v4365
  %v4534 = vpop.f32.mrb[0].mxu0
  %v4535 = vadd.f32 %v4349, %v4534
  %v4536 = vpop.f32.mrb[0].mxu0
  %4537 = vmatprep.mubr.f32.mxu0 0.0
  %4538 = vmatmul.mubr.f32.gmra.mrb[0].mxu0 %v4368
  %v4539 = vpop.f32.mrb[0].mxu0
  %v4540 = vadd.f32 %v4349, %v4539
  %v4541 = vpop.f32.mrb[0].mxu0
  %4542 = vmatprep.mubr.f32.mxu0 0.0
  %4543 = vmatmul.mubr.f32.gmra.mrb[0].mxu0 %v4371
  %v4544 = vpop.f32.mrb[0].mxu0
  %v4545 = vadd.f32 %v4349, %v4544
  %v4546 = vpop.f32.mrb[0].mxu0
  %4547 = vmatprep.mubr.f32.mxu0 0.0
  %4548 = vmatmul.mubr.f32.gmra.mrb[0].mxu0 %v4374
  %v4549 = vpop.f32.mrb[0].mxu0
  %v4550 = vadd.f32 %v4349, %v4549
  %v4551 = vpop.f32.mrb[0].mxu0
  %4552 = vmatprep.mubr.f32.mxu0 0.0
  %4553 = vmatmul.mubr.f32.gmra.mrb[0].mxu0 %v4377
  %v4554 = vpop.f32.mrb[0].mxu0
  %v4555 = vadd.f32 %v4349, %v4554
  %v4556 = vpop.f32.mrb[0].mxu0
  %4557 = vmatprep.mubr.f32.mxu0 0.0
  %4558 = vmatmul.mubr.f32.gmra.mrb[0].mxu0 %v4380
  %v4559 = vpop.f32.mrb[0].mxu0
  %v4560 = vadd.f32 %v4349, %v4559
  %v4561 = vpop.f32.mrb[0].mxu0
  %4562 = vmatprep.mubr.f32.mxu0 0.0
  %4563 = vmatmul.mubr.f32.gmra.mrb[0].mxu0 %v4383
  %v4564 = vpop.f32.mrb[0].mxu0
  %v4565 = vadd.f32 %v4349, %v4564
  %v4566 = vpop.f32.mrb[0].mxu0
  %4567 = vmatprep.mubr.f32.mxu0 0.0
  %4568 = vmatmul.mubr.f32.gmra.mrb[0].mxu0 %v4386
  %v4569 = vpop.f32.mrb[0].mxu0
  %v4570 = vadd.f32 %v4349, %v4569
  %v4571 = vpop.f32.mrb[0].mxu0
  %4572 = vmatprep.mubr.f32.mxu0 0.0
  %4573 = vmatmul.mubr.f32.gmra.mrb[0].mxu0 %v4389
  %v4574 = vpop.f32.mrb[0].mxu0
  %v4575 = vadd.f32 %v4349, %v4574
  %v4576 = vpop.f32.mrb[0].mxu0
  %4577 = vmatprep.mubr.f32.mxu0 0.0
  %4578 = vmatmul.mubr.f32.gmra.mrb[0].mxu0 %v4392
  %v4579 = vpop.f32.mrb[0].mxu0
  %v4580 = vadd.f32 %v4349, %v4579
  %v4581 = vpop.f32.mrb[0].mxu0
  %4582 = vmatprep.mubr.f32.mxu0 0.0
  %4583 = vmatmul.mubr.f32.gmra.mrb[0].mxu0 %v4395
  %v4584 = vpop.f32.mrb[0].mxu0
  %v4585 = vadd.f32 %v4349, %v4584
  %v4586 = vpop.f32.mrb[0].mxu0
  %4587 = vmatprep.mubr.f32.mxu0 0.0
  %4588 = vmatmul.mubr.f32.gmra.mrb[0].mxu0 %v4398
  %v4589 = vpop.f32.mrb[0].mxu0
  %v4590 = vadd.f32 %v4349, %v4589
  %v4591 = vpop.f32.mrb[0].mxu0
  %4592 = vmatprep.mubr.f32.mxu0 0.0
  %4593 = vmatmul.mubr.f32.gmra.mrb[0].mxu0 %v4401
  %v4594 = vpop.f32.mrb[0].mxu0
  %v4595 = vadd.f32 %v4349, %v4594
  %v4596 = vpop.f32.mrb[0].mxu0
  %4597 = vmatprep.mubr.f32.mxu0 0.0
  %4598 = vmatmul.mubr.f32.gmra.mrb[0].mxu0 %v4404
  %v4599 = vpop.f32.mrb[0].mxu0
  %v4600 = vadd.f32 %v4349, %v4599
  %v4601 = vpop.f32.mrb[0].mxu0
  %4602 = vmatprep.mubr.f32.mxu0 0.0
  %4603 = vmatmul.mubr.f32.gmra.mrb[0].mxu0 %v4407
  %v4604 = vpop.f32.mrb[0].mxu0
  %v4605 = vadd.f32 %v4349, %v4604
  %v4606 = vpop.f32.mrb[0].mxu0
  %4607 = vmatprep.mubr.f32.mxu0 0.0
  %4608 = vmatmul.mubr.f32.gmra.mrb[0].mxu0 %v4410
  %v4609 = vpop.f32.mrb[0].mxu0
  %v4610 = vadd.f32 %v4349, %v4609
  %v4611 = vpop.f32.mrb[0].mxu0
  %4612 = vmatprep.mubr.f32.mxu0 0.0
  %4613 = vmatmul.mubr.f32.gmra.mrb[0].mxu0 %v4413
  %v4614 = vpop.f32.mrb[0].mxu0
  %v4615 = vadd.f32 %v4349, %v4614
  %v4616 = vpop.f32.mrb[0].mxu0
  %4617 = vmatprep.mubr.f32.mxu0 0.0
  %4618 = vmatmul.mubr.f32.gmra.mrb[0].mxu0 %v4416
  %v4619 = vpop.f32.mrb[0].mxu0
  %v4620 = vadd.f32 %v4349, %v4619
  %v4621 = vpop.f32.mrb[0].mxu0
  %4622 = vmatprep.mubr.f32.mxu0 0.0
  %4623 = vmatmul.mubr.f32.gmra.mrb[0].mxu0 %v4419
  %v4624 = vpop.f32.mrb[0].mxu0
  %v4625 = vadd.f32 %v4349, %v4624
  %v4626 = vpop.f32.mrb[0].mxu0
  %4627 = vmatprep.mubr.f32.mxu0 0.0
  %4628 = vmatmul.mubr.f32.gmra.mrb[0].mxu0 %v4422
  %v4629 = vpop.f32.mrb[0].mxu0
  %v4630 = vadd.f32 %v4349, %v4629
  %v4631 = vpop.f32.mrb[0].mxu0
  %4632 = vmatprep.mubr.f32.mxu0 0.0
  %4633 = vmatmul.mubr.f32.gmra.mrb[0].mxu0 %v4425
  %v4634 = vpop.f32.mrb[0].mxu0
  %v4635 = vadd.f32 %v4349, %v4634
  %v4636 = vpop.f32.mrb[0].mxu0
  %4637 = vmatprep.mubr.f32.mxu0 0.0
  %4638 = vmatmul.mubr.f32.gmra.mrb[0].mxu0 %v4428
  %v4639 = vpop.f32.mrb[0].mxu0
  %v4640 = vadd.f32 %v4349, %v4639
  %v4641 = vpop.f32.mrb[0].mxu0
  %4642 = vmatprep.mubr.f32.mxu0 0.0
  %4643 = vmatmul.mubr.f32.gmra.mrb[0].mxu0 %v4431
  %v4644 = vpop.f32.mrb[0].mxu0
  %v4645 = vadd.f32 %v4349, %v4644
  %v4646 = vpop.f32.mrb[0].mxu0
  %4647 = vmatprep.mubr.f32.mxu0 0.0
  %4648 = vmatmul.mubr.f32.gmra.mrb[0].mxu0 %v4434
  %v4649 = vpop.f32.mrb[0].mxu0
  %v4650 = vadd.f32 %v4349, %v4649
  %v4651 = vpop.f32.mrb[0].mxu0
  %4652 = vmatprep.mubr.f32.mxu0 0.0
  %4653 = vmatmul.mubr.f32.gmra.mrb[0].mxu0 %v4437
  %v4654 = vpop.f32.mrb[0].mxu0
  %v4655 = vadd.f32 %v4349, %v4654
  %v4656 = vpop.f32.mrb[0].mxu0
  %4657 = vmatprep.mubr.f32.mxu0 0.0
  %4658 = vmatmul.mubr.f32.gmra.mrb[0].mxu0 %v4440
  %v4659 = vpop.f32.mrb[0].mxu0
  %v4660 = vadd.f32 %v4349, %v4659
  %v4661 = vpop.f32.mrb[0].mxu0
  %4662 = vmatprep.mubr.f32.mxu0 0.0
  %4663 = vmatmul.mubr.f32.gmra.mrb[0].mxu0 %v4443
  %v4664 = vpop.f32.mrb[0].mxu0
  %v4665 = vadd.f32 %v4349, %v4664
  %v4666 = vpop.f32.mrb[0].mxu0
  %4667 = vmatprep.mubr.f32.mxu0 0.0
  %4668 = vmatmul.mubr.f32.gmra.mrb[0].mxu0 %v4446
  %v4669 = vpop.f32.mrb[0].mxu0
  %v4670 = vadd.f32 %v4349, %v4669
  %v4671 = vpop.f32.mrb[0].mxu0
  %4672 = vdwg.mxu0
  %4673 = vst.msk [vmem:[%s8] sm:$0xff] %vm3949, %v4515
  %4674 = vst.msk [vmem:[%s8 + $0x8] sm:$0xff] %vm3949, %v4520
  %4675 = vst.msk [vmem:[%s8 + $0x10] sm:$0xff] %vm3949, %v4525
  %4676 = vst.msk [vmem:[%s8 + $0x18] sm:$0xff] %vm3949, %v4530
  %4677 = vst.msk [vmem:[%s8 + $0x20] sm:$0xff] %vm3949, %v4535
  %4678 = vst.msk [vmem:[%s8 + $0x28] sm:$0xff] %vm3949, %v4540
  %4679 = vst.msk [vmem:[%s8 + $0x30] sm:$0xff] %vm3949, %v4545
  %4680 = vst.msk [vmem:[%s8 + $0x38] sm:$0xff] %vm3949, %v4550
  %4681 = vst.msk [vmem:[%s8 + $0x40] sm:$0xff] %vm3949, %v4555
  %4682 = vst.msk [vmem:[%s8 + $0x48] sm:$0xff] %vm3949, %v4560
  %4683 = vst.msk [vmem:[%s8 + $0x50] sm:$0xff] %vm3949, %v4565
  %4684 = vst.msk [vmem:[%s8 + $0x58] sm:$0xff] %vm3949, %v4570
  %4685 = vst.msk [vmem:[%s8 + $0x60] sm:$0xff] %vm3949, %v4575
  %4686 = vst.msk [vmem:[%s8 + $0x68] sm:$0xff] %vm3949, %v4580
  %4687 = vst.msk [vmem:[%s8 + $0x70] sm:$0xff] %vm3949, %v4585
  %4688 = vst.msk [vmem:[%s8 + $0x78] sm:$0xff] %vm3949, %v4590
  %4689 = vst.msk [vmem:[%s8 + $0x80] sm:$0xff] %vm3949, %v4595
  %4690 = vst.msk [vmem:[%s8 + $0x88] sm:$0xff] %vm3949, %v4600
  %4691 = vst.msk [vmem:[%s8 + $0x90] sm:$0xff] %vm3949, %v4605
  %4692 = vst.msk [vmem:[%s8 + $0x98] sm:$0xff] %vm3949, %v4610
  %4693 = vst.msk [vmem:[%s8 + $0xa0] sm:$0xff] %vm3949, %v4615
  %4694 = vst.msk [vmem:[%s8 + $0xa8] sm:$0xff] %vm3949, %v4620
  %4695 = vst.msk [vmem:[%s8 + $0xb0] sm:$0xff] %vm3949, %v4625
  %4696 = vst.msk [vmem:[%s8 + $0xb8] sm:$0xff] %vm3949, %v4630
  %4697 = vst.msk [vmem:[%s8 + $0xc0] sm:$0xff] %vm3949, %v4635
  %4698 = vst.msk [vmem:[%s8 + $0xc8] sm:$0xff] %vm3949, %v4640
  %4699 = vst.msk [vmem:[%s8 + $0xd0] sm:$0xff] %vm3949, %v4645
  %4700 = vst.msk [vmem:[%s8 + $0xd8] sm:$0xff] %vm3949, %v4650
  %4701 = vst.msk [vmem:[%s8 + $0xe0] sm:$0xff] %vm3949, %v4655
  %4702 = vst.msk [vmem:[%s8 + $0xe8] sm:$0xff] %vm3949, %v4660
  %4703 = vst.msk [vmem:[%s8 + $0xf0] sm:$0xff] %vm3949, %v4665
  %4704 = vst.msk [vmem:[%s8 + $0xf8] sm:$0xff] %vm3949, %v4670
  // Predicated region
  $region34: #{tpu_custom_call.1} parent=0 // pred_check
    _
  $region35: #{tpu_custom_call.1} parent=0 // pred_check_branch
    %4706 = sbr.rel (0) target = $region37
  $region36: #{tpu_custom_call.1} parent=0 // pred_region
    _
  $region37: #{tpu_custom_call.1} parent=0 // pred_fallthru
    _
  // Predicated region
  $region38: #{tpu_custom_call.1} parent=0 // pred_check
    _
  $region39: #{tpu_custom_call.1} parent=0 // pred_check_branch
    %4708 = sbr.rel (0) target = $region41
  $region40: #{tpu_custom_call.1} parent=0 // pred_region
    _
  $region41: #{tpu_custom_call.1} parent=0 // pred_fallthru
    _

</llo_original>
